<compile_context>
chip_gen: v5e
topology: v5e:2x2
jax: 0.10.0
libtpu: 0.0.40
codegen_flags: <defaults>
</compile_context>

<pallas_src>
import functools

import jax
import jax.numpy as jnp
from jax import lax
from jax.experimental import pallas as pl
from jax.experimental.pallas import tpu as pltpu


def _round_up(v, m):
    return (v + m - 1) // m * m


# Explicit VMEM budget: stays inside v7x's 64 MiB physical VMEM and well inside
# v5e/v6e's 128 MiB; at these shapes actual usage is a tiny fraction of this.
_VMEM_LIMIT = 64 * 1024 * 1024


def _pick_row_tile(t_pad, b_pad, target_rows=512):
    """Largest (t_tile * b_pad) row tile <= ~target_rows that divides t_pad*b_pad."""
    t_tile = 1
    for cand in range(1, t_pad + 1):
        if t_pad % cand == 0 and cand * b_pad <= max(target_rows, b_pad):
            t_tile = cand
    return t_tile * b_pad


def _pick_col_tile(h_pad, max_tn=512):
    """Largest multiple of 128 <= max_tn that divides h_pad (hence divides 3*h_pad)."""
    tn = 128
    for cand in range(128, min(h_pad, max_tn) + 1, 128):
        if h_pad % cand == 0:
            tn = cand
    return tn


# ----------------------------------------------------------------------------
# Kernel 1: hoisted input projection over ALL timesteps at once.
#   x_flat : (M, Din_pad) bf16    w : (Din_pad, 3*H_pad) bf16    b : (1, 3*H_pad) f32
#   out    : (M, 3*H_pad) bf16   (bf16 storage halves the dominant HBM stream)
# ----------------------------------------------------------------------------
def _input_proj_kernel(x_ref, w_ref, b_ref, o_ref):
    o_ref[...] = (jnp.dot(x_ref[...], w_ref[...],
                          preferred_element_type=jnp.float32)
                  + b_ref[...]).astype(o_ref.dtype)


def _input_projection(x_flat, w, b, *, tm, tn):
    M, din = x_flat.shape
    N = w.shape[1]
    flops = 2 * M * din * N
    bytes_accessed = (M * din + din * N + M * N) * 2 + N * 4
    return pl.pallas_call(
        _input_proj_kernel,
        out_shape=jax.ShapeDtypeStruct((M, N), jnp.bfloat16),
        grid_spec=pltpu.PrefetchScalarGridSpec(
            num_scalar_prefetch=0,
            grid=(M // tm, N // tn),
            in_specs=[
                pl.BlockSpec((tm, din), lambda i, j: (i, 0)),
                pl.BlockSpec((din, tn), lambda i, j: (0, j)),
                pl.BlockSpec((1, tn), lambda i, j: (0, j)),
            ],
            out_specs=pl.BlockSpec((tm, tn), lambda i, j: (i, j)),
        ),
        compiler_params=pltpu.CompilerParams(
            dimension_semantics=("parallel", "parallel"),
            vmem_limit_bytes=_VMEM_LIMIT),
        cost_estimate=pl.CostEstimate(flops=flops, transcendentals=0,
                                      bytes_accessed=bytes_accessed),
    )(x_flat, w, b)


# ----------------------------------------------------------------------------
# Shared single-timestep GRU update (gi already contains b_ih + b_hh[r,z]).
# gi arrives bf16 (storage dtype); gate math is done in f32.
# ----------------------------------------------------------------------------
def _gru_step(gi_bf16, h, whh, bhh_n, h_pad):
    gi = gi_bf16.astype(jnp.float32)
    # Only the recurrent matmul remains on the serial critical path.
    # NOTE: a further optimization would hold W_hh stationary in the MXU across the
    # chunk via pltpu.matmul_push_rhs / matmul_acc_lhs / matmul_pop.
    gh = jnp.dot(h.astype(jnp.bfloat16), whh,
                 preferred_element_type=jnp.float32)        # (B_pad, 3*H_pad) f32
    r = jax.nn.sigmoid(gi[:, 0 * h_pad:1 * h_pad] + gh[:, 0 * h_pad:1 * h_pad])
    z = jax.nn.sigmoid(gi[:, 1 * h_pad:2 * h_pad] + gh[:, 1 * h_pad:2 * h_pad])
    n = jnp.tanh(gi[:, 2 * h_pad:3 * h_pad]
                 + r * (gh[:, 2 * h_pad:3 * h_pad] + bhh_n))
    return (1.0 - z) * n + z * h


# ----------------------------------------------------------------------------
# Kernel 2a: GRU recurrence, t_chunk timesteps per grid step, full sequence out (bf16).
# ----------------------------------------------------------------------------
def _gru_seq_kernel(gi_ref, whh_ref, bhhn_ref, out_ref, h_scratch,
                    *, t_chunk, seq_len, h_pad, unroll):
    c = pl.program_id(0)

    @pl.when(c == 0)
    def _():
        h_scratch[...] = jnp.zeros_like(h_scratch)   # h_0 = 0 (matches torch.zeros)

    whh = whh_ref[...]
    bhh_n = bhhn_ref[...]
    needs_mask = (seq_len % t_chunk) != 0            # static (trace-time) decision

    def body(i, h):
        h_new = _gru_step(gi_ref[i], h, whh, bhh_n, h_pad)
        if needs_mask:
            h_new = jnp.where(c * t_chunk + i < seq_len, h_new, h)
        out_ref[i] = h_new.astype(out_ref.dtype)
        return h_new

    h = lax.fori_loop(0, t_chunk, body, h_scratch[...], unroll=unroll)
    h_scratch[...] = h


def gru_layer_seq(gi, whh, bhh_n, *, seq_len, t_chunk, unroll):
    t_pad, b_pad, three_h_pad = gi.shape
    h_pad = three_h_pad // 3
    kernel = functools.partial(_gru_seq_kernel, t_chunk=t_chunk,
                               seq_len=seq_len, h_pad=h_pad, unroll=unroll)
    flops = 2 * t_pad * b_pad * h_pad * three_h_pad
    bytes_accessed = (t_pad * b_pad * three_h_pad + t_pad * b_pad * h_pad
                      + h_pad * three_h_pad) * 2
    return pl.pallas_call(
        kernel,
        out_shape=jax.ShapeDtypeStruct((t_pad, b_pad, h_pad), jnp.bfloat16),
        grid_spec=pltpu.PrefetchScalarGridSpec(
            num_scalar_prefetch=0,
            grid=(t_pad // t_chunk,),
            in_specs=[
                pl.BlockSpec((t_chunk, b_pad, three_h_pad), lambda c: (c, 0, 0)),
                # Grid-invariant weight blocks: single-buffer (no point double-buffering
                # a block whose index never changes; halves their VMEM footprint).
                pl.BlockSpec((h_pad, three_h_pad), lambda c: (0, 0),
                             pipeline_mode=pl.Buffered(1)),
                pl.BlockSpec((1, h_pad), lambda c: (0, 0),
                             pipeline_mode=pl.Buffered(1)),
            ],
            out_specs=pl.BlockSpec((t_chunk, b_pad, h_pad), lambda c: (c, 0, 0)),
            scratch_shapes=[pltpu.VMEM((b_pad, h_pad), jnp.float32)],
        ),
        compiler_params=pltpu.CompilerParams(
            dimension_semantics=("arbitrary",),      # sequential recurrence
            vmem_limit_bytes=_VMEM_LIMIT),
        cost_estimate=pl.CostEstimate(
            flops=flops, transcendentals=3 * t_pad * b_pad * h_pad,
            bytes_accessed=bytes_accessed),
    )(gi, whh, bhh_n)


# ----------------------------------------------------------------------------
# Kernel 2b: last GRU layer fused with the fc head; only logits leave the kernel.
# ----------------------------------------------------------------------------
def _gru_last_fc_kernel(gi_ref, whh_ref, bhhn_ref, fcw_ref, fcb_ref,
                        out_ref, h_scratch, *, t_chunk, seq_len, h_pad, unroll):
    c = pl.program_id(0)

    @pl.when(c == 0)
    def _():
        h_scratch[...] = jnp.zeros_like(h_scratch)

    whh = whh_ref[...]
    bhh_n = bhhn_ref[...]
    needs_mask = (seq_len % t_chunk) != 0

    def body(i, h):
        h_new = _gru_step(gi_ref[i], h, whh, bhh_n, h_pad)
        if needs_mask:
            h_new = jnp.where(c * t_chunk + i < seq_len, h_new, h)
        return h_new

    h = lax.fori_loop(0, t_chunk, body, h_scratch[...], unroll=unroll)
    h_scratch[...] = h

    # NOTE: the output block has a constant index_map and is written only on the last
    # grid step; this is correct ONLY because the grid axis is "arbitrary" (the block
    # stays resident across the whole grid).  Do not mark this axis "parallel".
    @pl.when(c == pl.num_programs(0) - 1)
    def _():
        logits = (jnp.dot(h.astype(jnp.bfloat16), fcw_ref[...],
                          preferred_element_type=jnp.float32)
                  + fcb_ref[...])
        out_ref[...] = logits.astype(out_ref.dtype)


def gru_layer_last_fc(gi, whh, bhh_n, fcw, fcb, *, seq_len, t_chunk, unroll):
    t_pad, b_pad, three_h_pad = gi.shape
    h_pad = three_h_pad // 3
    c_pad = fcw.shape[1]
    kernel = functools.partial(_gru_last_fc_kernel, t_chunk=t_chunk,
                               seq_len=seq_len, h_pad=h_pad, unroll=unroll)
    flops = (2 * t_pad * b_pad * h_pad * three_h_pad
             + 2 * b_pad * h_pad * c_pad)
    bytes_accessed = ((t_pad * b_pad * three_h_pad + h_pad * three_h_pad
                       + h_pad * c_pad) * 2 + b_pad * c_pad * 4)
    return pl.pallas_call(
        kernel,
        out_shape=jax.ShapeDtypeStruct((b_pad, c_pad), jnp.float32),
        grid_spec=pltpu.PrefetchScalarGridSpec(
            num_scalar_prefetch=0,
            grid=(t_pad // t_chunk,),
            in_specs=[
                pl.BlockSpec((t_chunk, b_pad, three_h_pad), lambda c: (c, 0, 0)),
                pl.BlockSpec((h_pad, three_h_pad), lambda c: (0, 0),
                             pipeline_mode=pl.Buffered(1)),
                pl.BlockSpec((1, h_pad), lambda c: (0, 0),
                             pipeline_mode=pl.Buffered(1)),
                pl.BlockSpec((h_pad, c_pad), lambda c: (0, 0),
                             pipeline_mode=pl.Buffered(1)),
                pl.BlockSpec((1, c_pad), lambda c: (0, 0),
                             pipeline_mode=pl.Buffered(1)),
            ],
            out_specs=pl.BlockSpec((b_pad, c_pad), lambda c: (0, 0)),
            scratch_shapes=[pltpu.VMEM((b_pad, h_pad), jnp.float32)],
        ),
        compiler_params=pltpu.CompilerParams(
            dimension_semantics=("arbitrary",),
            vmem_limit_bytes=_VMEM_LIMIT),
        cost_estimate=pl.CostEstimate(
            flops=flops, transcendentals=3 * t_pad * b_pad * h_pad,
            bytes_accessed=bytes_accessed),
    )(gi, whh, bhh_n, fcw, fcb)


# ----------------------------------------------------------------------------
# Weight padding / gate-blocked layout helpers (run once per call under jit).
# Each gate [r,z,n] is placed in its own H_pad slot so in-kernel slices at
# multiples of H_pad select the right gate; padding is zero-filled.
# ----------------------------------------------------------------------------
def _pad_gate_weight(w, h, h_pad, d_in, d_in_pad, dtype):
    out = jnp.zeros((d_in_pad, 3 * h_pad), dtype)
    for g in range(3):
        blk = jnp.transpose(w[g * h:(g + 1) * h, :]).astype(dtype)   # (d_in, h)
        out = out.at[:d_in, g * h_pad:g * h_pad + h].set(blk)
    return out


def _pad_gate_bias(b, h, h_pad, gates=(0, 1, 2)):
    out = jnp.zeros((3 * h_pad,), jnp.float32)
    for g in gates:
        out = out.at[g * h_pad:g * h_pad + h].set(b[g * h:(g + 1) * h].astype(jnp.float32))
    return out


# ----------------------------------------------------------------------------
# Full model forward (equivalent to RNN.forward in the PyTorch module)
# ----------------------------------------------------------------------------
@jax.jit
def rnn_forward(x, params):
    """x: (B, T, input_size) batch_first -> logits (B, nb_classes)."""
    num_layers = len(params["gru"])
    B, T, D = x.shape
    H = params["gru"][0]["w_hh"].shape[1]
    C = params["fc"]["w"].shape[0]

    b_pad = _round_up(B, 16)          # bf16 native tile is (16, 128)
    h_pad = _round_up(H, 128)
    d_pad = _round_up(D, 128)
    c_pad = _round_up(C, 128)
    t_chunk = min(T, 64)              # amortize per-grid-step overhead over more steps
    t_pad = _round_up(T, t_chunk)
    unroll = min(t_chunk, 8)          # partial unroll: LLO visibility w/o code bloat

    proj_tm = _pick_row_tile(t_pad, b_pad)   # projection tile decoupled from t_chunk
    proj_tn = _pick_col_tile(h_pad)          # 128/256/512-wide gate-column tiles

    # batch_first (B,T,D) -> time-major padded bf16 (T_pad, B_pad, D_pad)
    seq = jnp.transpose(x, (1, 0, 2)).astype(jnp.bfloat16)
    seq = jnp.pad(seq, ((0, t_pad - T), (0, b_pad - B), (0, d_pad - D)))

    d_in_pad = d_pad
    logits = None
    for layer in range(num_layers):
        p = params["gru"][layer]
        d_in = p["w_ih"].shape[1]                              # D for layer 0 else H

        wih = _pad_gate_weight(p["w_ih"], H, h_pad, d_in, d_in_pad, jnp.bfloat16)
        whh = _pad_gate_weight(p["w_hh"], H, h_pad, H, h_pad, jnp.bfloat16)
        # Fold b_ih and b_hh[r,z] into the hoisted projection bias; b_hh[n] must stay
        # inside the recurrence because of the r * (W_hn h + b_hn) term.
        gi_bias = (_pad_gate_bias(p["b_ih"], H, h_pad)
                   + _pad_gate_bias(p["b_hh"], H, h_pad, gates=(0, 1))
                   ).reshape(1, 3 * h_pad)
        bhh_n = jnp.zeros((1, h_pad), jnp.float32).at[0, :H].set(
            p["b_hh"][2 * H:3 * H].astype(jnp.float32))

        # Hoisted batched input projection over all timesteps (big parallel MXU matmul).
        gi = _input_projection(seq.reshape(t_pad * b_pad, d_in_pad),
                               wih, gi_bias, tm=proj_tm, tn=proj_tn)
        gi = gi.reshape(t_pad, b_pad, 3 * h_pad)

        if layer < num_layers - 1:
            seq = gru_layer_seq(gi, whh, bhh_n, seq_len=T, t_chunk=t_chunk,
                                unroll=unroll)
            d_in_pad = h_pad
        else:
            fcw = jnp.zeros((h_pad, c_pad), jnp.bfloat16).at[:H, :C].set(
                jnp.transpose(params["fc"]["w"]).astype(jnp.bfloat16))
            fcb = jnp.zeros((1, c_pad), jnp.float32).at[0, :C].set(
                params["fc"]["b"].astype(jnp.float32))
            logits = gru_layer_last_fc(gi, whh, bhh_n, fcw, fcb,
                                       seq_len=T, t_chunk=t_chunk, unroll=unroll)
        # TODO(synk): nn.GRU inter-layer dropout is train-only; this is the eval forward.

    return logits[:B, :C]


# ----------------------------------------------------------------------------
# Parameter init (PyTorch-shaped: U(-1/sqrt(H), 1/sqrt(H))) and a pure-JAX reference.
# ----------------------------------------------------------------------------
def init_params(key, input_size, hidden_size, num_layers, nb_classes):
    bound = 1.0 / jnp.sqrt(jnp.float32(hidden_size))
    gru = []
    for layer in range(num_layers):
        d_in = input_size if layer == 0 else hidden_size
        key, k1, k2, k3, k4 = jax.random.split(key, 5)
        gru.append({
            "w_ih": jax.random.uniform(k1, (3 * hidden_size, d_in),
                                       jnp.float32, -bound, bound),
            "w_hh": jax.random.uniform(k2, (3 * hidden_size, hidden_size),
                                       jnp.float32, -bound, bound),
            "b_ih": jax.random.uniform(k3, (3 * hidden_size,),
                                       jnp.float32, -bound, bound),
            "b_hh": jax.random.uniform(k4, (3 * hidden_size,),
                                       jnp.float32, -bound, bound),
        })
    key, k5, k6 = jax.random.split(key, 3)
    fc = {
        "w": jax.random.uniform(k5, (nb_classes, hidden_size),
                                jnp.float32, -bound, bound),
        "b": jax.random.uniform(k6, (nb_classes,),
                                jnp.float32, -bound, bound),
    }
    return {"gru": gru, "fc": fc}


def _gru_reference(x, params):
    """Pure-JAX f32 reference (matches PyTorch nn.GRU + Linear semantics)."""
    h_seq = jnp.transpose(x, (1, 0, 2))
    B = x.shape[0]
    for p in params["gru"]:
        H = p["w_hh"].shape[1]
        wih, whh, bih, bhh = p["w_ih"], p["w_hh"], p["b_ih"], p["b_hh"]

        def step(h, x_t, wih=wih, whh=whh, bih=bih, bhh=bhh, H=H):
            gi = x_t @ wih.T + bih
            gh = h @ whh.T + bhh
            r = jax.nn.sigmoid(gi[:, :H] + gh[:, :H])
            z = jax.nn.sigmoid(gi[:, H:2 * H] + gh[:, H:2 * H])
            n = jnp.tanh(gi[:, 2 * H:] + r * gh[:, 2 * H:])
            h_new = (1.0 - z) * n + z * h
            return h_new, h_new

        _, h_seq = lax.scan(step, jnp.zeros((B, H), jnp.float32), h_seq)
    return h_seq[-1] @ params["fc"]["w"].T + params["fc"]["b"]


if __name__ == "__main__":
    batch, seq_len, input_size = 2, 8, 4
    hidden_size, num_layers, nb_classes = 32, 2, 5

    key = jax.random.PRNGKey(0)
    key, kx = jax.random.split(key)
    x = jax.random.normal(kx, (batch, seq_len, input_size), jnp.float32)
    params = init_params(key, input_size, hidden_size, num_layers, nb_classes)

    logits = rnn_forward(x, params)
    jax.block_until_ready(logits)
    assert logits.shape == (batch, nb_classes)

    # Loose tolerance: Pallas path uses bf16 matmul operands AND bf16 gi/seq storage
    # (f32 accumulation and gate math).
    ref = _gru_reference(x, params)
    err = float(jnp.max(jnp.abs(logits - ref)))
    assert err < 1e-1, f"mismatch vs reference: {err}"
    print("KERNEL_OK")
</pallas_src>

<mosaic_0001>
module attributes {stable_mosaic.version = 11 : i64} {
  func.func @_input_proj_kernel(%arg0: i32, %arg1: i32, %arg2: memref<128x128xbf16, #tpu.memory_space<vmem>>, %arg3: memref<128x128xbf16, #tpu.memory_space<vmem>>, %arg4: memref<1x128xf32, #tpu.memory_space<vmem>>, %arg5: memref<128x128xbf16, #tpu.memory_space<vmem>>) attributes {dimension_semantics = [#tpu.dimension_semantics<parallel>, #tpu.dimension_semantics<parallel>], iteration_bounds = array<i64: 1, 3>, scalar_prefetch = 0 : i64, scratch_operands = 0 : i64, tpu.core_type = #tpu.core_type<tc>, window_params = [{transform_indices = @transform_0, window_bounds = array<i64: 128, 128>}, {transform_indices = @transform_1, window_bounds = array<i64: 128, 128>}, {transform_indices = @transform_2, window_bounds = array<i64: 1, 128>}, {transform_indices = @transform_3, window_bounds = array<i64: 128, 128>}]} {
    %c0 = arith.constant 0 : index
    %c0_0 = arith.constant 0 : index
    %0 = vector.load %arg2[%c0, %c0_0] : memref<128x128xbf16, #tpu.memory_space<vmem>>, vector<128x128xbf16>
    %c0_1 = arith.constant 0 : index
    %c0_2 = arith.constant 0 : index
    %1 = vector.load %arg3[%c0_1, %c0_2] : memref<128x128xbf16, #tpu.memory_space<vmem>>, vector<128x128xbf16>
    %cst = arith.constant dense<0.000000e+00> : vector<128x128xf32>
    %2 = tpu.matmul %0, %1, %cst {dimension_numbers = #tpu.dot_dimension_numbers<[1], [0], [0], [1], [0, 0, 1, 1], [], []>} : vector<128x128xbf16>, vector<128x128xbf16>, vector<128x128xf32> -> vector<128x128xf32>
    %c0_3 = arith.constant 0 : index
    %c0_4 = arith.constant 0 : index
    %3 = vector.load %arg4[%c0_3, %c0_4] : memref<1x128xf32, #tpu.memory_space<vmem>>, vector<1x128xf32>
    %4 = vector.broadcast %3 : vector<1x128xf32> to vector<128x128xf32>
    %5 = arith.addf %2, %4 : vector<128x128xf32>
    %6 = arith.truncf %5 : vector<128x128xf32> to vector<128x128xbf16>
    %c0_5 = arith.constant 0 : index
    %c0_6 = arith.constant 0 : index
    %7 = vector.load %arg5[%c0_5, %c0_6] : memref<128x128xbf16, #tpu.memory_space<vmem>>, vector<128x128xbf16>
    tpu.vector_store %arg5[%c0_5, %c0_6], %6 {strides = array<i32>} : memref<128x128xbf16, #tpu.memory_space<vmem>>, vector<128x128xbf16>,
    return
  }
  func.func @transform_0(%arg0: i32, %arg1: i32) -> (i32, i32) {
    %c0_i32 = arith.constant 0 : i32
    %c0_i32_0 = arith.constant 0 : i32
    return %arg0, %c0_i32 : i32, i32
  }
  func.func @transform_1(%arg0: i32, %arg1: i32) -> (i32, i32) {
    %c0_i32 = arith.constant 0 : i32
    %c0_i32_0 = arith.constant 0 : i32
    return %c0_i32, %arg1 : i32, i32
  }
  func.func @transform_2(%arg0: i32, %arg1: i32) -> (i32, i32) {
    %c0_i32 = arith.constant 0 : i32
    %c0_i32_0 = arith.constant 0 : i32
    return %c0_i32, %arg1 : i32, i32
  }
  func.func @transform_3(%arg0: i32, %arg1: i32) -> (i32, i32) {
    %c0_i32 = arith.constant 0 : i32
    return %arg0, %arg1 : i32, i32
  }
}

module attributes {stable_mosaic.version = 11 : i64} {
  func.func @_gru_seq_kernel(%arg0: i32, %arg1: memref<8x16x384xbf16, #tpu.memory_space<vmem>>, %arg2: memref<128x384xbf16, #tpu.memory_space<vmem>>, %arg3: memref<1x128xf32, #tpu.memory_space<vmem>>, %arg4: memref<8x16x128xbf16, #tpu.memory_space<vmem>>, %arg5: memref<16x128xf32, #tpu.memory_space<vmem>>) attributes {dimension_semantics = [#tpu.dimension_semantics<arbitrary>], iteration_bounds = array<i64: 1>, scalar_prefetch = 0 : i64, scratch_operands = 1 : i64, tpu.core_type = #tpu.core_type<tc>, window_params = [{transform_indices = @transform_0, window_bounds = array<i64: 8, 16, 384>}, {pipeline_mode = #tpu.pipeline_mode<synchronous>, transform_indices = @transform_1, window_bounds = array<i64: 128, 384>}, {pipeline_mode = #tpu.pipeline_mode<synchronous>, transform_indices = @transform_2, window_bounds = array<i64: 1, 128>}, {transform_indices = @transform_3, window_bounds = array<i64: 8, 16, 128>}]} {
    %c0_i32 = arith.constant 0 : i32
    %0 = arith.cmpi eq, %arg0, %c0_i32 : i32
    %1 = arith.extui %0 : i1 to i32
    %c0_i32_0 = arith.constant 0 : i32
    %2 = arith.cmpi ne, %1, %c0_i32_0 : i32
    scf.if %2 {
      %cst_72 = arith.constant 0.000000e+00 : f32
      %319 = vector.broadcast %cst_72 : f32 to vector<16x128xf32>
      %c0_73 = arith.constant 0 : index
      %c0_74 = arith.constant 0 : index
      %320 = vector.load %arg5[%c0_73, %c0_74] : memref<16x128xf32, #tpu.memory_space<vmem>>, vector<16x128xf32>
      tpu.vector_store %arg5[%c0_73, %c0_74], %319 {strides = array<i32>} : memref<16x128xf32, #tpu.memory_space<vmem>>, vector<16x128xf32>,
    } else {
    }
    %c0 = arith.constant 0 : index
    %c0_1 = arith.constant 0 : index
    %3 = vector.load %arg2[%c0, %c0_1] : memref<128x384xbf16, #tpu.memory_space<vmem>>, vector<128x384xbf16>
    %c0_2 = arith.constant 0 : index
    %c0_3 = arith.constant 0 : index
    %4 = vector.load %arg3[%c0_2, %c0_3] : memref<1x128xf32, #tpu.memory_space<vmem>>, vector<1x128xf32>
    %c0_4 = arith.constant 0 : index
    %c0_5 = arith.constant 0 : index
    %5 = vector.load %arg5[%c0_4, %c0_5] : memref<16x128xf32, #tpu.memory_space<vmem>>, vector<16x128xf32>
    %c0_i32_6 = arith.constant 0 : i32
    %6 = arith.index_cast %c0_i32_6 : i32 to index
    %c0_7 = arith.constant 0 : index
    %c0_8 = arith.constant 0 : index
    %7 = vector.load %arg1[%6, %c0_7, %c0_8] : memref<8x16x384xbf16, #tpu.memory_space<vmem>>, vector<1x16x384xbf16>
    %8 = vector.shape_cast %7 : vector<1x16x384xbf16> to vector<16x384xbf16>
    %9 = arith.extf %8 : vector<16x384xbf16> to vector<16x384xf32>
    %10 = arith.truncf %5 : vector<16x128xf32> to vector<16x128xbf16>
    %cst = arith.constant dense<0.000000e+00> : vector<16x384xf32>
    %11 = tpu.matmul %10, %3, %cst {dimension_numbers = #tpu.dot_dimension_numbers<[1], [0], [0], [1], [0, 0, 1, 1], [], []>} : vector<16x128xbf16>, vector<128x384xbf16>, vector<16x384xf32> -> vector<16x384xf32>
    %12 = vector.extract_strided_slice %9 {offsets = [0, 0], sizes = [16, 128], strides = [1, 1]} : vector<16x384xf32> to vector<16x128xf32>
    %13 = vector.extract_strided_slice %11 {offsets = [0, 0], sizes = [16, 128], strides = [1, 1]} : vector<16x384xf32> to vector<16x128xf32>
    %14 = arith.addf %12, %13 : vector<16x128xf32>
    %15 = arith.negf %14 : vector<16x128xf32>
    %16 = math.exp %15 : vector<16x128xf32>
    %cst_9 = arith.constant 1.000000e+00 : f32
    %17 = vector.broadcast %cst_9 : f32 to vector<16x128xf32>
    %18 = arith.addf %17, %16 : vector<16x128xf32>
    %19 = arith.divf %17, %18 : vector<16x128xf32>
    %20 = vector.extract_strided_slice %9 {offsets = [0, 128], sizes = [16, 128], strides = [1, 1]} : vector<16x384xf32> to vector<16x128xf32>
    %21 = vector.extract_strided_slice %11 {offsets = [0, 128], sizes = [16, 128], strides = [1, 1]} : vector<16x384xf32> to vector<16x128xf32>
    %22 = arith.addf %20, %21 : vector<16x128xf32>
    %23 = arith.negf %22 : vector<16x128xf32>
    %24 = math.exp %23 : vector<16x128xf32>
    %cst_10 = arith.constant 1.000000e+00 : f32
    %25 = vector.broadcast %cst_10 : f32 to vector<16x128xf32>
    %26 = arith.addf %25, %24 : vector<16x128xf32>
    %27 = arith.divf %25, %26 : vector<16x128xf32>
    %28 = vector.extract_strided_slice %9 {offsets = [0, 256], sizes = [16, 128], strides = [1, 1]} : vector<16x384xf32> to vector<16x128xf32>
    %29 = vector.extract_strided_slice %11 {offsets = [0, 256], sizes = [16, 128], strides = [1, 1]} : vector<16x384xf32> to vector<16x128xf32>
    %30 = vector.broadcast %4 : vector<1x128xf32> to vector<16x128xf32>
    %31 = arith.addf %29, %30 : vector<16x128xf32>
    %32 = arith.mulf %19, %31 : vector<16x128xf32>
    %33 = arith.addf %28, %32 : vector<16x128xf32>
    %34 = math.tanh %33 : vector<16x128xf32>
    %cst_11 = arith.constant 1.000000e+00 : f32
    %35 = vector.broadcast %cst_11 : f32 to vector<16x128xf32>
    %36 = arith.subf %35, %27 : vector<16x128xf32>
    %37 = arith.mulf %36, %34 : vector<16x128xf32>
    %38 = arith.mulf %27, %5 : vector<16x128xf32>
    %39 = arith.addf %37, %38 : vector<16x128xf32>
    %40 = arith.truncf %39 : vector<16x128xf32> to vector<16x128xbf16>
    %41 = arith.index_cast %c0_i32_6 : i32 to index
    %c0_12 = arith.constant 0 : index
    %c0_13 = arith.constant 0 : index
    %42 = vector.load %arg4[%41, %c0_12, %c0_13] : memref<8x16x128xbf16, #tpu.memory_space<vmem>>, vector<1x16x128xbf16>
    %43 = vector.shape_cast %42 : vector<1x16x128xbf16> to vector<16x128xbf16>
    %44 = vector.shape_cast %40 : vector<16x128xbf16> to vector<1x16x128xbf16>
    tpu.vector_store %arg4[%41, %c0_12, %c0_13], %44 {strides = array<i32>} : memref<8x16x128xbf16, #tpu.memory_space<vmem>>, vector<1x16x128xbf16>,
    %c1_i32 = arith.constant 1 : i32
    %45 = arith.index_cast %c1_i32 : i32 to index
    %c0_14 = arith.constant 0 : index
    %c0_15 = arith.constant 0 : index
    %46 = vector.load %arg1[%45, %c0_14, %c0_15] : memref<8x16x384xbf16, #tpu.memory_space<vmem>>, vector<1x16x384xbf16>
    %47 = vector.shape_cast %46 : vector<1x16x384xbf16> to vector<16x384xbf16>
    %48 = arith.extf %47 : vector<16x384xbf16> to vector<16x384xf32>
    %49 = arith.truncf %39 : vector<16x128xf32> to vector<16x128xbf16>
    %cst_16 = arith.constant dense<0.000000e+00> : vector<16x384xf32>
    %50 = tpu.matmul %49, %3, %cst_16 {dimension_numbers = #tpu.dot_dimension_numbers<[1], [0], [0], [1], [0, 0, 1, 1], [], []>} : vector<16x128xbf16>, vector<128x384xbf16>, vector<16x384xf32> -> vector<16x384xf32>
    %51 = vector.extract_strided_slice %48 {offsets = [0, 0], sizes = [16, 128], strides = [1, 1]} : vector<16x384xf32> to vector<16x128xf32>
    %52 = vector.extract_strided_slice %50 {offsets = [0, 0], sizes = [16, 128], strides = [1, 1]} : vector<16x384xf32> to vector<16x128xf32>
    %53 = arith.addf %51, %52 : vector<16x128xf32>
    %54 = arith.negf %53 : vector<16x128xf32>
    %55 = math.exp %54 : vector<16x128xf32>
    %cst_17 = arith.constant 1.000000e+00 : f32
    %56 = vector.broadcast %cst_17 : f32 to vector<16x128xf32>
    %57 = arith.addf %56, %55 : vector<16x128xf32>
    %58 = arith.divf %56, %57 : vector<16x128xf32>
    %59 = vector.extract_strided_slice %48 {offsets = [0, 128], sizes = [16, 128], strides = [1, 1]} : vector<16x384xf32> to vector<16x128xf32>
    %60 = vector.extract_strided_slice %50 {offsets = [0, 128], sizes = [16, 128], strides = [1, 1]} : vector<16x384xf32> to vector<16x128xf32>
    %61 = arith.addf %59, %60 : vector<16x128xf32>
    %62 = arith.negf %61 : vector<16x128xf32>
    %63 = math.exp %62 : vector<16x128xf32>
    %cst_18 = arith.constant 1.000000e+00 : f32
    %64 = vector.broadcast %cst_18 : f32 to vector<16x128xf32>
    %65 = arith.addf %64, %63 : vector<16x128xf32>
    %66 = arith.divf %64, %65 : vector<16x128xf32>
    %67 = vector.extract_strided_slice %48 {offsets = [0, 256], sizes = [16, 128], strides = [1, 1]} : vector<16x384xf32> to vector<16x128xf32>
    %68 = vector.extract_strided_slice %50 {offsets = [0, 256], sizes = [16, 128], strides = [1, 1]} : vector<16x384xf32> to vector<16x128xf32>
    %69 = vector.broadcast %4 : vector<1x128xf32> to vector<16x128xf32>
    %70 = arith.addf %68, %69 : vector<16x128xf32>
    %71 = arith.mulf %58, %70 : vector<16x128xf32>
    %72 = arith.addf %67, %71 : vector<16x128xf32>
    %73 = math.tanh %72 : vector<16x128xf32>
    %cst_19 = arith.constant 1.000000e+00 : f32
    %74 = vector.broadcast %cst_19 : f32 to vector<16x128xf32>
    %75 = arith.subf %74, %66 : vector<16x128xf32>
    %76 = arith.mulf %75, %73 : vector<16x128xf32>
    %77 = arith.mulf %66, %39 : vector<16x128xf32>
    %78 = arith.addf %76, %77 : vector<16x128xf32>
    %79 = arith.truncf %78 : vector<16x128xf32> to vector<16x128xbf16>
    %80 = arith.index_cast %c1_i32 : i32 to index
    %c0_20 = arith.constant 0 : index
    %c0_21 = arith.constant 0 : index
    %81 = vector.load %arg4[%80, %c0_20, %c0_21] : memref<8x16x128xbf16, #tpu.memory_space<vmem>>, vector<1x16x128xbf16>
    %82 = vector.shape_cast %81 : vector<1x16x128xbf16> to vector<16x128xbf16>
    %83 = vector.shape_cast %79 : vector<16x128xbf16> to vector<1x16x128xbf16>
    tpu.vector_store %arg4[%80, %c0_20, %c0_21], %83 {strides = array<i32>} : memref<8x16x128xbf16, #tpu.memory_space<vmem>>, vector<1x16x128xbf16>,
    %c2_i32 = arith.constant 2 : i32
    %84 = arith.index_cast %c2_i32 : i32 to index
    %c0_22 = arith.constant 0 : index
    %c0_23 = arith.constant 0 : index
    %85 = vector.load %arg1[%84, %c0_22, %c0_23] : memref<8x16x384xbf16, #tpu.memory_space<vmem>>, vector<1x16x384xbf16>
    %86 = vector.shape_cast %85 : vector<1x16x384xbf16> to vector<16x384xbf16>
    %87 = arith.extf %86 : vector<16x384xbf16> to vector<16x384xf32>
    %88 = arith.truncf %78 : vector<16x128xf32> to vector<16x128xbf16>
    %cst_24 = arith.constant dense<0.000000e+00> : vector<16x384xf32>
    %89 = tpu.matmul %88, %3, %cst_24 {dimension_numbers = #tpu.dot_dimension_numbers<[1], [0], [0], [1], [0, 0, 1, 1], [], []>} : vector<16x128xbf16>, vector<128x384xbf16>, vector<16x384xf32> -> vector<16x384xf32>
    %90 = vector.extract_strided_slice %87 {offsets = [0, 0], sizes = [16, 128], strides = [1, 1]} : vector<16x384xf32> to vector<16x128xf32>
    %91 = vector.extract_strided_slice %89 {offsets = [0, 0], sizes = [16, 128], strides = [1, 1]} : vector<16x384xf32> to vector<16x128xf32>
    %92 = arith.addf %90, %91 : vector<16x128xf32>
    %93 = arith.negf %92 : vector<16x128xf32>
    %94 = math.exp %93 : vector<16x128xf32>
    %cst_25 = arith.constant 1.000000e+00 : f32
    %95 = vector.broadcast %cst_25 : f32 to vector<16x128xf32>
    %96 = arith.addf %95, %94 : vector<16x128xf32>
    %97 = arith.divf %95, %96 : vector<16x128xf32>
    %98 = vector.extract_strided_slice %87 {offsets = [0, 128], sizes = [16, 128], strides = [1, 1]} : vector<16x384xf32> to vector<16x128xf32>
    %99 = vector.extract_strided_slice %89 {offsets = [0, 128], sizes = [16, 128], strides = [1, 1]} : vector<16x384xf32> to vector<16x128xf32>
    %100 = arith.addf %98, %99 : vector<16x128xf32>
    %101 = arith.negf %100 : vector<16x128xf32>
    %102 = math.exp %101 : vector<16x128xf32>
    %cst_26 = arith.constant 1.000000e+00 : f32
    %103 = vector.broadcast %cst_26 : f32 to vector<16x128xf32>
    %104 = arith.addf %103, %102 : vector<16x128xf32>
    %105 = arith.divf %103, %104 : vector<16x128xf32>
    %106 = vector.extract_strided_slice %87 {offsets = [0, 256], sizes = [16, 128], strides = [1, 1]} : vector<16x384xf32> to vector<16x128xf32>
    %107 = vector.extract_strided_slice %89 {offsets = [0, 256], sizes = [16, 128], strides = [1, 1]} : vector<16x384xf32> to vector<16x128xf32>
    %108 = vector.broadcast %4 : vector<1x128xf32> to vector<16x128xf32>
    %109 = arith.addf %107, %108 : vector<16x128xf32>
    %110 = arith.mulf %97, %109 : vector<16x128xf32>
    %111 = arith.addf %106, %110 : vector<16x128xf32>
    %112 = math.tanh %111 : vector<16x128xf32>
    %cst_27 = arith.constant 1.000000e+00 : f32
    %113 = vector.broadcast %cst_27 : f32 to vector<16x128xf32>
    %114 = arith.subf %113, %105 : vector<16x128xf32>
    %115 = arith.mulf %114, %112 : vector<16x128xf32>
    %116 = arith.mulf %105, %78 : vector<16x128xf32>
    %117 = arith.addf %115, %116 : vector<16x128xf32>
    %118 = arith.truncf %117 : vector<16x128xf32> to vector<16x128xbf16>
    %119 = arith.index_cast %c2_i32 : i32 to index
    %c0_28 = arith.constant 0 : index
    %c0_29 = arith.constant 0 : index
    %120 = vector.load %arg4[%119, %c0_28, %c0_29] : memref<8x16x128xbf16, #tpu.memory_space<vmem>>, vector<1x16x128xbf16>
    %121 = vector.shape_cast %120 : vector<1x16x128xbf16> to vector<16x128xbf16>
    %122 = vector.shape_cast %118 : vector<16x128xbf16> to vector<1x16x128xbf16>
    tpu.vector_store %arg4[%119, %c0_28, %c0_29], %122 {strides = array<i32>} : memref<8x16x128xbf16, #tpu.memory_space<vmem>>, vector<1x16x128xbf16>,
    %c3_i32 = arith.constant 3 : i32
    %123 = arith.index_cast %c3_i32 : i32 to index
    %c0_30 = arith.constant 0 : index
    %c0_31 = arith.constant 0 : index
    %124 = vector.load %arg1[%123, %c0_30, %c0_31] : memref<8x16x384xbf16, #tpu.memory_space<vmem>>, vector<1x16x384xbf16>
    %125 = vector.shape_cast %124 : vector<1x16x384xbf16> to vector<16x384xbf16>
    %126 = arith.extf %125 : vector<16x384xbf16> to vector<16x384xf32>
    %127 = arith.truncf %117 : vector<16x128xf32> to vector<16x128xbf16>
    %cst_32 = arith.constant dense<0.000000e+00> : vector<16x384xf32>
    %128 = tpu.matmul %127, %3, %cst_32 {dimension_numbers = #tpu.dot_dimension_numbers<[1], [0], [0], [1], [0, 0, 1, 1], [], []>} : vector<16x128xbf16>, vector<128x384xbf16>, vector<16x384xf32> -> vector<16x384xf32>
    %129 = vector.extract_strided_slice %126 {offsets = [0, 0], sizes = [16, 128], strides = [1, 1]} : vector<16x384xf32> to vector<16x128xf32>
    %130 = vector.extract_strided_slice %128 {offsets = [0, 0], sizes = [16, 128], strides = [1, 1]} : vector<16x384xf32> to vector<16x128xf32>
    %131 = arith.addf %129, %130 : vector<16x128xf32>
    %132 = arith.negf %131 : vector<16x128xf32>
    %133 = math.exp %132 : vector<16x128xf32>
    %cst_33 = arith.constant 1.000000e+00 : f32
    %134 = vector.broadcast %cst_33 : f32 to vector<16x128xf32>
    %135 = arith.addf %134, %133 : vector<16x128xf32>
    %136 = arith.divf %134, %135 : vector<16x128xf32>
    %137 = vector.extract_strided_slice %126 {offsets = [0, 128], sizes = [16, 128], strides = [1, 1]} : vector<16x384xf32> to vector<16x128xf32>
    %138 = vector.extract_strided_slice %128 {offsets = [0, 128], sizes = [16, 128], strides = [1, 1]} : vector<16x384xf32> to vector<16x128xf32>
    %139 = arith.addf %137, %138 : vector<16x128xf32>
    %140 = arith.negf %139 : vector<16x128xf32>
    %141 = math.exp %140 : vector<16x128xf32>
    %cst_34 = arith.constant 1.000000e+00 : f32
    %142 = vector.broadcast %cst_34 : f32 to vector<16x128xf32>
    %143 = arith.addf %142, %141 : vector<16x128xf32>
    %144 = arith.divf %142, %143 : vector<16x128xf32>
    %145 = vector.extract_strided_slice %126 {offsets = [0, 256], sizes = [16, 128], strides = [1, 1]} : vector<16x384xf32> to vector<16x128xf32>
    %146 = vector.extract_strided_slice %128 {offsets = [0, 256], sizes = [16, 128], strides = [1, 1]} : vector<16x384xf32> to vector<16x128xf32>
    %147 = vector.broadcast %4 : vector<1x128xf32> to vector<16x128xf32>
    %148 = arith.addf %146, %147 : vector<16x128xf32>
    %149 = arith.mulf %136, %148 : vector<16x128xf32>
    %150 = arith.addf %145, %149 : vector<16x128xf32>
    %151 = math.tanh %150 : vector<16x128xf32>
    %cst_35 = arith.constant 1.000000e+00 : f32
    %152 = vector.broadcast %cst_35 : f32 to vector<16x128xf32>
    %153 = arith.subf %152, %144 : vector<16x128xf32>
    %154 = arith.mulf %153, %151 : vector<16x128xf32>
    %155 = arith.mulf %144, %117 : vector<16x128xf32>
    %156 = arith.addf %154, %155 : vector<16x128xf32>
    %157 = arith.truncf %156 : vector<16x128xf32> to vector<16x128xbf16>
    %158 = arith.index_cast %c3_i32 : i32 to index
    %c0_36 = arith.constant 0 : index
    %c0_37 = arith.constant 0 : index
    %159 = vector.load %arg4[%158, %c0_36, %c0_37] : memref<8x16x128xbf16, #tpu.memory_space<vmem>>, vector<1x16x128xbf16>
    %160 = vector.shape_cast %159 : vector<1x16x128xbf16> to vector<16x128xbf16>
    %161 = vector.shape_cast %157 : vector<16x128xbf16> to vector<1x16x128xbf16>
    tpu.vector_store %arg4[%158, %c0_36, %c0_37], %161 {strides = array<i32>} : memref<8x16x128xbf16, #tpu.memory_space<vmem>>, vector<1x16x128xbf16>,
    %c4_i32 = arith.constant 4 : i32
    %162 = arith.index_cast %c4_i32 : i32 to index
    %c0_38 = arith.constant 0 : index
    %c0_39 = arith.constant 0 : index
    %163 = vector.load %arg1[%162, %c0_38, %c0_39] : memref<8x16x384xbf16, #tpu.memory_space<vmem>>, vector<1x16x384xbf16>
    %164 = vector.shape_cast %163 : vector<1x16x384xbf16> to vector<16x384xbf16>
    %165 = arith.extf %164 : vector<16x384xbf16> to vector<16x384xf32>
    %166 = arith.truncf %156 : vector<16x128xf32> to vector<16x128xbf16>
    %cst_40 = arith.constant dense<0.000000e+00> : vector<16x384xf32>
    %167 = tpu.matmul %166, %3, %cst_40 {dimension_numbers = #tpu.dot_dimension_numbers<[1], [0], [0], [1], [0, 0, 1, 1], [], []>} : vector<16x128xbf16>, vector<128x384xbf16>, vector<16x384xf32> -> vector<16x384xf32>
    %168 = vector.extract_strided_slice %165 {offsets = [0, 0], sizes = [16, 128], strides = [1, 1]} : vector<16x384xf32> to vector<16x128xf32>
    %169 = vector.extract_strided_slice %167 {offsets = [0, 0], sizes = [16, 128], strides = [1, 1]} : vector<16x384xf32> to vector<16x128xf32>
    %170 = arith.addf %168, %169 : vector<16x128xf32>
    %171 = arith.negf %170 : vector<16x128xf32>
    %172 = math.exp %171 : vector<16x128xf32>
    %cst_41 = arith.constant 1.000000e+00 : f32
    %173 = vector.broadcast %cst_41 : f32 to vector<16x128xf32>
    %174 = arith.addf %173, %172 : vector<16x128xf32>
    %175 = arith.divf %173, %174 : vector<16x128xf32>
    %176 = vector.extract_strided_slice %165 {offsets = [0, 128], sizes = [16, 128], strides = [1, 1]} : vector<16x384xf32> to vector<16x128xf32>
    %177 = vector.extract_strided_slice %167 {offsets = [0, 128], sizes = [16, 128], strides = [1, 1]} : vector<16x384xf32> to vector<16x128xf32>
    %178 = arith.addf %176, %177 : vector<16x128xf32>
    %179 = arith.negf %178 : vector<16x128xf32>
    %180 = math.exp %179 : vector<16x128xf32>
    %cst_42 = arith.constant 1.000000e+00 : f32
    %181 = vector.broadcast %cst_42 : f32 to vector<16x128xf32>
    %182 = arith.addf %181, %180 : vector<16x128xf32>
    %183 = arith.divf %181, %182 : vector<16x128xf32>
    %184 = vector.extract_strided_slice %165 {offsets = [0, 256], sizes = [16, 128], strides = [1, 1]} : vector<16x384xf32> to vector<16x128xf32>
    %185 = vector.extract_strided_slice %167 {offsets = [0, 256], sizes = [16, 128], strides = [1, 1]} : vector<16x384xf32> to vector<16x128xf32>
    %186 = vector.broadcast %4 : vector<1x128xf32> to vector<16x128xf32>
    %187 = arith.addf %185, %186 : vector<16x128xf32>
    %188 = arith.mulf %175, %187 : vector<16x128xf32>
    %189 = arith.addf %184, %188 : vector<16x128xf32>
    %190 = math.tanh %189 : vector<16x128xf32>
    %cst_43 = arith.constant 1.000000e+00 : f32
    %191 = vector.broadcast %cst_43 : f32 to vector<16x128xf32>
    %192 = arith.subf %191, %183 : vector<16x128xf32>
    %193 = arith.mulf %192, %190 : vector<16x128xf32>
    %194 = arith.mulf %183, %156 : vector<16x128xf32>
    %195 = arith.addf %193, %194 : vector<16x128xf32>
    %196 = arith.truncf %195 : vector<16x128xf32> to vector<16x128xbf16>
    %197 = arith.index_cast %c4_i32 : i32 to index
    %c0_44 = arith.constant 0 : index
    %c0_45 = arith.constant 0 : index
    %198 = vector.load %arg4[%197, %c0_44, %c0_45] : memref<8x16x128xbf16, #tpu.memory_space<vmem>>, vector<1x16x128xbf16>
    %199 = vector.shape_cast %198 : vector<1x16x128xbf16> to vector<16x128xbf16>
    %200 = vector.shape_cast %196 : vector<16x128xbf16> to vector<1x16x128xbf16>
    tpu.vector_store %arg4[%197, %c0_44, %c0_45], %200 {strides = array<i32>} : memref<8x16x128xbf16, #tpu.memory_space<vmem>>, vector<1x16x128xbf16>,
    %c5_i32 = arith.constant 5 : i32
    %201 = arith.index_cast %c5_i32 : i32 to index
    %c0_46 = arith.constant 0 : index
    %c0_47 = arith.constant 0 : index
    %202 = vector.load %arg1[%201, %c0_46, %c0_47] : memref<8x16x384xbf16, #tpu.memory_space<vmem>>, vector<1x16x384xbf16>
    %203 = vector.shape_cast %202 : vector<1x16x384xbf16> to vector<16x384xbf16>
    %204 = arith.extf %203 : vector<16x384xbf16> to vector<16x384xf32>
    %205 = arith.truncf %195 : vector<16x128xf32> to vector<16x128xbf16>
    %cst_48 = arith.constant dense<0.000000e+00> : vector<16x384xf32>
    %206 = tpu.matmul %205, %3, %cst_48 {dimension_numbers = #tpu.dot_dimension_numbers<[1], [0], [0], [1], [0, 0, 1, 1], [], []>} : vector<16x128xbf16>, vector<128x384xbf16>, vector<16x384xf32> -> vector<16x384xf32>
    %207 = vector.extract_strided_slice %204 {offsets = [0, 0], sizes = [16, 128], strides = [1, 1]} : vector<16x384xf32> to vector<16x128xf32>
    %208 = vector.extract_strided_slice %206 {offsets = [0, 0], sizes = [16, 128], strides = [1, 1]} : vector<16x384xf32> to vector<16x128xf32>
    %209 = arith.addf %207, %208 : vector<16x128xf32>
    %210 = arith.negf %209 : vector<16x128xf32>
    %211 = math.exp %210 : vector<16x128xf32>
    %cst_49 = arith.constant 1.000000e+00 : f32
    %212 = vector.broadcast %cst_49 : f32 to vector<16x128xf32>
    %213 = arith.addf %212, %211 : vector<16x128xf32>
    %214 = arith.divf %212, %213 : vector<16x128xf32>
    %215 = vector.extract_strided_slice %204 {offsets = [0, 128], sizes = [16, 128], strides = [1, 1]} : vector<16x384xf32> to vector<16x128xf32>
    %216 = vector.extract_strided_slice %206 {offsets = [0, 128], sizes = [16, 128], strides = [1, 1]} : vector<16x384xf32> to vector<16x128xf32>
    %217 = arith.addf %215, %216 : vector<16x128xf32>
    %218 = arith.negf %217 : vector<16x128xf32>
    %219 = math.exp %218 : vector<16x128xf32>
    %cst_50 = arith.constant 1.000000e+00 : f32
    %220 = vector.broadcast %cst_50 : f32 to vector<16x128xf32>
    %221 = arith.addf %220, %219 : vector<16x128xf32>
    %222 = arith.divf %220, %221 : vector<16x128xf32>
    %223 = vector.extract_strided_slice %204 {offsets = [0, 256], sizes = [16, 128], strides = [1, 1]} : vector<16x384xf32> to vector<16x128xf32>
    %224 = vector.extract_strided_slice %206 {offsets = [0, 256], sizes = [16, 128], strides = [1, 1]} : vector<16x384xf32> to vector<16x128xf32>
    %225 = vector.broadcast %4 : vector<1x128xf32> to vector<16x128xf32>
    %226 = arith.addf %224, %225 : vector<16x128xf32>
    %227 = arith.mulf %214, %226 : vector<16x128xf32>
    %228 = arith.addf %223, %227 : vector<16x128xf32>
    %229 = math.tanh %228 : vector<16x128xf32>
    %cst_51 = arith.constant 1.000000e+00 : f32
    %230 = vector.broadcast %cst_51 : f32 to vector<16x128xf32>
    %231 = arith.subf %230, %222 : vector<16x128xf32>
    %232 = arith.mulf %231, %229 : vector<16x128xf32>
    %233 = arith.mulf %222, %195 : vector<16x128xf32>
    %234 = arith.addf %232, %233 : vector<16x128xf32>
    %235 = arith.truncf %234 : vector<16x128xf32> to vector<16x128xbf16>
    %236 = arith.index_cast %c5_i32 : i32 to index
    %c0_52 = arith.constant 0 : index
    %c0_53 = arith.constant 0 : index
    %237 = vector.load %arg4[%236, %c0_52, %c0_53] : memref<8x16x128xbf16, #tpu.memory_space<vmem>>, vector<1x16x128xbf16>
    %238 = vector.shape_cast %237 : vector<1x16x128xbf16> to vector<16x128xbf16>
    %239 = vector.shape_cast %235 : vector<16x128xbf16> to vector<1x16x128xbf16>
    tpu.vector_store %arg4[%236, %c0_52, %c0_53], %239 {strides = array<i32>} : memref<8x16x128xbf16, #tpu.memory_space<vmem>>, vector<1x16x128xbf16>,
    %c6_i32 = arith.constant 6 : i32
    %240 = arith.index_cast %c6_i32 : i32 to index
    %c0_54 = arith.constant 0 : index
    %c0_55 = arith.constant 0 : index
    %241 = vector.load %arg1[%240, %c0_54, %c0_55] : memref<8x16x384xbf16, #tpu.memory_space<vmem>>, vector<1x16x384xbf16>
    %242 = vector.shape_cast %241 : vector<1x16x384xbf16> to vector<16x384xbf16>
    %243 = arith.extf %242 : vector<16x384xbf16> to vector<16x384xf32>
    %244 = arith.truncf %234 : vector<16x128xf32> to vector<16x128xbf16>
    %cst_56 = arith.constant dense<0.000000e+00> : vector<16x384xf32>
    %245 = tpu.matmul %244, %3, %cst_56 {dimension_numbers = #tpu.dot_dimension_numbers<[1], [0], [0], [1], [0, 0, 1, 1], [], []>} : vector<16x128xbf16>, vector<128x384xbf16>, vector<16x384xf32> -> vector<16x384xf32>
    %246 = vector.extract_strided_slice %243 {offsets = [0, 0], sizes = [16, 128], strides = [1, 1]} : vector<16x384xf32> to vector<16x128xf32>
    %247 = vector.extract_strided_slice %245 {offsets = [0, 0], sizes = [16, 128], strides = [1, 1]} : vector<16x384xf32> to vector<16x128xf32>
    %248 = arith.addf %246, %247 : vector<16x128xf32>
    %249 = arith.negf %248 : vector<16x128xf32>
    %250 = math.exp %249 : vector<16x128xf32>
    %cst_57 = arith.constant 1.000000e+00 : f32
    %251 = vector.broadcast %cst_57 : f32 to vector<16x128xf32>
    %252 = arith.addf %251, %250 : vector<16x128xf32>
    %253 = arith.divf %251, %252 : vector<16x128xf32>
    %254 = vector.extract_strided_slice %243 {offsets = [0, 128], sizes = [16, 128], strides = [1, 1]} : vector<16x384xf32> to vector<16x128xf32>
    %255 = vector.extract_strided_slice %245 {offsets = [0, 128], sizes = [16, 128], strides = [1, 1]} : vector<16x384xf32> to vector<16x128xf32>
    %256 = arith.addf %254, %255 : vector<16x128xf32>
    %257 = arith.negf %256 : vector<16x128xf32>
    %258 = math.exp %257 : vector<16x128xf32>
    %cst_58 = arith.constant 1.000000e+00 : f32
    %259 = vector.broadcast %cst_58 : f32 to vector<16x128xf32>
    %260 = arith.addf %259, %258 : vector<16x128xf32>
    %261 = arith.divf %259, %260 : vector<16x128xf32>
    %262 = vector.extract_strided_slice %243 {offsets = [0, 256], sizes = [16, 128], strides = [1, 1]} : vector<16x384xf32> to vector<16x128xf32>
    %263 = vector.extract_strided_slice %245 {offsets = [0, 256], sizes = [16, 128], strides = [1, 1]} : vector<16x384xf32> to vector<16x128xf32>
    %264 = vector.broadcast %4 : vector<1x128xf32> to vector<16x128xf32>
    %265 = arith.addf %263, %264 : vector<16x128xf32>
    %266 = arith.mulf %253, %265 : vector<16x128xf32>
    %267 = arith.addf %262, %266 : vector<16x128xf32>
    %268 = math.tanh %267 : vector<16x128xf32>
    %cst_59 = arith.constant 1.000000e+00 : f32
    %269 = vector.broadcast %cst_59 : f32 to vector<16x128xf32>
    %270 = arith.subf %269, %261 : vector<16x128xf32>
    %271 = arith.mulf %270, %268 : vector<16x128xf32>
    %272 = arith.mulf %261, %234 : vector<16x128xf32>
    %273 = arith.addf %271, %272 : vector<16x128xf32>
    %274 = arith.truncf %273 : vector<16x128xf32> to vector<16x128xbf16>
    %275 = arith.index_cast %c6_i32 : i32 to index
    %c0_60 = arith.constant 0 : index
    %c0_61 = arith.constant 0 : index
    %276 = vector.load %arg4[%275, %c0_60, %c0_61] : memref<8x16x128xbf16, #tpu.memory_space<vmem>>, vector<1x16x128xbf16>
    %277 = vector.shape_cast %276 : vector<1x16x128xbf16> to vector<16x128xbf16>
    %278 = vector.shape_cast %274 : vector<16x128xbf16> to vector<1x16x128xbf16>
    tpu.vector_store %arg4[%275, %c0_60, %c0_61], %278 {strides = array<i32>} : memref<8x16x128xbf16, #tpu.memory_space<vmem>>, vector<1x16x128xbf16>,
    %c7_i32 = arith.constant 7 : i32
    %279 = arith.index_cast %c7_i32 : i32 to index
    %c0_62 = arith.constant 0 : index
    %c0_63 = arith.constant 0 : index
    %280 = vector.load %arg1[%279, %c0_62, %c0_63] : memref<8x16x384xbf16, #tpu.memory_space<vmem>>, vector<1x16x384xbf16>
    %281 = vector.shape_cast %280 : vector<1x16x384xbf16> to vector<16x384xbf16>
    %282 = arith.extf %281 : vector<16x384xbf16> to vector<16x384xf32>
    %283 = arith.truncf %273 : vector<16x128xf32> to vector<16x128xbf16>
    %cst_64 = arith.constant dense<0.000000e+00> : vector<16x384xf32>
    %284 = tpu.matmul %283, %3, %cst_64 {dimension_numbers = #tpu.dot_dimension_numbers<[1], [0], [0], [1], [0, 0, 1, 1], [], []>} : vector<16x128xbf16>, vector<128x384xbf16>, vector<16x384xf32> -> vector<16x384xf32>
    %285 = vector.extract_strided_slice %282 {offsets = [0, 0], sizes = [16, 128], strides = [1, 1]} : vector<16x384xf32> to vector<16x128xf32>
    %286 = vector.extract_strided_slice %284 {offsets = [0, 0], sizes = [16, 128], strides = [1, 1]} : vector<16x384xf32> to vector<16x128xf32>
    %287 = arith.addf %285, %286 : vector<16x128xf32>
    %288 = arith.negf %287 : vector<16x128xf32>
    %289 = math.exp %288 : vector<16x128xf32>
    %cst_65 = arith.constant 1.000000e+00 : f32
    %290 = vector.broadcast %cst_65 : f32 to vector<16x128xf32>
    %291 = arith.addf %290, %289 : vector<16x128xf32>
    %292 = arith.divf %290, %291 : vector<16x128xf32>
    %293 = vector.extract_strided_slice %282 {offsets = [0, 128], sizes = [16, 128], strides = [1, 1]} : vector<16x384xf32> to vector<16x128xf32>
    %294 = vector.extract_strided_slice %284 {offsets = [0, 128], sizes = [16, 128], strides = [1, 1]} : vector<16x384xf32> to vector<16x128xf32>
    %295 = arith.addf %293, %294 : vector<16x128xf32>
    %296 = arith.negf %295 : vector<16x128xf32>
    %297 = math.exp %296 : vector<16x128xf32>
    %cst_66 = arith.constant 1.000000e+00 : f32
    %298 = vector.broadcast %cst_66 : f32 to vector<16x128xf32>
    %299 = arith.addf %298, %297 : vector<16x128xf32>
    %300 = arith.divf %298, %299 : vector<16x128xf32>
    %301 = vector.extract_strided_slice %282 {offsets = [0, 256], sizes = [16, 128], strides = [1, 1]} : vector<16x384xf32> to vector<16x128xf32>
    %302 = vector.extract_strided_slice %284 {offsets = [0, 256], sizes = [16, 128], strides = [1, 1]} : vector<16x384xf32> to vector<16x128xf32>
    %303 = vector.broadcast %4 : vector<1x128xf32> to vector<16x128xf32>
    %304 = arith.addf %302, %303 : vector<16x128xf32>
    %305 = arith.mulf %292, %304 : vector<16x128xf32>
    %306 = arith.addf %301, %305 : vector<16x128xf32>
    %307 = math.tanh %306 : vector<16x128xf32>
    %cst_67 = arith.constant 1.000000e+00 : f32
    %308 = vector.broadcast %cst_67 : f32 to vector<16x128xf32>
    %309 = arith.subf %308, %300 : vector<16x128xf32>
    %310 = arith.mulf %309, %307 : vector<16x128xf32>
    %311 = arith.mulf %300, %273 : vector<16x128xf32>
    %312 = arith.addf %310, %311 : vector<16x128xf32>
    %313 = arith.truncf %312 : vector<16x128xf32> to vector<16x128xbf16>
    %314 = arith.index_cast %c7_i32 : i32 to index
    %c0_68 = arith.constant 0 : index
    %c0_69 = arith.constant 0 : index
    %315 = vector.load %arg4[%314, %c0_68, %c0_69] : memref<8x16x128xbf16, #tpu.memory_space<vmem>>, vector<1x16x128xbf16>
    %316 = vector.shape_cast %315 : vector<1x16x128xbf16> to vector<16x128xbf16>
    %317 = vector.shape_cast %313 : vector<16x128xbf16> to vector<1x16x128xbf16>
    tpu.vector_store %arg4[%314, %c0_68, %c0_69], %317 {strides = array<i32>} : memref<8x16x128xbf16, #tpu.memory_space<vmem>>, vector<1x16x128xbf16>,
    %c8_i32 = arith.constant 8 : i32
    %c0_70 = arith.constant 0 : index
    %c0_71 = arith.constant 0 : index
    %318 = vector.load %arg5[%c0_70, %c0_71] : memref<16x128xf32, #tpu.memory_space<vmem>>, vector<16x128xf32>
    tpu.vector_store %arg5[%c0_70, %c0_71], %312 {strides = array<i32>} : memref<16x128xf32, #tpu.memory_space<vmem>>, vector<16x128xf32>,
    return
  }
  func.func @transform_0(%arg0: i32) -> (i32, i32, i32) {
    %c0_i32 = arith.constant 0 : i32
    %c0_i32_0 = arith.constant 0 : i32
    %c0_i32_1 = arith.constant 0 : i32
    return %arg0, %c0_i32, %c0_i32_0 : i32, i32, i32
  }
  func.func @transform_1(%arg0: i32) -> (i32, i32) {
    %c0_i32 = arith.constant 0 : i32
    %c0_i32_0 = arith.constant 0 : i32
    %c0_i32_1 = arith.constant 0 : i32
    return %c0_i32, %c0_i32_0 : i32, i32
  }
  func.func @transform_2(%arg0: i32) -> (i32, i32) {
    %c0_i32 = arith.constant 0 : i32
    %c0_i32_0 = arith.constant 0 : i32
    %c0_i32_1 = arith.constant 0 : i32
    return %c0_i32, %c0_i32_0 : i32, i32
  }
  func.func @transform_3(%arg0: i32) -> (i32, i32, i32) {
    %c0_i32 = arith.constant 0 : i32
    %c0_i32_0 = arith.constant 0 : i32
    %c0_i32_1 = arith.constant 0 : i32
    return %arg0, %c0_i32, %c0_i32_0 : i32, i32, i32
  }
}

module attributes {stable_mosaic.version = 11 : i64} {
  func.func @_gru_last_fc_kernel(%arg0: i32, %arg1: memref<8x16x384xbf16, #tpu.memory_space<vmem>>, %arg2: memref<128x384xbf16, #tpu.memory_space<vmem>>, %arg3: memref<1x128xf32, #tpu.memory_space<vmem>>, %arg4: memref<128x128xbf16, #tpu.memory_space<vmem>>, %arg5: memref<1x128xf32, #tpu.memory_space<vmem>>, %arg6: memref<16x128xf32, #tpu.memory_space<vmem>>, %arg7: memref<16x128xf32, #tpu.memory_space<vmem>>) attributes {dimension_semantics = [#tpu.dimension_semantics<arbitrary>], iteration_bounds = array<i64: 1>, scalar_prefetch = 0 : i64, scratch_operands = 1 : i64, tpu.core_type = #tpu.core_type<tc>, window_params = [{transform_indices = @transform_0, window_bounds = array<i64: 8, 16, 384>}, {pipeline_mode = #tpu.pipeline_mode<synchronous>, transform_indices = @transform_1, window_bounds = array<i64: 128, 384>}, {pipeline_mode = #tpu.pipeline_mode<synchronous>, transform_indices = @transform_2, window_bounds = array<i64: 1, 128>}, {pipeline_mode = #tpu.pipeline_mode<synchronous>, transform_indices = @transform_3, window_bounds = array<i64: 128, 128>}, {pipeline_mode = #tpu.pipeline_mode<synchronous>, transform_indices = @transform_4, window_bounds = array<i64: 1, 128>}, {pipeline_mode = #tpu.pipeline_mode<synchronous>, transform_indices = @transform_5, window_bounds = array<i64: 16, 128>}]} {
    %c0_i32 = arith.constant 0 : i32
    %0 = arith.cmpi eq, %arg0, %c0_i32 : i32
    %1 = arith.extui %0 : i1 to i32
    %c0_i32_0 = arith.constant 0 : i32
    %2 = arith.cmpi ne, %1, %c0_i32_0 : i32
    scf.if %2 {
      %cst_58 = arith.constant 0.000000e+00 : f32
      %282 = vector.broadcast %cst_58 : f32 to vector<16x128xf32>
      %c0_59 = arith.constant 0 : index
      %c0_60 = arith.constant 0 : index
      %283 = vector.load %arg7[%c0_59, %c0_60] : memref<16x128xf32, #tpu.memory_space<vmem>>, vector<16x128xf32>
      tpu.vector_store %arg7[%c0_59, %c0_60], %282 {strides = array<i32>} : memref<16x128xf32, #tpu.memory_space<vmem>>, vector<16x128xf32>,
    } else {
    }
    %c0 = arith.constant 0 : index
    %c0_1 = arith.constant 0 : index
    %3 = vector.load %arg2[%c0, %c0_1] : memref<128x384xbf16, #tpu.memory_space<vmem>>, vector<128x384xbf16>
    %c0_2 = arith.constant 0 : index
    %c0_3 = arith.constant 0 : index
    %4 = vector.load %arg3[%c0_2, %c0_3] : memref<1x128xf32, #tpu.memory_space<vmem>>, vector<1x128xf32>
    %c0_4 = arith.constant 0 : index
    %c0_5 = arith.constant 0 : index
    %5 = vector.load %arg7[%c0_4, %c0_5] : memref<16x128xf32, #tpu.memory_space<vmem>>, vector<16x128xf32>
    %c0_i32_6 = arith.constant 0 : i32
    %6 = arith.index_cast %c0_i32_6 : i32 to index
    %c0_7 = arith.constant 0 : index
    %c0_8 = arith.constant 0 : index
    %7 = vector.load %arg1[%6, %c0_7, %c0_8] : memref<8x16x384xbf16, #tpu.memory_space<vmem>>, vector<1x16x384xbf16>
    %8 = vector.shape_cast %7 : vector<1x16x384xbf16> to vector<16x384xbf16>
    %9 = arith.extf %8 : vector<16x384xbf16> to vector<16x384xf32>
    %10 = arith.truncf %5 : vector<16x128xf32> to vector<16x128xbf16>
    %cst = arith.constant dense<0.000000e+00> : vector<16x384xf32>
    %11 = tpu.matmul %10, %3, %cst {dimension_numbers = #tpu.dot_dimension_numbers<[1], [0], [0], [1], [0, 0, 1, 1], [], []>} : vector<16x128xbf16>, vector<128x384xbf16>, vector<16x384xf32> -> vector<16x384xf32>
    %12 = vector.extract_strided_slice %9 {offsets = [0, 0], sizes = [16, 128], strides = [1, 1]} : vector<16x384xf32> to vector<16x128xf32>
    %13 = vector.extract_strided_slice %11 {offsets = [0, 0], sizes = [16, 128], strides = [1, 1]} : vector<16x384xf32> to vector<16x128xf32>
    %14 = arith.addf %12, %13 : vector<16x128xf32>
    %15 = arith.negf %14 : vector<16x128xf32>
    %16 = math.exp %15 : vector<16x128xf32>
    %cst_9 = arith.constant 1.000000e+00 : f32
    %17 = vector.broadcast %cst_9 : f32 to vector<16x128xf32>
    %18 = arith.addf %17, %16 : vector<16x128xf32>
    %19 = arith.divf %17, %18 : vector<16x128xf32>
    %20 = vector.extract_strided_slice %9 {offsets = [0, 128], sizes = [16, 128], strides = [1, 1]} : vector<16x384xf32> to vector<16x128xf32>
    %21 = vector.extract_strided_slice %11 {offsets = [0, 128], sizes = [16, 128], strides = [1, 1]} : vector<16x384xf32> to vector<16x128xf32>
    %22 = arith.addf %20, %21 : vector<16x128xf32>
    %23 = arith.negf %22 : vector<16x128xf32>
    %24 = math.exp %23 : vector<16x128xf32>
    %cst_10 = arith.constant 1.000000e+00 : f32
    %25 = vector.broadcast %cst_10 : f32 to vector<16x128xf32>
    %26 = arith.addf %25, %24 : vector<16x128xf32>
    %27 = arith.divf %25, %26 : vector<16x128xf32>
    %28 = vector.extract_strided_slice %9 {offsets = [0, 256], sizes = [16, 128], strides = [1, 1]} : vector<16x384xf32> to vector<16x128xf32>
    %29 = vector.extract_strided_slice %11 {offsets = [0, 256], sizes = [16, 128], strides = [1, 1]} : vector<16x384xf32> to vector<16x128xf32>
    %30 = vector.broadcast %4 : vector<1x128xf32> to vector<16x128xf32>
    %31 = arith.addf %29, %30 : vector<16x128xf32>
    %32 = arith.mulf %19, %31 : vector<16x128xf32>
    %33 = arith.addf %28, %32 : vector<16x128xf32>
    %34 = math.tanh %33 : vector<16x128xf32>
    %cst_11 = arith.constant 1.000000e+00 : f32
    %35 = vector.broadcast %cst_11 : f32 to vector<16x128xf32>
    %36 = arith.subf %35, %27 : vector<16x128xf32>
    %37 = arith.mulf %36, %34 : vector<16x128xf32>
    %38 = arith.mulf %27, %5 : vector<16x128xf32>
    %39 = arith.addf %37, %38 : vector<16x128xf32>
    %c1_i32 = arith.constant 1 : i32
    %40 = arith.index_cast %c1_i32 : i32 to index
    %c0_12 = arith.constant 0 : index
    %c0_13 = arith.constant 0 : index
    %41 = vector.load %arg1[%40, %c0_12, %c0_13] : memref<8x16x384xbf16, #tpu.memory_space<vmem>>, vector<1x16x384xbf16>
    %42 = vector.shape_cast %41 : vector<1x16x384xbf16> to vector<16x384xbf16>
    %43 = arith.extf %42 : vector<16x384xbf16> to vector<16x384xf32>
    %44 = arith.truncf %39 : vector<16x128xf32> to vector<16x128xbf16>
    %cst_14 = arith.constant dense<0.000000e+00> : vector<16x384xf32>
    %45 = tpu.matmul %44, %3, %cst_14 {dimension_numbers = #tpu.dot_dimension_numbers<[1], [0], [0], [1], [0, 0, 1, 1], [], []>} : vector<16x128xbf16>, vector<128x384xbf16>, vector<16x384xf32> -> vector<16x384xf32>
    %46 = vector.extract_strided_slice %43 {offsets = [0, 0], sizes = [16, 128], strides = [1, 1]} : vector<16x384xf32> to vector<16x128xf32>
    %47 = vector.extract_strided_slice %45 {offsets = [0, 0], sizes = [16, 128], strides = [1, 1]} : vector<16x384xf32> to vector<16x128xf32>
    %48 = arith.addf %46, %47 : vector<16x128xf32>
    %49 = arith.negf %48 : vector<16x128xf32>
    %50 = math.exp %49 : vector<16x128xf32>
    %cst_15 = arith.constant 1.000000e+00 : f32
    %51 = vector.broadcast %cst_15 : f32 to vector<16x128xf32>
    %52 = arith.addf %51, %50 : vector<16x128xf32>
    %53 = arith.divf %51, %52 : vector<16x128xf32>
    %54 = vector.extract_strided_slice %43 {offsets = [0, 128], sizes = [16, 128], strides = [1, 1]} : vector<16x384xf32> to vector<16x128xf32>
    %55 = vector.extract_strided_slice %45 {offsets = [0, 128], sizes = [16, 128], strides = [1, 1]} : vector<16x384xf32> to vector<16x128xf32>
    %56 = arith.addf %54, %55 : vector<16x128xf32>
    %57 = arith.negf %56 : vector<16x128xf32>
    %58 = math.exp %57 : vector<16x128xf32>
    %cst_16 = arith.constant 1.000000e+00 : f32
    %59 = vector.broadcast %cst_16 : f32 to vector<16x128xf32>
    %60 = arith.addf %59, %58 : vector<16x128xf32>
    %61 = arith.divf %59, %60 : vector<16x128xf32>
    %62 = vector.extract_strided_slice %43 {offsets = [0, 256], sizes = [16, 128], strides = [1, 1]} : vector<16x384xf32> to vector<16x128xf32>
    %63 = vector.extract_strided_slice %45 {offsets = [0, 256], sizes = [16, 128], strides = [1, 1]} : vector<16x384xf32> to vector<16x128xf32>
    %64 = vector.broadcast %4 : vector<1x128xf32> to vector<16x128xf32>
    %65 = arith.addf %63, %64 : vector<16x128xf32>
    %66 = arith.mulf %53, %65 : vector<16x128xf32>
    %67 = arith.addf %62, %66 : vector<16x128xf32>
    %68 = math.tanh %67 : vector<16x128xf32>
    %cst_17 = arith.constant 1.000000e+00 : f32
    %69 = vector.broadcast %cst_17 : f32 to vector<16x128xf32>
    %70 = arith.subf %69, %61 : vector<16x128xf32>
    %71 = arith.mulf %70, %68 : vector<16x128xf32>
    %72 = arith.mulf %61, %39 : vector<16x128xf32>
    %73 = arith.addf %71, %72 : vector<16x128xf32>
    %c2_i32 = arith.constant 2 : i32
    %74 = arith.index_cast %c2_i32 : i32 to index
    %c0_18 = arith.constant 0 : index
    %c0_19 = arith.constant 0 : index
    %75 = vector.load %arg1[%74, %c0_18, %c0_19] : memref<8x16x384xbf16, #tpu.memory_space<vmem>>, vector<1x16x384xbf16>
    %76 = vector.shape_cast %75 : vector<1x16x384xbf16> to vector<16x384xbf16>
    %77 = arith.extf %76 : vector<16x384xbf16> to vector<16x384xf32>
    %78 = arith.truncf %73 : vector<16x128xf32> to vector<16x128xbf16>
    %cst_20 = arith.constant dense<0.000000e+00> : vector<16x384xf32>
    %79 = tpu.matmul %78, %3, %cst_20 {dimension_numbers = #tpu.dot_dimension_numbers<[1], [0], [0], [1], [0, 0, 1, 1], [], []>} : vector<16x128xbf16>, vector<128x384xbf16>, vector<16x384xf32> -> vector<16x384xf32>
    %80 = vector.extract_strided_slice %77 {offsets = [0, 0], sizes = [16, 128], strides = [1, 1]} : vector<16x384xf32> to vector<16x128xf32>
    %81 = vector.extract_strided_slice %79 {offsets = [0, 0], sizes = [16, 128], strides = [1, 1]} : vector<16x384xf32> to vector<16x128xf32>
    %82 = arith.addf %80, %81 : vector<16x128xf32>
    %83 = arith.negf %82 : vector<16x128xf32>
    %84 = math.exp %83 : vector<16x128xf32>
    %cst_21 = arith.constant 1.000000e+00 : f32
    %85 = vector.broadcast %cst_21 : f32 to vector<16x128xf32>
    %86 = arith.addf %85, %84 : vector<16x128xf32>
    %87 = arith.divf %85, %86 : vector<16x128xf32>
    %88 = vector.extract_strided_slice %77 {offsets = [0, 128], sizes = [16, 128], strides = [1, 1]} : vector<16x384xf32> to vector<16x128xf32>
    %89 = vector.extract_strided_slice %79 {offsets = [0, 128], sizes = [16, 128], strides = [1, 1]} : vector<16x384xf32> to vector<16x128xf32>
    %90 = arith.addf %88, %89 : vector<16x128xf32>
    %91 = arith.negf %90 : vector<16x128xf32>
    %92 = math.exp %91 : vector<16x128xf32>
    %cst_22 = arith.constant 1.000000e+00 : f32
    %93 = vector.broadcast %cst_22 : f32 to vector<16x128xf32>
    %94 = arith.addf %93, %92 : vector<16x128xf32>
    %95 = arith.divf %93, %94 : vector<16x128xf32>
    %96 = vector.extract_strided_slice %77 {offsets = [0, 256], sizes = [16, 128], strides = [1, 1]} : vector<16x384xf32> to vector<16x128xf32>
    %97 = vector.extract_strided_slice %79 {offsets = [0, 256], sizes = [16, 128], strides = [1, 1]} : vector<16x384xf32> to vector<16x128xf32>
    %98 = vector.broadcast %4 : vector<1x128xf32> to vector<16x128xf32>
    %99 = arith.addf %97, %98 : vector<16x128xf32>
    %100 = arith.mulf %87, %99 : vector<16x128xf32>
    %101 = arith.addf %96, %100 : vector<16x128xf32>
    %102 = math.tanh %101 : vector<16x128xf32>
    %cst_23 = arith.constant 1.000000e+00 : f32
    %103 = vector.broadcast %cst_23 : f32 to vector<16x128xf32>
    %104 = arith.subf %103, %95 : vector<16x128xf32>
    %105 = arith.mulf %104, %102 : vector<16x128xf32>
    %106 = arith.mulf %95, %73 : vector<16x128xf32>
    %107 = arith.addf %105, %106 : vector<16x128xf32>
    %c3_i32 = arith.constant 3 : i32
    %108 = arith.index_cast %c3_i32 : i32 to index
    %c0_24 = arith.constant 0 : index
    %c0_25 = arith.constant 0 : index
    %109 = vector.load %arg1[%108, %c0_24, %c0_25] : memref<8x16x384xbf16, #tpu.memory_space<vmem>>, vector<1x16x384xbf16>
    %110 = vector.shape_cast %109 : vector<1x16x384xbf16> to vector<16x384xbf16>
    %111 = arith.extf %110 : vector<16x384xbf16> to vector<16x384xf32>
    %112 = arith.truncf %107 : vector<16x128xf32> to vector<16x128xbf16>
    %cst_26 = arith.constant dense<0.000000e+00> : vector<16x384xf32>
    %113 = tpu.matmul %112, %3, %cst_26 {dimension_numbers = #tpu.dot_dimension_numbers<[1], [0], [0], [1], [0, 0, 1, 1], [], []>} : vector<16x128xbf16>, vector<128x384xbf16>, vector<16x384xf32> -> vector<16x384xf32>
    %114 = vector.extract_strided_slice %111 {offsets = [0, 0], sizes = [16, 128], strides = [1, 1]} : vector<16x384xf32> to vector<16x128xf32>
    %115 = vector.extract_strided_slice %113 {offsets = [0, 0], sizes = [16, 128], strides = [1, 1]} : vector<16x384xf32> to vector<16x128xf32>
    %116 = arith.addf %114, %115 : vector<16x128xf32>
    %117 = arith.negf %116 : vector<16x128xf32>
    %118 = math.exp %117 : vector<16x128xf32>
    %cst_27 = arith.constant 1.000000e+00 : f32
    %119 = vector.broadcast %cst_27 : f32 to vector<16x128xf32>
    %120 = arith.addf %119, %118 : vector<16x128xf32>
    %121 = arith.divf %119, %120 : vector<16x128xf32>
    %122 = vector.extract_strided_slice %111 {offsets = [0, 128], sizes = [16, 128], strides = [1, 1]} : vector<16x384xf32> to vector<16x128xf32>
    %123 = vector.extract_strided_slice %113 {offsets = [0, 128], sizes = [16, 128], strides = [1, 1]} : vector<16x384xf32> to vector<16x128xf32>
    %124 = arith.addf %122, %123 : vector<16x128xf32>
    %125 = arith.negf %124 : vector<16x128xf32>
    %126 = math.exp %125 : vector<16x128xf32>
    %cst_28 = arith.constant 1.000000e+00 : f32
    %127 = vector.broadcast %cst_28 : f32 to vector<16x128xf32>
    %128 = arith.addf %127, %126 : vector<16x128xf32>
    %129 = arith.divf %127, %128 : vector<16x128xf32>
    %130 = vector.extract_strided_slice %111 {offsets = [0, 256], sizes = [16, 128], strides = [1, 1]} : vector<16x384xf32> to vector<16x128xf32>
    %131 = vector.extract_strided_slice %113 {offsets = [0, 256], sizes = [16, 128], strides = [1, 1]} : vector<16x384xf32> to vector<16x128xf32>
    %132 = vector.broadcast %4 : vector<1x128xf32> to vector<16x128xf32>
    %133 = arith.addf %131, %132 : vector<16x128xf32>
    %134 = arith.mulf %121, %133 : vector<16x128xf32>
    %135 = arith.addf %130, %134 : vector<16x128xf32>
    %136 = math.tanh %135 : vector<16x128xf32>
    %cst_29 = arith.constant 1.000000e+00 : f32
    %137 = vector.broadcast %cst_29 : f32 to vector<16x128xf32>
    %138 = arith.subf %137, %129 : vector<16x128xf32>
    %139 = arith.mulf %138, %136 : vector<16x128xf32>
    %140 = arith.mulf %129, %107 : vector<16x128xf32>
    %141 = arith.addf %139, %140 : vector<16x128xf32>
    %c4_i32 = arith.constant 4 : i32
    %142 = arith.index_cast %c4_i32 : i32 to index
    %c0_30 = arith.constant 0 : index
    %c0_31 = arith.constant 0 : index
    %143 = vector.load %arg1[%142, %c0_30, %c0_31] : memref<8x16x384xbf16, #tpu.memory_space<vmem>>, vector<1x16x384xbf16>
    %144 = vector.shape_cast %143 : vector<1x16x384xbf16> to vector<16x384xbf16>
    %145 = arith.extf %144 : vector<16x384xbf16> to vector<16x384xf32>
    %146 = arith.truncf %141 : vector<16x128xf32> to vector<16x128xbf16>
    %cst_32 = arith.constant dense<0.000000e+00> : vector<16x384xf32>
    %147 = tpu.matmul %146, %3, %cst_32 {dimension_numbers = #tpu.dot_dimension_numbers<[1], [0], [0], [1], [0, 0, 1, 1], [], []>} : vector<16x128xbf16>, vector<128x384xbf16>, vector<16x384xf32> -> vector<16x384xf32>
    %148 = vector.extract_strided_slice %145 {offsets = [0, 0], sizes = [16, 128], strides = [1, 1]} : vector<16x384xf32> to vector<16x128xf32>
    %149 = vector.extract_strided_slice %147 {offsets = [0, 0], sizes = [16, 128], strides = [1, 1]} : vector<16x384xf32> to vector<16x128xf32>
    %150 = arith.addf %148, %149 : vector<16x128xf32>
    %151 = arith.negf %150 : vector<16x128xf32>
    %152 = math.exp %151 : vector<16x128xf32>
    %cst_33 = arith.constant 1.000000e+00 : f32
    %153 = vector.broadcast %cst_33 : f32 to vector<16x128xf32>
    %154 = arith.addf %153, %152 : vector<16x128xf32>
    %155 = arith.divf %153, %154 : vector<16x128xf32>
    %156 = vector.extract_strided_slice %145 {offsets = [0, 128], sizes = [16, 128], strides = [1, 1]} : vector<16x384xf32> to vector<16x128xf32>
    %157 = vector.extract_strided_slice %147 {offsets = [0, 128], sizes = [16, 128], strides = [1, 1]} : vector<16x384xf32> to vector<16x128xf32>
    %158 = arith.addf %156, %157 : vector<16x128xf32>
    %159 = arith.negf %158 : vector<16x128xf32>
    %160 = math.exp %159 : vector<16x128xf32>
    %cst_34 = arith.constant 1.000000e+00 : f32
    %161 = vector.broadcast %cst_34 : f32 to vector<16x128xf32>
    %162 = arith.addf %161, %160 : vector<16x128xf32>
    %163 = arith.divf %161, %162 : vector<16x128xf32>
    %164 = vector.extract_strided_slice %145 {offsets = [0, 256], sizes = [16, 128], strides = [1, 1]} : vector<16x384xf32> to vector<16x128xf32>
    %165 = vector.extract_strided_slice %147 {offsets = [0, 256], sizes = [16, 128], strides = [1, 1]} : vector<16x384xf32> to vector<16x128xf32>
    %166 = vector.broadcast %4 : vector<1x128xf32> to vector<16x128xf32>
    %167 = arith.addf %165, %166 : vector<16x128xf32>
    %168 = arith.mulf %155, %167 : vector<16x128xf32>
    %169 = arith.addf %164, %168 : vector<16x128xf32>
    %170 = math.tanh %169 : vector<16x128xf32>
    %cst_35 = arith.constant 1.000000e+00 : f32
    %171 = vector.broadcast %cst_35 : f32 to vector<16x128xf32>
    %172 = arith.subf %171, %163 : vector<16x128xf32>
    %173 = arith.mulf %172, %170 : vector<16x128xf32>
    %174 = arith.mulf %163, %141 : vector<16x128xf32>
    %175 = arith.addf %173, %174 : vector<16x128xf32>
    %c5_i32 = arith.constant 5 : i32
    %176 = arith.index_cast %c5_i32 : i32 to index
    %c0_36 = arith.constant 0 : index
    %c0_37 = arith.constant 0 : index
    %177 = vector.load %arg1[%176, %c0_36, %c0_37] : memref<8x16x384xbf16, #tpu.memory_space<vmem>>, vector<1x16x384xbf16>
    %178 = vector.shape_cast %177 : vector<1x16x384xbf16> to vector<16x384xbf16>
    %179 = arith.extf %178 : vector<16x384xbf16> to vector<16x384xf32>
    %180 = arith.truncf %175 : vector<16x128xf32> to vector<16x128xbf16>
    %cst_38 = arith.constant dense<0.000000e+00> : vector<16x384xf32>
    %181 = tpu.matmul %180, %3, %cst_38 {dimension_numbers = #tpu.dot_dimension_numbers<[1], [0], [0], [1], [0, 0, 1, 1], [], []>} : vector<16x128xbf16>, vector<128x384xbf16>, vector<16x384xf32> -> vector<16x384xf32>
    %182 = vector.extract_strided_slice %179 {offsets = [0, 0], sizes = [16, 128], strides = [1, 1]} : vector<16x384xf32> to vector<16x128xf32>
    %183 = vector.extract_strided_slice %181 {offsets = [0, 0], sizes = [16, 128], strides = [1, 1]} : vector<16x384xf32> to vector<16x128xf32>
    %184 = arith.addf %182, %183 : vector<16x128xf32>
    %185 = arith.negf %184 : vector<16x128xf32>
    %186 = math.exp %185 : vector<16x128xf32>
    %cst_39 = arith.constant 1.000000e+00 : f32
    %187 = vector.broadcast %cst_39 : f32 to vector<16x128xf32>
    %188 = arith.addf %187, %186 : vector<16x128xf32>
    %189 = arith.divf %187, %188 : vector<16x128xf32>
    %190 = vector.extract_strided_slice %179 {offsets = [0, 128], sizes = [16, 128], strides = [1, 1]} : vector<16x384xf32> to vector<16x128xf32>
    %191 = vector.extract_strided_slice %181 {offsets = [0, 128], sizes = [16, 128], strides = [1, 1]} : vector<16x384xf32> to vector<16x128xf32>
    %192 = arith.addf %190, %191 : vector<16x128xf32>
    %193 = arith.negf %192 : vector<16x128xf32>
    %194 = math.exp %193 : vector<16x128xf32>
    %cst_40 = arith.constant 1.000000e+00 : f32
    %195 = vector.broadcast %cst_40 : f32 to vector<16x128xf32>
    %196 = arith.addf %195, %194 : vector<16x128xf32>
    %197 = arith.divf %195, %196 : vector<16x128xf32>
    %198 = vector.extract_strided_slice %179 {offsets = [0, 256], sizes = [16, 128], strides = [1, 1]} : vector<16x384xf32> to vector<16x128xf32>
    %199 = vector.extract_strided_slice %181 {offsets = [0, 256], sizes = [16, 128], strides = [1, 1]} : vector<16x384xf32> to vector<16x128xf32>
    %200 = vector.broadcast %4 : vector<1x128xf32> to vector<16x128xf32>
    %201 = arith.addf %199, %200 : vector<16x128xf32>
    %202 = arith.mulf %189, %201 : vector<16x128xf32>
    %203 = arith.addf %198, %202 : vector<16x128xf32>
    %204 = math.tanh %203 : vector<16x128xf32>
    %cst_41 = arith.constant 1.000000e+00 : f32
    %205 = vector.broadcast %cst_41 : f32 to vector<16x128xf32>
    %206 = arith.subf %205, %197 : vector<16x128xf32>
    %207 = arith.mulf %206, %204 : vector<16x128xf32>
    %208 = arith.mulf %197, %175 : vector<16x128xf32>
    %209 = arith.addf %207, %208 : vector<16x128xf32>
    %c6_i32 = arith.constant 6 : i32
    %210 = arith.index_cast %c6_i32 : i32 to index
    %c0_42 = arith.constant 0 : index
    %c0_43 = arith.constant 0 : index
    %211 = vector.load %arg1[%210, %c0_42, %c0_43] : memref<8x16x384xbf16, #tpu.memory_space<vmem>>, vector<1x16x384xbf16>
    %212 = vector.shape_cast %211 : vector<1x16x384xbf16> to vector<16x384xbf16>
    %213 = arith.extf %212 : vector<16x384xbf16> to vector<16x384xf32>
    %214 = arith.truncf %209 : vector<16x128xf32> to vector<16x128xbf16>
    %cst_44 = arith.constant dense<0.000000e+00> : vector<16x384xf32>
    %215 = tpu.matmul %214, %3, %cst_44 {dimension_numbers = #tpu.dot_dimension_numbers<[1], [0], [0], [1], [0, 0, 1, 1], [], []>} : vector<16x128xbf16>, vector<128x384xbf16>, vector<16x384xf32> -> vector<16x384xf32>
    %216 = vector.extract_strided_slice %213 {offsets = [0, 0], sizes = [16, 128], strides = [1, 1]} : vector<16x384xf32> to vector<16x128xf32>
    %217 = vector.extract_strided_slice %215 {offsets = [0, 0], sizes = [16, 128], strides = [1, 1]} : vector<16x384xf32> to vector<16x128xf32>
    %218 = arith.addf %216, %217 : vector<16x128xf32>
    %219 = arith.negf %218 : vector<16x128xf32>
    %220 = math.exp %219 : vector<16x128xf32>
    %cst_45 = arith.constant 1.000000e+00 : f32
    %221 = vector.broadcast %cst_45 : f32 to vector<16x128xf32>
    %222 = arith.addf %221, %220 : vector<16x128xf32>
    %223 = arith.divf %221, %222 : vector<16x128xf32>
    %224 = vector.extract_strided_slice %213 {offsets = [0, 128], sizes = [16, 128], strides = [1, 1]} : vector<16x384xf32> to vector<16x128xf32>
    %225 = vector.extract_strided_slice %215 {offsets = [0, 128], sizes = [16, 128], strides = [1, 1]} : vector<16x384xf32> to vector<16x128xf32>
    %226 = arith.addf %224, %225 : vector<16x128xf32>
    %227 = arith.negf %226 : vector<16x128xf32>
    %228 = math.exp %227 : vector<16x128xf32>
    %cst_46 = arith.constant 1.000000e+00 : f32
    %229 = vector.broadcast %cst_46 : f32 to vector<16x128xf32>
    %230 = arith.addf %229, %228 : vector<16x128xf32>
    %231 = arith.divf %229, %230 : vector<16x128xf32>
    %232 = vector.extract_strided_slice %213 {offsets = [0, 256], sizes = [16, 128], strides = [1, 1]} : vector<16x384xf32> to vector<16x128xf32>
    %233 = vector.extract_strided_slice %215 {offsets = [0, 256], sizes = [16, 128], strides = [1, 1]} : vector<16x384xf32> to vector<16x128xf32>
    %234 = vector.broadcast %4 : vector<1x128xf32> to vector<16x128xf32>
    %235 = arith.addf %233, %234 : vector<16x128xf32>
    %236 = arith.mulf %223, %235 : vector<16x128xf32>
    %237 = arith.addf %232, %236 : vector<16x128xf32>
    %238 = math.tanh %237 : vector<16x128xf32>
    %cst_47 = arith.constant 1.000000e+00 : f32
    %239 = vector.broadcast %cst_47 : f32 to vector<16x128xf32>
    %240 = arith.subf %239, %231 : vector<16x128xf32>
    %241 = arith.mulf %240, %238 : vector<16x128xf32>
    %242 = arith.mulf %231, %209 : vector<16x128xf32>
    %243 = arith.addf %241, %242 : vector<16x128xf32>
    %c7_i32 = arith.constant 7 : i32
    %244 = arith.index_cast %c7_i32 : i32 to index
    %c0_48 = arith.constant 0 : index
    %c0_49 = arith.constant 0 : index
    %245 = vector.load %arg1[%244, %c0_48, %c0_49] : memref<8x16x384xbf16, #tpu.memory_space<vmem>>, vector<1x16x384xbf16>
    %246 = vector.shape_cast %245 : vector<1x16x384xbf16> to vector<16x384xbf16>
    %247 = arith.extf %246 : vector<16x384xbf16> to vector<16x384xf32>
    %248 = arith.truncf %243 : vector<16x128xf32> to vector<16x128xbf16>
    %cst_50 = arith.constant dense<0.000000e+00> : vector<16x384xf32>
    %249 = tpu.matmul %248, %3, %cst_50 {dimension_numbers = #tpu.dot_dimension_numbers<[1], [0], [0], [1], [0, 0, 1, 1], [], []>} : vector<16x128xbf16>, vector<128x384xbf16>, vector<16x384xf32> -> vector<16x384xf32>
    %250 = vector.extract_strided_slice %247 {offsets = [0, 0], sizes = [16, 128], strides = [1, 1]} : vector<16x384xf32> to vector<16x128xf32>
    %251 = vector.extract_strided_slice %249 {offsets = [0, 0], sizes = [16, 128], strides = [1, 1]} : vector<16x384xf32> to vector<16x128xf32>
    %252 = arith.addf %250, %251 : vector<16x128xf32>
    %253 = arith.negf %252 : vector<16x128xf32>
    %254 = math.exp %253 : vector<16x128xf32>
    %cst_51 = arith.constant 1.000000e+00 : f32
    %255 = vector.broadcast %cst_51 : f32 to vector<16x128xf32>
    %256 = arith.addf %255, %254 : vector<16x128xf32>
    %257 = arith.divf %255, %256 : vector<16x128xf32>
    %258 = vector.extract_strided_slice %247 {offsets = [0, 128], sizes = [16, 128], strides = [1, 1]} : vector<16x384xf32> to vector<16x128xf32>
    %259 = vector.extract_strided_slice %249 {offsets = [0, 128], sizes = [16, 128], strides = [1, 1]} : vector<16x384xf32> to vector<16x128xf32>
    %260 = arith.addf %258, %259 : vector<16x128xf32>
    %261 = arith.negf %260 : vector<16x128xf32>
    %262 = math.exp %261 : vector<16x128xf32>
    %cst_52 = arith.constant 1.000000e+00 : f32
    %263 = vector.broadcast %cst_52 : f32 to vector<16x128xf32>
    %264 = arith.addf %263, %262 : vector<16x128xf32>
    %265 = arith.divf %263, %264 : vector<16x128xf32>
    %266 = vector.extract_strided_slice %247 {offsets = [0, 256], sizes = [16, 128], strides = [1, 1]} : vector<16x384xf32> to vector<16x128xf32>
    %267 = vector.extract_strided_slice %249 {offsets = [0, 256], sizes = [16, 128], strides = [1, 1]} : vector<16x384xf32> to vector<16x128xf32>
    %268 = vector.broadcast %4 : vector<1x128xf32> to vector<16x128xf32>
    %269 = arith.addf %267, %268 : vector<16x128xf32>
    %270 = arith.mulf %257, %269 : vector<16x128xf32>
    %271 = arith.addf %266, %270 : vector<16x128xf32>
    %272 = math.tanh %271 : vector<16x128xf32>
    %cst_53 = arith.constant 1.000000e+00 : f32
    %273 = vector.broadcast %cst_53 : f32 to vector<16x128xf32>
    %274 = arith.subf %273, %265 : vector<16x128xf32>
    %275 = arith.mulf %274, %272 : vector<16x128xf32>
    %276 = arith.mulf %265, %243 : vector<16x128xf32>
    %277 = arith.addf %275, %276 : vector<16x128xf32>
    %c8_i32 = arith.constant 8 : i32
    %c0_54 = arith.constant 0 : index
    %c0_55 = arith.constant 0 : index
    %278 = vector.load %arg7[%c0_54, %c0_55] : memref<16x128xf32, #tpu.memory_space<vmem>>, vector<16x128xf32>
    tpu.vector_store %arg7[%c0_54, %c0_55], %277 {strides = array<i32>} : memref<16x128xf32, #tpu.memory_space<vmem>>, vector<16x128xf32>,
    %c0_i32_56 = arith.constant 0 : i32
    %279 = arith.cmpi eq, %arg0, %c0_i32_56 : i32
    %280 = arith.extui %279 : i1 to i32
    %c0_i32_57 = arith.constant 0 : i32
    %281 = arith.cmpi ne, %280, %c0_i32_57 : i32
    scf.if %281 {
      %282 = arith.truncf %277 : vector<16x128xf32> to vector<16x128xbf16>
      %c0_58 = arith.constant 0 : index
      %c0_59 = arith.constant 0 : index
      %283 = vector.load %arg4[%c0_58, %c0_59] : memref<128x128xbf16, #tpu.memory_space<vmem>>, vector<128x128xbf16>
      %cst_60 = arith.constant dense<0.000000e+00> : vector<16x128xf32>
      %284 = tpu.matmul %282, %283, %cst_60 {dimension_numbers = #tpu.dot_dimension_numbers<[1], [0], [0], [1], [0, 0, 1, 1], [], []>} : vector<16x128xbf16>, vector<128x128xbf16>, vector<16x128xf32> -> vector<16x128xf32>
      %c0_61 = arith.constant 0 : index
      %c0_62 = arith.constant 0 : index
      %285 = vector.load %arg5[%c0_61, %c0_62] : memref<1x128xf32, #tpu.memory_space<vmem>>, vector<1x128xf32>
      %286 = vector.broadcast %285 : vector<1x128xf32> to vector<16x128xf32>
      %287 = arith.addf %284, %286 : vector<16x128xf32>
      %c0_63 = arith.constant 0 : index
      %c0_64 = arith.constant 0 : index
      %288 = vector.load %arg6[%c0_63, %c0_64] : memref<16x128xf32, #tpu.memory_space<vmem>>, vector<16x128xf32>
      tpu.vector_store %arg6[%c0_63, %c0_64], %287 {strides = array<i32>} : memref<16x128xf32, #tpu.memory_space<vmem>>, vector<16x128xf32>,
    } else {
    }
    return
  }
  func.func @transform_0(%arg0: i32) -> (i32, i32, i32) {
    %c0_i32 = arith.constant 0 : i32
    %c0_i32_0 = arith.constant 0 : i32
    %c0_i32_1 = arith.constant 0 : i32
    return %arg0, %c0_i32, %c0_i32_0 : i32, i32, i32
  }
  func.func @transform_1(%arg0: i32) -> (i32, i32) {
    %c0_i32 = arith.constant 0 : i32
    %c0_i32_0 = arith.constant 0 : i32
    %c0_i32_1 = arith.constant 0 : i32
    return %c0_i32, %c0_i32_0 : i32, i32
  }
  func.func @transform_2(%arg0: i32) -> (i32, i32) {
    %c0_i32 = arith.constant 0 : i32
    %c0_i32_0 = arith.constant 0 : i32
    %c0_i32_1 = arith.constant 0 : i32
    return %c0_i32, %c0_i32_0 : i32, i32
  }
  func.func @transform_3(%arg0: i32) -> (i32, i32) {
    %c0_i32 = arith.constant 0 : i32
    %c0_i32_0 = arith.constant 0 : i32
    %c0_i32_1 = arith.constant 0 : i32
    return %c0_i32, %c0_i32_0 : i32, i32
  }
  func.func @transform_4(%arg0: i32) -> (i32, i32) {
    %c0_i32 = arith.constant 0 : i32
    %c0_i32_0 = arith.constant 0 : i32
    %c0_i32_1 = arith.constant 0 : i32
    return %c0_i32, %c0_i32_0 : i32, i32
  }
  func.func @transform_5(%arg0: i32) -> (i32, i32) {
    %c0_i32 = arith.constant 0 : i32
    %c0_i32_0 = arith.constant 0 : i32
    %c0_i32_1 = arith.constant 0 : i32
    return %c0_i32, %c0_i32_0 : i32, i32
  }
}

</mosaic_0001>

<llo_original>
// kernel: rnn_forward.4
$region0: #{rnn_forward.4}
  #allocation0 [shape = 'u32[]', space=smem, size = 0x4, offset = 0x4, fixed_abs, tag = 'smem constant byte address 0x4 - core index']
  #allocation1 [shape = 'u32[72,128]{1,0:T(1,128)}', space=vmem, size = 0x9000, scoped, tag = 'internal scratch']
  %s0 = inlined_call_operand.vmem [shape: bf16[128,128], index: 0, kind: input, shape index: {}]
  %s1 = inlined_call_operand.vmem [shape: bf16[128,384], index: 1, kind: input, shape index: {}]
  %s2 = inlined_call_operand.vmem [shape: f32[1,384], index: 2, kind: input, shape index: {}]
  %s3 = inlined_call_operand.vmem [shape: bf16[128,384], index: 3, kind: output, shape index: {}]
  %s4 = sld [smem:[#allocation0]]
  $region123: #{rnn_forward.4} parent=0
    _
  %s6 = ssub.s32 1, %s4
  %s7 = scalar_select 0, %s6, %s4
  $region1: #{rnn_forward.4} parent=0
    #allocation2 [shape = 'u8[65536]{0}', space=vmem, size = 0x10000, scoped, tag = 'input window, operand 1']
    #allocation3 [shape = 'u8[65536]{0}', space=vmem, size = 0x10000, scoped, tag = 'output window, operand 0']
    loop: start=0, step=1, limit=5
    $region2: #{rnn_forward.4} parent=1 // loop_pre_header
      _
    $region3: #{rnn_forward.4} parent=1 // loop_header
      %s9 = sphi 0, %s13
      %p10 = scmp.ge.s32.totalorder %s9, 5
      %s16 = sphi 0, %s28
      %s17 = sphi 0, %s24
      %s18 = sphi 0, %s16
      %s19 = sphi 0, %s17
      %s20 = sphi 0, %s18
      %s21 = sphi 0, %s19
      %s31 = sphi 0, %s33
      %s34 = sphi 0, %s31
      %s35 = sphi 0, %s34
      %s51 = sphi 0, %s35
      %s57 = sphi 0, %s59
      %s60 = sphi 0, %s57
      %s61 = sphi 0, %s60
      %s77 = sphi 0, %s61
      %s83 = sphi 0, %s85
      %s86 = sphi 0, %s83
      %s87 = sphi 0, %s86
      %s103 = sphi 0, %s87
      %s111 = sphi 0, %s113
      %s114 = sphi 0, %s111
      %s115 = sphi 0, %s114
      %s131 = sphi 0, %s115
    $region4: #{rnn_forward.4} parent=1 // loop_header_branch
      %12 = sbr.rel (%p10) target = $region8
    $region5: #{rnn_forward.4} parent=1 // loop_body
      %s14 = ssub.s32 %s9, 1
      %s15 = ssub.s32 %s9, 2
      %s22 = sadd.s32 1, %s17
      %p23 = scmp.ge.s32.totalorder %s22, 3
      %s24 = scalar_select %p23, 0, %s22
      %s25 = sadd.s32 1, %s16
      %s26 = scalar_select %p23, %s25, %s16
      %p27 = scmp.ge.s32.totalorder %s26, 1
      %s28 = scalar_select %p27, 0, %s26
      %s29 = ssub.s32 %s16, %s28
      %p30 = scmp.eq.s32.totalorder %s29, 0
      %s32 = sadd.s32 %s31, 1
      %s33 = scalar_select %p30, %s31, %s32
      %p36 = pneg %p30
      %p37 = scmp.eq.s32.totalorder %s9, 2
      %p38 = por %p36, %p37
      %p39 = scmp.ne.s32.totalorder %s31, %s34
      %p40 = scmp.eq.s32.totalorder %s9, 0
      %p41 = por %p39, %p40
      %p42 = scmp.ne.s32.totalorder %s31, %s34
      %p43 = scmp.eq.s32.totalorder %s14, 2
      %p44 = por %p42, %p43
      %p45 = scmp.ne.s32.totalorder %s34, %s35
      %p46 = scmp.eq.s32.totalorder %s14, 0
      %p47 = por %p45, %p46
      %p48 = scmp.ne.s32.totalorder %s34, %s35
      %p49 = scmp.eq.s32.totalorder %s15, 2
      %p50 = por %p48, %p49
      %p52 = scmp.ne.s32.totalorder %s35, %s51
      %p53 = scmp.eq.s32.totalorder %s15, 0
      %p54 = por %p52, %p53
      %s55 = ssub.s32 %s17, %s24
      %p56 = scmp.eq.s32.totalorder %s55, 0
      %s58 = sadd.s32 %s57, 1
      %s59 = scalar_select %p56, %s57, %s58
      %p62 = pneg %p56
      %p63 = scmp.eq.s32.totalorder %s9, 2
      %p64 = por %p62, %p63
      %p65 = scmp.ne.s32.totalorder %s57, %s60
      %p66 = scmp.eq.s32.totalorder %s9, 0
      %p67 = por %p65, %p66
      %p68 = scmp.ne.s32.totalorder %s57, %s60
      %p69 = scmp.eq.s32.totalorder %s14, 2
      %p70 = por %p68, %p69
      %p71 = scmp.ne.s32.totalorder %s60, %s61
      %p72 = scmp.eq.s32.totalorder %s14, 0
      %p73 = por %p71, %p72
      %p74 = scmp.ne.s32.totalorder %s60, %s61
      %p75 = scmp.eq.s32.totalorder %s15, 2
      %p76 = por %p74, %p75
      %p78 = scmp.ne.s32.totalorder %s61, %s77
      %p79 = scmp.eq.s32.totalorder %s15, 0
      %p80 = por %p78, %p79
      %s81 = ssub.s32 %s17, %s24
      %p82 = scmp.eq.s32.totalorder %s81, 0
      %s84 = sadd.s32 %s83, 1
      %s85 = scalar_select %p82, %s83, %s84
      %p88 = pneg %p82
      %p89 = scmp.eq.s32.totalorder %s9, 2
      %p90 = por %p88, %p89
      %p91 = scmp.ne.s32.totalorder %s83, %s86
      %p92 = scmp.eq.s32.totalorder %s9, 0
      %p93 = por %p91, %p92
      %p94 = scmp.ne.s32.totalorder %s83, %s86
      %p95 = scmp.eq.s32.totalorder %s14, 2
      %p96 = por %p94, %p95
      %p97 = scmp.ne.s32.totalorder %s86, %s87
      %p98 = scmp.eq.s32.totalorder %s14, 0
      %p99 = por %p97, %p98
      %p100 = scmp.ne.s32.totalorder %s86, %s87
      %p101 = scmp.eq.s32.totalorder %s15, 2
      %p102 = por %p100, %p101
      %p104 = scmp.ne.s32.totalorder %s87, %s103
      %p105 = scmp.eq.s32.totalorder %s15, 0
      %p106 = por %p104, %p105
      %s107 = ssub.s32 %s16, %s28
      %s108 = ssub.s32 %s17, %s24
      %s109 = sor.u32 %s107, %s108
      %p110 = scmp.eq.s32.totalorder %s109, 0
      %s112 = sadd.s32 %s111, 1
      %s113 = scalar_select %p110, %s111, %s112
      %p116 = pneg %p110
      %p117 = scmp.eq.s32.totalorder %s9, 2
      %p118 = por %p116, %p117
      %p119 = scmp.ne.s32.totalorder %s111, %s114
      %p120 = scmp.eq.s32.totalorder %s9, 0
      %p121 = por %p119, %p120
      %p122 = scmp.ne.s32.totalorder %s111, %s114
      %p123 = scmp.eq.s32.totalorder %s14, 2
      %p124 = por %p122, %p123
      %p125 = scmp.ne.s32.totalorder %s114, %s115
      %p126 = scmp.eq.s32.totalorder %s14, 0
      %p127 = por %p125, %p126
      %p128 = scmp.ne.s32.totalorder %s114, %s115
      %p129 = scmp.eq.s32.totalorder %s15, 2
      %p130 = por %p128, %p129
      %p132 = scmp.ne.s32.totalorder %s115, %s131
      %p133 = scmp.eq.s32.totalorder %s15, 0
      %p134 = por %p132, %p133
      %p135 = scmp.le.s32.totalorder 1, %s9
      %p136 = scmp.lt.s32.totalorder %s9, 4
      %p137 = pnand %p135, %p136
      %p138 = pneg %p137
      // Predicated region
      $region9: #{rnn_forward.4} parent=5 // pred_check
        _
      $region10: #{rnn_forward.4} parent=5 // pred_check_branch
        %140 = sbr.rel (%p137) target = $region12
      $region11: #{rnn_forward.4} parent=5 // pred_region
        %s141 = ssub.s32 %s9, 1
        // Predicated region
        $region13: #{rnn_forward.4} parent=11 // pred_check
          %p142 = pneg %p47
        $region14: #{rnn_forward.4} parent=11 // pred_check_branch
          %144 = sbr.rel (%p142) target = $region16
        $region15: #{rnn_forward.4} parent=11 // pred_region
          %s145 = smul.u32 16, %s18
          %p146 = scmp.lt.s32.totalorder %s145, 15
          %s147 = scalar_select %p146, %s145, 15
          %s148 = smul.addr %s147, 4
          %s149 = scalar_lea.vmem %s0, %s148
          %s150 = smul.u32 16, %s18
        $region16: #{rnn_forward.4} parent=11 // pred_fallthru
          _
      $region12: #{rnn_forward.4} parent=5 // pred_fallthru
        _
      %p151 = scmp.lt.s32.totalorder %s9, 3
      // Predicated region
      $region17: #{rnn_forward.4} parent=5 // pred_check
        %p152 = pneg %p151
      $region18: #{rnn_forward.4} parent=5 // pred_check_branch
        %154 = sbr.rel (%p152) target = $region20
      $region19: #{rnn_forward.4} parent=5 // pred_region
        // Predicated region
        $region21: #{rnn_forward.4} parent=19 // pred_check
          %p155 = pneg %p67
        $region22: #{rnn_forward.4} parent=19 // pred_check_branch
          %157 = sbr.rel (%p155) target = $region24
        $region23: #{rnn_forward.4} parent=19 // pred_region
          %s158 = sand.u32 %s57, 1
          %s159 = sand.u32 %s57, 1
          %s160 = smul.addr %s159, 64
          %s161 = scalar_lea.vmem [#allocation2], %s160
          %s162 = smul.addr %s17, 4
          %s163 = scalar_lea.vmem %s1, %s162
          // Predicated region
          $region25: #{rnn_forward.4} parent=23 // pred_check
            _
          $region26: #{rnn_forward.4} parent=23 // pred_check_branch
            %165 = sbr.rel (0) target = $region28
          $region27: #{rnn_forward.4} parent=23 // pred_region
            // Predicated region
            $region29: #{rnn_forward.4} parent=27 // pred_check
              _
            $region30: #{rnn_forward.4} parent=27 // pred_check_branch
              %167 = sbr.rel target = $region32
            $region31: #{rnn_forward.4} parent=27 // pred_region
              // Predicated region
              $region44: #{rnn_forward.4} parent=31 // pred_check
                _
              $region45: #{rnn_forward.4} parent=31 // pred_check_branch
                %213 = sbr.rel (0) target = $region47
              $region46: #{rnn_forward.4} parent=31 // pred_region
                loop: start=0, step=1, limit=1
                $region48: #{rnn_forward.4} parent=46 // loop_pre_header
                  _
                $region49: #{rnn_forward.4} parent=46 // loop_header
                  %s215 = sphi 0, %s219
                  %p216 = scmp.ge.s32.totalorder %s215, 1
                  %s220 = sphi %s163, %s163
                  %s221 = sphi %s161, %s161
                $region50: #{rnn_forward.4} parent=46 // loop_header_branch
                  %218 = sbr.rel (%p216) target = $region54
                $region51: #{rnn_forward.4} parent=46 // loop_body
                  _
                $region52: #{rnn_forward.4} parent=46 // loop_footer
                  %s219 = sadd.s32 1, %s215
                $region53: #{rnn_forward.4} parent=46 // loop_footer_branch
                  %214 = sbr.rel target = $region49
                $region54: #{rnn_forward.4} parent=46 // loop_exit
                  _
                %s223 = ssub.s32 16, 1
                loop: start=0, step=1, limit=1
                $region55: #{rnn_forward.4} parent=46 // loop_pre_header
                  _
                $region56: #{rnn_forward.4} parent=46 // loop_header
                  %s225 = sphi 0, %s229
                  %p226 = scmp.ge.s32.totalorder %s225, 1
                  %s230 = sphi %s163, %s163
                  %s231 = sphi %s161, %s161
                $region57: #{rnn_forward.4} parent=46 // loop_header_branch
                  %228 = sbr.rel (%p226) target = $region61
                $region58: #{rnn_forward.4} parent=46 // loop_body
                  %v232 = vld [vmem:[%s230] sm:%s223]
                  %233 = vst [vmem:[%s231] sm:%s223] %v232
                  %v234 = vld [vmem:[%s230 + $0xc] sm:%s223]
                  %235 = vst [vmem:[%s231 + $0x4] sm:%s223] %v234
                  %v236 = vld [vmem:[%s230 + $0x18] sm:%s223]
                  %237 = vst [vmem:[%s231 + $0x8] sm:%s223] %v236
                  %v238 = vld [vmem:[%s230 + $0x24] sm:%s223]
                  %239 = vst [vmem:[%s231 + $0xc] sm:%s223] %v238
                  %v240 = vld [vmem:[%s230 + $0x30] sm:%s223]
                  %241 = vst [vmem:[%s231 + $0x10] sm:%s223] %v240
                  %v242 = vld [vmem:[%s230 + $0x3c] sm:%s223]
                  %243 = vst [vmem:[%s231 + $0x14] sm:%s223] %v242
                  %v244 = vld [vmem:[%s230 + $0x48] sm:%s223]
                  %245 = vst [vmem:[%s231 + $0x18] sm:%s223] %v244
                  %v246 = vld [vmem:[%s230 + $0x54] sm:%s223]
                  %247 = vst [vmem:[%s231 + $0x1c] sm:%s223] %v246
                  %v248 = vld [vmem:[%s230 + $0x60] sm:%s223]
                  %249 = vst [vmem:[%s231 + $0x20] sm:%s223] %v248
                  %v250 = vld [vmem:[%s230 + $0x6c] sm:%s223]
                  %251 = vst [vmem:[%s231 + $0x24] sm:%s223] %v250
                  %v252 = vld [vmem:[%s230 + $0x78] sm:%s223]
                  %253 = vst [vmem:[%s231 + $0x28] sm:%s223] %v252
                  %v254 = vld [vmem:[%s230 + $0x84] sm:%s223]
                  %255 = vst [vmem:[%s231 + $0x2c] sm:%s223] %v254
                  %v256 = vld [vmem:[%s230 + $0x90] sm:%s223]
                  %257 = vst [vmem:[%s231 + $0x30] sm:%s223] %v256
                  %v258 = vld [vmem:[%s230 + $0x9c] sm:%s223]
                  %259 = vst [vmem:[%s231 + $0x34] sm:%s223] %v258
                  %v260 = vld [vmem:[%s230 + $0xa8] sm:%s223]
                  %261 = vst [vmem:[%s231 + $0x38] sm:%s223] %v260
                  %v262 = vld [vmem:[%s230 + $0xb4] sm:%s223]
                  %263 = vst [vmem:[%s231 + $0x3c] sm:%s223] %v262
                $region59: #{rnn_forward.4} parent=46 // loop_footer
                  %s229 = sadd.s32 1, %s225
                $region60: #{rnn_forward.4} parent=46 // loop_footer_branch
                  %224 = sbr.rel target = $region56
                $region61: #{rnn_forward.4} parent=46 // loop_exit
                  _
              $region47: #{rnn_forward.4} parent=31 // pred_fallthru
                _
            $region32: #{rnn_forward.4} parent=27 // pred_fallthru
              _
            // Predicated region
            $region33: #{rnn_forward.4} parent=27 // pred_check
              _
            $region34: #{rnn_forward.4} parent=27 // pred_check_branch
              %169 = sbr.rel (0) target = $region36
            $region35: #{rnn_forward.4} parent=27 // pred_region
              %s171 = ssub.s32 16, 1
              loop: start=0, step=1, limit=1
              $region37: #{rnn_forward.4} parent=35 // loop_pre_header
                _
              $region38: #{rnn_forward.4} parent=35 // loop_header
                %s173 = sphi 0, %s177
                %p174 = scmp.ge.s32.totalorder %s173, 1
                %s178 = sphi %s163, %s163
                %s179 = sphi %s161, %s161
              $region39: #{rnn_forward.4} parent=35 // loop_header_branch
                %176 = sbr.rel (%p174) target = $region43
              $region40: #{rnn_forward.4} parent=35 // loop_body
                %v180 = vld [vmem:[%s178] sm:%s171]
                %181 = vst [vmem:[%s179] sm:%s171] %v180
                %v182 = vld [vmem:[%s178 + $0xc] sm:%s171]
                %183 = vst [vmem:[%s179 + $0x4] sm:%s171] %v182
                %v184 = vld [vmem:[%s178 + $0x18] sm:%s171]
                %185 = vst [vmem:[%s179 + $0x8] sm:%s171] %v184
                %v186 = vld [vmem:[%s178 + $0x24] sm:%s171]
                %187 = vst [vmem:[%s179 + $0xc] sm:%s171] %v186
                %v188 = vld [vmem:[%s178 + $0x30] sm:%s171]
                %189 = vst [vmem:[%s179 + $0x10] sm:%s171] %v188
                %v190 = vld [vmem:[%s178 + $0x3c] sm:%s171]
                %191 = vst [vmem:[%s179 + $0x14] sm:%s171] %v190
                %v192 = vld [vmem:[%s178 + $0x48] sm:%s171]
                %193 = vst [vmem:[%s179 + $0x18] sm:%s171] %v192
                %v194 = vld [vmem:[%s178 + $0x54] sm:%s171]
                %195 = vst [vmem:[%s179 + $0x1c] sm:%s171] %v194
                %v196 = vld [vmem:[%s178 + $0x60] sm:%s171]
                %197 = vst [vmem:[%s179 + $0x20] sm:%s171] %v196
                %v198 = vld [vmem:[%s178 + $0x6c] sm:%s171]
                %199 = vst [vmem:[%s179 + $0x24] sm:%s171] %v198
                %v200 = vld [vmem:[%s178 + $0x78] sm:%s171]
                %201 = vst [vmem:[%s179 + $0x28] sm:%s171] %v200
                %v202 = vld [vmem:[%s178 + $0x84] sm:%s171]
                %203 = vst [vmem:[%s179 + $0x2c] sm:%s171] %v202
                %v204 = vld [vmem:[%s178 + $0x90] sm:%s171]
                %205 = vst [vmem:[%s179 + $0x30] sm:%s171] %v204
                %v206 = vld [vmem:[%s178 + $0x9c] sm:%s171]
                %207 = vst [vmem:[%s179 + $0x34] sm:%s171] %v206
                %v208 = vld [vmem:[%s178 + $0xa8] sm:%s171]
                %209 = vst [vmem:[%s179 + $0x38] sm:%s171] %v208
                %v210 = vld [vmem:[%s178 + $0xb4] sm:%s171]
                %211 = vst [vmem:[%s179 + $0x3c] sm:%s171] %v210
              $region41: #{rnn_forward.4} parent=35 // loop_footer
                %s177 = sadd.s32 1, %s173
              $region42: #{rnn_forward.4} parent=35 // loop_footer_branch
                %172 = sbr.rel target = $region38
              $region43: #{rnn_forward.4} parent=35 // loop_exit
                _
            $region36: #{rnn_forward.4} parent=27 // pred_fallthru
              _
          $region28: #{rnn_forward.4} parent=23 // pred_fallthru
            _
          %264 = vnop
        $region24: #{rnn_forward.4} parent=19 // pred_fallthru
          _
        // Predicated region
        $region62: #{rnn_forward.4} parent=19 // pred_check
          %p265 = pneg %p93
        $region63: #{rnn_forward.4} parent=19 // pred_check_branch
          %267 = sbr.rel (%p265) target = $region65
        $region64: #{rnn_forward.4} parent=19 // pred_region
          %p268 = scmp.lt.s32.totalorder %s17, 2
          %s269 = scalar_select %p268, %s17, 2
          %s270 = scalar_lea.vmem %s2, %s269
        $region65: #{rnn_forward.4} parent=19 // pred_fallthru
          _
      $region20: #{rnn_forward.4} parent=5 // pred_fallthru
        _
      %p271 = scmp.le.s32.totalorder 1, %s9
      %p272 = scmp.lt.s32.totalorder %s9, 4
      %p273 = pnand %p271, %p272
      %p274 = pneg %p273
      // Predicated region
      $region66: #{rnn_forward.4} parent=5 // pred_check
        _
      $region67: #{rnn_forward.4} parent=5 // pred_check_branch
        %276 = sbr.rel (%p273) target = $region69
      $region68: #{rnn_forward.4} parent=5 // pred_region
        %s277 = ssub.s32 %s9, 1
        %s278 = sand.u32 %s60, 1
        %s279 = sand.u32 %s60, 1
        %s280 = smul.addr %s279, 64
        %s281 = scalar_lea.vmem [#allocation2], %s280
        // Predicated region
        $region70: #{rnn_forward.4} parent=68 // pred_check
          %p282 = pneg %p73
        $region71: #{rnn_forward.4} parent=68 // pred_check_branch
          %284 = sbr.rel (%p282) target = $region73
        $region72: #{rnn_forward.4} parent=68 // pred_region
          _
        $region73: #{rnn_forward.4} parent=68 // pred_fallthru
          _
        %s285 = smul.u32 16, %s18
        %p286 = scmp.lt.s32.totalorder %s285, 15
        %s287 = scalar_select %p286, %s285, 15
        %s288 = smul.addr %s287, 4
        %s289 = scalar_lea.vmem %s0, %s288
        %p290 = pneg %p47
        %p291 = pneg %p44
        %s292 = sand.u32 %s60, 1
        %s293 = sand.u32 %s60, 1
        %s294 = smul.addr %s293, 64
        %s295 = scalar_lea.vmem [#allocation2], %s294
        %p296 = pneg %p73
        %p297 = pneg %p70
        %p298 = scmp.lt.s32.totalorder %s19, 2
        %s299 = scalar_select %p298, %s19, 2
        %s300 = scalar_lea.vmem %s2, %s299
        %p301 = pneg %p99
        %p302 = pneg %p96
        %p303 = pneg %p127
        %p304 = pneg %p124
        %s305 = sand.u32 %s114, 1
        %s306 = sand.u32 %s114, 1
        %s307 = smul.addr %s306, 64
        %s308 = scalar_lea.vmem [#allocation3], %s307
        %s309 = smul.u32 16, %s18
        %p310 = scmp.lt.s32.totalorder %s309, 15
        %s311 = scalar_select %p310, %s309, 15
        %s312 = smul.addr %s311, 4
        %s313 = scalar_lea.vmem %s0, %s312
        %s314 = smul.u32 16, %s18
        %p315 = scmp.lt.s32.totalorder %s19, 2
        %s316 = scalar_select %p315, %s19, 2
        %s317 = scalar_lea.vmem %s2, %s316
        %s318 = smul.u32 16, %s18
        %v319 = vld [vmem:[%s313] sm:$0xf]
        %v320 = vld [vmem:[%s313 + $0x4] sm:$0xf]
        %v321 = vld [vmem:[%s313 + $0x8] sm:$0xf]
        %v322 = vld [vmem:[%s313 + $0xc] sm:$0xf]
        %v323 = vld [vmem:[%s313 + $0x10] sm:$0xf]
        %v324 = vld [vmem:[%s313 + $0x14] sm:$0xf]
        %v325 = vld [vmem:[%s313 + $0x18] sm:$0xf]
        %v326 = vld [vmem:[%s313 + $0x1c] sm:$0xf]
        %v327 = vld [vmem:[%s313 + $0x20] sm:$0xf]
        %v328 = vld [vmem:[%s313 + $0x24] sm:$0xf]
        %v329 = vld [vmem:[%s313 + $0x28] sm:$0xf]
        %v330 = vld [vmem:[%s313 + $0x2c] sm:$0xf]
        %v331 = vld [vmem:[%s313 + $0x30] sm:$0xf]
        %v332 = vld [vmem:[%s313 + $0x34] sm:$0xf]
        %v333 = vld [vmem:[%s313 + $0x38] sm:$0xf]
        %v334 = vld [vmem:[%s313 + $0x3c] sm:$0xf]
        %v335 = vld [vmem:[%s281] sm:$0xf]
        %v336 = vld [vmem:[%s281 + $0x4] sm:$0xf]
        %v337 = vld [vmem:[%s281 + $0x8] sm:$0xf]
        %v338 = vld [vmem:[%s281 + $0xc] sm:$0xf]
        %v339 = vld [vmem:[%s281 + $0x10] sm:$0xf]
        %v340 = vld [vmem:[%s281 + $0x14] sm:$0xf]
        %v341 = vld [vmem:[%s281 + $0x18] sm:$0xf]
        %v342 = vld [vmem:[%s281 + $0x1c] sm:$0xf]
        %v343 = vld [vmem:[%s281 + $0x20] sm:$0xf]
        %v344 = vld [vmem:[%s281 + $0x24] sm:$0xf]
        %v345 = vld [vmem:[%s281 + $0x28] sm:$0xf]
        %v346 = vld [vmem:[%s281 + $0x2c] sm:$0xf]
        %v347 = vld [vmem:[%s281 + $0x30] sm:$0xf]
        %v348 = vld [vmem:[%s281 + $0x34] sm:$0xf]
        %v349 = vld [vmem:[%s281 + $0x38] sm:$0xf]
        %v350 = vld [vmem:[%s281 + $0x3c] sm:$0xf]
        %v351 = vld [vmem:[%s317] sm:$0x1]
        %v353 = vperm.slane %v351, 0
        %v371 = vunpack.c.l.b16 %v319
        %v372 = vunpack.c.l.b16 %v320
        %v373 = vunpack.c.l.b16 %v321
        %v374 = vunpack.c.l.b16 %v322
        %v375 = vunpack.c.l.b16 %v323
        %v376 = vunpack.c.l.b16 %v324
        %v377 = vunpack.c.l.b16 %v325
        %v378 = vunpack.c.l.b16 %v326
        %v379 = vunpack.c.l.b16 %v327
        %v380 = vunpack.c.l.b16 %v328
        %v381 = vunpack.c.l.b16 %v329
        %v382 = vunpack.c.l.b16 %v330
        %v383 = vunpack.c.l.b16 %v331
        %v384 = vunpack.c.l.b16 %v332
        %v385 = vunpack.c.l.b16 %v333
        %v386 = vunpack.c.l.b16 %v334
        %v387 = vpack.c.b16 %v372, %v371
        %v388 = vpack.c.b16 %v374, %v373
        %v389 = vpack.c.b16 %v376, %v375
        %v390 = vpack.c.b16 %v378, %v377
        %v391 = vpack.c.b16 %v380, %v379
        %v392 = vpack.c.b16 %v382, %v381
        %v393 = vpack.c.b16 %v384, %v383
        %v394 = vpack.c.b16 %v386, %v385
        %v419 = vunpack.c.l.b16 %v335
        %v420 = vunpack.c.l.b16 %v336
        %v421 = vunpack.c.l.b16 %v337
        %v422 = vunpack.c.l.b16 %v338
        %v423 = vunpack.c.l.b16 %v339
        %v424 = vunpack.c.l.b16 %v340
        %v425 = vunpack.c.l.b16 %v341
        %v426 = vunpack.c.l.b16 %v342
        %v427 = vunpack.c.l.b16 %v343
        %v428 = vunpack.c.l.b16 %v344
        %v429 = vunpack.c.l.b16 %v345
        %v430 = vunpack.c.l.b16 %v346
        %v431 = vunpack.c.l.b16 %v347
        %v432 = vunpack.c.l.b16 %v348
        %v433 = vunpack.c.l.b16 %v349
        %v434 = vunpack.c.l.b16 %v350
        %v435 = vpack.c.b16 %v420, %v419
        %v436 = vpack.c.b16 %v422, %v421
        %v437 = vpack.c.b16 %v424, %v423
        %v438 = vpack.c.b16 %v426, %v425
        %v439 = vpack.c.b16 %v428, %v427
        %v440 = vpack.c.b16 %v430, %v429
        %v441 = vpack.c.b16 %v432, %v431
        %v442 = vpack.c.b16 %v434, %v433
        %451 = vmatpush.bf16.msra.mxu0 %v442
        %452 = vmatpush.bf16.msra.mxu0 %v441
        %453 = vmatpush.bf16.msra.mxu0 %v440
        %454 = vmatpush.bf16.msra.mxu0 %v439
        %455 = vmatpush.bf16.msra.mxu0 %v438
        %456 = vmatpush.bf16.msra.mxu0 %v437
        %457 = vmatpush.bf16.msra.mxu0 %v436
        %458 = vmatpush.bf16.msra.mxu0 %v435
        %459 = vmatmul.bf16.gmra.mxu0 %v387
        %v460 = vpop.f32.mrf.mxu0
        %v461 = vadd.f32 %v353, %v460
        %v462 = vpop.f32.mrf.mxu0
        %v463 = vadd.f32 %v353, %v462
        %464 = vmatmul.bf16.gmra.mxu0 %v388
        %v465 = vpop.f32.mrf.mxu0
        %v466 = vadd.f32 %v353, %v465
        %v467 = vpop.f32.mrf.mxu0
        %v468 = vadd.f32 %v353, %v467
        %469 = vmatmul.bf16.gmra.mxu0 %v389
        %v470 = vpop.f32.mrf.mxu0
        %v471 = vadd.f32 %v353, %v470
        %v472 = vpop.f32.mrf.mxu0
        %v473 = vadd.f32 %v353, %v472
        %474 = vmatmul.bf16.gmra.mxu0 %v390
        %v475 = vpop.f32.mrf.mxu0
        %v476 = vadd.f32 %v353, %v475
        %v477 = vpop.f32.mrf.mxu0
        %v478 = vadd.f32 %v353, %v477
        %479 = vmatmul.bf16.gmra.mxu0 %v391
        %v480 = vpop.f32.mrf.mxu0
        %v481 = vadd.f32 %v353, %v480
        %v482 = vpop.f32.mrf.mxu0
        %v483 = vadd.f32 %v353, %v482
        %484 = vmatmul.bf16.gmra.mxu0 %v392
        %v485 = vpop.f32.mrf.mxu0
        %v486 = vadd.f32 %v353, %v485
        %v487 = vpop.f32.mrf.mxu0
        %v488 = vadd.f32 %v353, %v487
        %489 = vmatmul.bf16.gmra.mxu0 %v393
        %v490 = vpop.f32.mrf.mxu0
        %v491 = vadd.f32 %v353, %v490
        %v492 = vpop.f32.mrf.mxu0
        %v493 = vadd.f32 %v353, %v492
        %494 = vmatmul.bf16.gmra.mxu0 %v394
        %v495 = vpop.f32.mrf.mxu0
        %v496 = vadd.f32 %v353, %v495
        %v497 = vpop.f32.mrf.mxu0
        %v498 = vadd.f32 %v353, %v497
        %499 = vdwg.mxu0
        %v500 = vpack.c.bf16 %v461, %v461
        %v501 = vpack.c.bf16 %v463, %v463
        %v502 = vpack.c.bf16 %v466, %v466
        %v503 = vpack.c.bf16 %v468, %v468
        %v504 = vpack.c.bf16 %v471, %v471
        %v505 = vpack.c.bf16 %v473, %v473
        %v506 = vpack.c.bf16 %v476, %v476
        %v507 = vpack.c.bf16 %v478, %v478
        %v508 = vpack.c.bf16 %v481, %v481
        %v509 = vpack.c.bf16 %v483, %v483
        %v510 = vpack.c.bf16 %v486, %v486
        %v511 = vpack.c.bf16 %v488, %v488
        %v512 = vpack.c.bf16 %v491, %v491
        %v513 = vpack.c.bf16 %v493, %v493
        %v514 = vpack.c.bf16 %v496, %v496
        %v515 = vpack.c.bf16 %v498, %v498
        %516 = vst [vmem:[%s308] sm:$0xf] %v500
        %517 = vst [vmem:[%s308 + $0x4] sm:$0xf] %v501
        %518 = vst [vmem:[%s308 + $0x8] sm:$0xf] %v502
        %519 = vst [vmem:[%s308 + $0xc] sm:$0xf] %v503
        %520 = vst [vmem:[%s308 + $0x10] sm:$0xf] %v504
        %521 = vst [vmem:[%s308 + $0x14] sm:$0xf] %v505
        %522 = vst [vmem:[%s308 + $0x18] sm:$0xf] %v506
        %523 = vst [vmem:[%s308 + $0x1c] sm:$0xf] %v507
        %524 = vst [vmem:[%s308 + $0x20] sm:$0xf] %v508
        %525 = vst [vmem:[%s308 + $0x24] sm:$0xf] %v509
        %526 = vst [vmem:[%s308 + $0x28] sm:$0xf] %v510
        %527 = vst [vmem:[%s308 + $0x2c] sm:$0xf] %v511
        %528 = vst [vmem:[%s308 + $0x30] sm:$0xf] %v512
        %529 = vst [vmem:[%s308 + $0x34] sm:$0xf] %v513
        %530 = vst [vmem:[%s308 + $0x38] sm:$0xf] %v514
        %531 = vst [vmem:[%s308 + $0x3c] sm:$0xf] %v515
        %s532 = sand.u32 %s114, 1
        %s533 = sand.u32 %s114, 1
        %s534 = smul.addr %s533, 64
        %s535 = scalar_lea.vmem [#allocation3], %s534
        // Predicated region
        $region74: #{rnn_forward.4} parent=68 // pred_check
          %p536 = pneg %p124
        $region75: #{rnn_forward.4} parent=68 // pred_check_branch
          %538 = sbr.rel (%p536) target = $region77
        $region76: #{rnn_forward.4} parent=68 // pred_region
          %s539 = smul.u32 16, %s18
          %s540 = smul.addr %s539, 3
          %s541 = sadd.s32 %s19, %s540
          %s542 = smul.addr %s541, 4
          %s543 = scalar_lea.vmem %s3, %s542
          // Predicated region
          $region78: #{rnn_forward.4} parent=76 // pred_check
            _
          $region79: #{rnn_forward.4} parent=76 // pred_check_branch
            %545 = sbr.rel (0) target = $region81
          $region80: #{rnn_forward.4} parent=76 // pred_region
            // Predicated region
            $region82: #{rnn_forward.4} parent=80 // pred_check
              _
            $region83: #{rnn_forward.4} parent=80 // pred_check_branch
              %547 = sbr.rel target = $region85
            $region84: #{rnn_forward.4} parent=80 // pred_region
              // Predicated region
              $region97: #{rnn_forward.4} parent=84 // pred_check
                _
              $region98: #{rnn_forward.4} parent=84 // pred_check_branch
                %593 = sbr.rel (0) target = $region100
              $region99: #{rnn_forward.4} parent=84 // pred_region
                loop: start=0, step=1, limit=1
                $region101: #{rnn_forward.4} parent=99 // loop_pre_header
                  _
                $region102: #{rnn_forward.4} parent=99 // loop_header
                  %s595 = sphi 0, %s599
                  %p596 = scmp.ge.s32.totalorder %s595, 1
                  %s600 = sphi %s535, %s535
                  %s601 = sphi %s543, %s543
                $region103: #{rnn_forward.4} parent=99 // loop_header_branch
                  %598 = sbr.rel (%p596) target = $region107
                $region104: #{rnn_forward.4} parent=99 // loop_body
                  _
                $region105: #{rnn_forward.4} parent=99 // loop_footer
                  %s599 = sadd.s32 1, %s595
                $region106: #{rnn_forward.4} parent=99 // loop_footer_branch
                  %594 = sbr.rel target = $region102
                $region107: #{rnn_forward.4} parent=99 // loop_exit
                  _
                %s603 = ssub.s32 16, 1
                loop: start=0, step=1, limit=1
                $region108: #{rnn_forward.4} parent=99 // loop_pre_header
                  _
                $region109: #{rnn_forward.4} parent=99 // loop_header
                  %s605 = sphi 0, %s609
                  %p606 = scmp.ge.s32.totalorder %s605, 1
                  %s610 = sphi %s535, %s535
                  %s611 = sphi %s543, %s543
                $region110: #{rnn_forward.4} parent=99 // loop_header_branch
                  %608 = sbr.rel (%p606) target = $region114
                $region111: #{rnn_forward.4} parent=99 // loop_body
                  %v612 = vld [vmem:[%s610] sm:%s603]
                  %613 = vst [vmem:[%s611] sm:%s603] %v612
                  %v614 = vld [vmem:[%s610 + $0x4] sm:%s603]
                  %615 = vst [vmem:[%s611 + $0xc] sm:%s603] %v614
                  %v616 = vld [vmem:[%s610 + $0x8] sm:%s603]
                  %617 = vst [vmem:[%s611 + $0x18] sm:%s603] %v616
                  %v618 = vld [vmem:[%s610 + $0xc] sm:%s603]
                  %619 = vst [vmem:[%s611 + $0x24] sm:%s603] %v618
                  %v620 = vld [vmem:[%s610 + $0x10] sm:%s603]
                  %621 = vst [vmem:[%s611 + $0x30] sm:%s603] %v620
                  %v622 = vld [vmem:[%s610 + $0x14] sm:%s603]
                  %623 = vst [vmem:[%s611 + $0x3c] sm:%s603] %v622
                  %v624 = vld [vmem:[%s610 + $0x18] sm:%s603]
                  %625 = vst [vmem:[%s611 + $0x48] sm:%s603] %v624
                  %v626 = vld [vmem:[%s610 + $0x1c] sm:%s603]
                  %627 = vst [vmem:[%s611 + $0x54] sm:%s603] %v626
                  %v628 = vld [vmem:[%s610 + $0x20] sm:%s603]
                  %629 = vst [vmem:[%s611 + $0x60] sm:%s603] %v628
                  %v630 = vld [vmem:[%s610 + $0x24] sm:%s603]
                  %631 = vst [vmem:[%s611 + $0x6c] sm:%s603] %v630
                  %v632 = vld [vmem:[%s610 + $0x28] sm:%s603]
                  %633 = vst [vmem:[%s611 + $0x78] sm:%s603] %v632
                  %v634 = vld [vmem:[%s610 + $0x2c] sm:%s603]
                  %635 = vst [vmem:[%s611 + $0x84] sm:%s603] %v634
                  %v636 = vld [vmem:[%s610 + $0x30] sm:%s603]
                  %637 = vst [vmem:[%s611 + $0x90] sm:%s603] %v636
                  %v638 = vld [vmem:[%s610 + $0x34] sm:%s603]
                  %639 = vst [vmem:[%s611 + $0x9c] sm:%s603] %v638
                  %v640 = vld [vmem:[%s610 + $0x38] sm:%s603]
                  %641 = vst [vmem:[%s611 + $0xa8] sm:%s603] %v640
                  %v642 = vld [vmem:[%s610 + $0x3c] sm:%s603]
                  %643 = vst [vmem:[%s611 + $0xb4] sm:%s603] %v642
                $region112: #{rnn_forward.4} parent=99 // loop_footer
                  %s609 = sadd.s32 1, %s605
                $region113: #{rnn_forward.4} parent=99 // loop_footer_branch
                  %604 = sbr.rel target = $region109
                $region114: #{rnn_forward.4} parent=99 // loop_exit
                  _
              $region100: #{rnn_forward.4} parent=84 // pred_fallthru
                _
            $region85: #{rnn_forward.4} parent=80 // pred_fallthru
              _
            // Predicated region
            $region86: #{rnn_forward.4} parent=80 // pred_check
              _
            $region87: #{rnn_forward.4} parent=80 // pred_check_branch
              %549 = sbr.rel (0) target = $region89
            $region88: #{rnn_forward.4} parent=80 // pred_region
              %s551 = ssub.s32 16, 1
              loop: start=0, step=1, limit=1
              $region90: #{rnn_forward.4} parent=88 // loop_pre_header
                _
              $region91: #{rnn_forward.4} parent=88 // loop_header
                %s553 = sphi 0, %s557
                %p554 = scmp.ge.s32.totalorder %s553, 1
                %s558 = sphi %s535, %s535
                %s559 = sphi %s543, %s543
              $region92: #{rnn_forward.4} parent=88 // loop_header_branch
                %556 = sbr.rel (%p554) target = $region96
              $region93: #{rnn_forward.4} parent=88 // loop_body
                %v560 = vld [vmem:[%s558] sm:%s551]
                %561 = vst [vmem:[%s559] sm:%s551] %v560
                %v562 = vld [vmem:[%s558 + $0x4] sm:%s551]
                %563 = vst [vmem:[%s559 + $0xc] sm:%s551] %v562
                %v564 = vld [vmem:[%s558 + $0x8] sm:%s551]
                %565 = vst [vmem:[%s559 + $0x18] sm:%s551] %v564
                %v566 = vld [vmem:[%s558 + $0xc] sm:%s551]
                %567 = vst [vmem:[%s559 + $0x24] sm:%s551] %v566
                %v568 = vld [vmem:[%s558 + $0x10] sm:%s551]
                %569 = vst [vmem:[%s559 + $0x30] sm:%s551] %v568
                %v570 = vld [vmem:[%s558 + $0x14] sm:%s551]
                %571 = vst [vmem:[%s559 + $0x3c] sm:%s551] %v570
                %v572 = vld [vmem:[%s558 + $0x18] sm:%s551]
                %573 = vst [vmem:[%s559 + $0x48] sm:%s551] %v572
                %v574 = vld [vmem:[%s558 + $0x1c] sm:%s551]
                %575 = vst [vmem:[%s559 + $0x54] sm:%s551] %v574
                %v576 = vld [vmem:[%s558 + $0x20] sm:%s551]
                %577 = vst [vmem:[%s559 + $0x60] sm:%s551] %v576
                %v578 = vld [vmem:[%s558 + $0x24] sm:%s551]
                %579 = vst [vmem:[%s559 + $0x6c] sm:%s551] %v578
                %v580 = vld [vmem:[%s558 + $0x28] sm:%s551]
                %581 = vst [vmem:[%s559 + $0x78] sm:%s551] %v580
                %v582 = vld [vmem:[%s558 + $0x2c] sm:%s551]
                %583 = vst [vmem:[%s559 + $0x84] sm:%s551] %v582
                %v584 = vld [vmem:[%s558 + $0x30] sm:%s551]
                %585 = vst [vmem:[%s559 + $0x90] sm:%s551] %v584
                %v586 = vld [vmem:[%s558 + $0x34] sm:%s551]
                %587 = vst [vmem:[%s559 + $0x9c] sm:%s551] %v586
                %v588 = vld [vmem:[%s558 + $0x38] sm:%s551]
                %589 = vst [vmem:[%s559 + $0xa8] sm:%s551] %v588
                %v590 = vld [vmem:[%s558 + $0x3c] sm:%s551]
                %591 = vst [vmem:[%s559 + $0xb4] sm:%s551] %v590
              $region94: #{rnn_forward.4} parent=88 // loop_footer
                %s557 = sadd.s32 1, %s553
              $region95: #{rnn_forward.4} parent=88 // loop_footer_branch
                %552 = sbr.rel target = $region91
              $region96: #{rnn_forward.4} parent=88 // loop_exit
                _
            $region89: #{rnn_forward.4} parent=80 // pred_fallthru
              _
          $region81: #{rnn_forward.4} parent=76 // pred_fallthru
            _
          %644 = vnop
        $region77: #{rnn_forward.4} parent=68 // pred_fallthru
          _
      $region69: #{rnn_forward.4} parent=5 // pred_fallthru
        _
      %p645 = scmp.le.s32.totalorder 2, %s9
      // Predicated region
      $region115: #{rnn_forward.4} parent=5 // pred_check
        %p646 = pneg %p645
      $region116: #{rnn_forward.4} parent=5 // pred_check_branch
        %648 = sbr.rel (%p646) target = $region118
      $region117: #{rnn_forward.4} parent=5 // pred_region
        %s649 = ssub.s32 %s9, 2
        // Predicated region
        $region119: #{rnn_forward.4} parent=117 // pred_check
          %p650 = pneg %p130
        $region120: #{rnn_forward.4} parent=117 // pred_check_branch
          %652 = sbr.rel (%p650) target = $region122
        $region121: #{rnn_forward.4} parent=117 // pred_region
          %s653 = sand.u32 %s115, 1
          %s654 = sand.u32 %s115, 1
          %s655 = smul.addr %s654, 64
          %s656 = scalar_lea.vmem [#allocation3], %s655
        $region122: #{rnn_forward.4} parent=117 // pred_fallthru
          _
      $region118: #{rnn_forward.4} parent=5 // pred_fallthru
        _
    $region6: #{rnn_forward.4} parent=1 // loop_footer
      %s13 = sadd.s32 1, %s9
    $region7: #{rnn_forward.4} parent=1 // loop_footer_branch
      %8 = sbr.rel target = $region3
    $region8: #{rnn_forward.4} parent=1 // loop_exit
      _

// kernel: rnn_forward.5
$region0: #{rnn_forward.5}
  #allocation0 [shape = 'u32[]', space=smem, size = 0x4, offset = 0x4, fixed_abs, tag = 'smem constant byte address 0x4 - core index']
  #allocation1 [shape = 'u32[72,128]{1,0:T(1,128)}', space=vmem, size = 0x9000, scoped, tag = 'internal scratch']
  #allocation2 [shape = 'f32[16,128]{1,0:T(8,128)}', space=vmem, size = 0x2000, scoped, tag = 'scratch operand']
  %s0 = inlined_call_operand.vmem [shape: bf16[8,16,384], index: 0, kind: input, shape index: {}]
  %s1 = inlined_call_operand.vmem [shape: bf16[128,384], index: 1, kind: input, shape index: {}]
  %s2 = inlined_call_operand.vmem [shape: f32[1,128], index: 2, kind: input, shape index: {}]
  %s3 = inlined_call_operand.vmem [shape: bf16[8,16,128], index: 3, kind: output, shape index: {}]
  %s4 = sld [smem:[#allocation0]]
  $region26: #{rnn_forward.5} parent=0
    _
  %s6 = ssub.s32 1, %s4
  %s7 = scalar_select 0, %s6, %s4
  // Predicated region
  $region2: #{rnn_forward.5} parent=0 // pred_check
    _
  $region3: #{rnn_forward.5} parent=0 // pred_check_branch
    %9 = sbr.rel (0) target = $region5
  $region4: #{rnn_forward.5} parent=0 // pred_region
    _
  $region5: #{rnn_forward.5} parent=0 // pred_fallthru
    _
  // Predicated region
  $region6: #{rnn_forward.5} parent=0 // pred_check
    _
  $region7: #{rnn_forward.5} parent=0 // pred_check_branch
    %11 = sbr.rel (0) target = $region9
  $region8: #{rnn_forward.5} parent=0 // pred_region
    _
  $region9: #{rnn_forward.5} parent=0 // pred_fallthru
    _
  // Predicated region
  $region10: #{rnn_forward.5} parent=0 // pred_check
    _
  $region11: #{rnn_forward.5} parent=0 // pred_check_branch
    %13 = sbr.rel (0) target = $region13
  $region12: #{rnn_forward.5} parent=0 // pred_region
    _
  $region13: #{rnn_forward.5} parent=0 // pred_fallthru
    _
  %p14 = scmp.eq.s32.totalorder 0, 0
  // Predicated region
  $region14: #{rnn_forward.5} parent=0 // pred_check
    %p15 = pneg %p14
  $region15: #{rnn_forward.5} parent=0 // pred_check_branch
    %17 = sbr.rel (%p15) target = $region17
  $region16: #{rnn_forward.5} parent=0 // pred_region
    %18 = vst [vmem:[#allocation2] sm:$0xff] 0.0
    %19 = vst [vmem:[#allocation2 + $0x8] sm:$0xff] 0.0
  $region17: #{rnn_forward.5} parent=0 // pred_fallthru
    _
  %v20 = vld [vmem:[%s1] sm:$0xff]
  %v21 = vld [vmem:[%s1 + $0x8] sm:$0xf]
  %v22 = vld [vmem:[%s1 + $0xc] sm:$0xff]
  %v23 = vld [vmem:[%s1 + $0x14] sm:$0xf]
  %v24 = vld [vmem:[%s1 + $0x18] sm:$0xff]
  %v25 = vld [vmem:[%s1 + $0x20] sm:$0xf]
  %v26 = vld [vmem:[%s1 + $0x24] sm:$0xff]
  %v27 = vld [vmem:[%s1 + $0x2c] sm:$0xf]
  %v28 = vld [vmem:[%s1 + $0x30] sm:$0xff]
  %v29 = vld [vmem:[%s1 + $0x38] sm:$0xf]
  %v30 = vld [vmem:[%s1 + $0x3c] sm:$0xff]
  %v31 = vld [vmem:[%s1 + $0x44] sm:$0xf]
  %v32 = vld [vmem:[%s1 + $0x48] sm:$0xff]
  %v33 = vld [vmem:[%s1 + $0x50] sm:$0xf]
  %v34 = vld [vmem:[%s1 + $0x54] sm:$0xff]
  %v35 = vld [vmem:[%s1 + $0x5c] sm:$0xf]
  %v36 = vld [vmem:[%s1 + $0x60] sm:$0xff]
  %v37 = vld [vmem:[%s1 + $0x68] sm:$0xf]
  %v38 = vld [vmem:[%s1 + $0x6c] sm:$0xff]
  %v39 = vld [vmem:[%s1 + $0x74] sm:$0xf]
  %v40 = vld [vmem:[%s1 + $0x78] sm:$0xff]
  %v41 = vld [vmem:[%s1 + $0x80] sm:$0xf]
  %v42 = vld [vmem:[%s1 + $0x84] sm:$0xff]
  %v43 = vld [vmem:[%s1 + $0x8c] sm:$0xf]
  %v44 = vld [vmem:[%s1 + $0x90] sm:$0xff]
  %v45 = vld [vmem:[%s1 + $0x98] sm:$0xf]
  %v46 = vld [vmem:[%s1 + $0x9c] sm:$0xff]
  %v47 = vld [vmem:[%s1 + $0xa4] sm:$0xf]
  %v48 = vld [vmem:[%s1 + $0xa8] sm:$0xff]
  %v49 = vld [vmem:[%s1 + $0xb0] sm:$0xf]
  %v50 = vld [vmem:[%s1 + $0xb4] sm:$0xff]
  %v51 = vld [vmem:[%s1 + $0xbc] sm:$0xf]
  %v52 = vld [vmem:[%s2] sm:$0x1]
  %v53 = vld [vmem:[#allocation2] sm:$0xff]
  %v54 = vld [vmem:[#allocation2 + $0x8] sm:$0xff]
  %v55 = vld [vmem:[%s0] sm:$0xff]
  %v56 = vld [vmem:[%s0 + $0x8] sm:$0xf]
  %v57 = vld [vmem:[%s0 + $0xc] sm:$0xff]
  %v58 = vld [vmem:[%s0 + $0x14] sm:$0xf]
  %v59 = vunpack.c.l.bf16 %v55
  %v60 = vunpack.c.h.bf16 %v55
  %v61 = vunpack.c.l.bf16 %v56
  %v62 = vunpack.c.l.bf16 %v57
  %v63 = vunpack.c.h.bf16 %v57
  %v64 = vunpack.c.l.bf16 %v58
  %v65 = vpack.c.bf16 %v54, %v53
  %v98 = vunpack.c.l.b16 %v20
  %v99 = vunpack.c.h.b16 %v20
  %v100 = vunpack.c.l.b16 %v21
  %v101 = vunpack.c.l.b16 %v22
  %v102 = vunpack.c.h.b16 %v22
  %v103 = vunpack.c.l.b16 %v23
  %v104 = vunpack.c.l.b16 %v24
  %v105 = vunpack.c.h.b16 %v24
  %v106 = vunpack.c.l.b16 %v25
  %v107 = vunpack.c.l.b16 %v26
  %v108 = vunpack.c.h.b16 %v26
  %v109 = vunpack.c.l.b16 %v27
  %v110 = vunpack.c.l.b16 %v28
  %v111 = vunpack.c.h.b16 %v28
  %v112 = vunpack.c.l.b16 %v29
  %v113 = vunpack.c.l.b16 %v30
  %v114 = vunpack.c.h.b16 %v30
  %v115 = vunpack.c.l.b16 %v31
  %v116 = vunpack.c.l.b16 %v32
  %v117 = vunpack.c.h.b16 %v32
  %v118 = vunpack.c.l.b16 %v33
  %v119 = vunpack.c.l.b16 %v34
  %v120 = vunpack.c.h.b16 %v34
  %v121 = vunpack.c.l.b16 %v35
  %v122 = vunpack.c.l.b16 %v36
  %v123 = vunpack.c.h.b16 %v36
  %v124 = vunpack.c.l.b16 %v37
  %v125 = vunpack.c.l.b16 %v38
  %v126 = vunpack.c.h.b16 %v38
  %v127 = vunpack.c.l.b16 %v39
  %v128 = vunpack.c.l.b16 %v40
  %v129 = vunpack.c.h.b16 %v40
  %v130 = vunpack.c.l.b16 %v41
  %v131 = vunpack.c.l.b16 %v42
  %v132 = vunpack.c.h.b16 %v42
  %v133 = vunpack.c.l.b16 %v43
  %v134 = vunpack.c.l.b16 %v44
  %v135 = vunpack.c.h.b16 %v44
  %v136 = vunpack.c.l.b16 %v45
  %v137 = vunpack.c.l.b16 %v46
  %v138 = vunpack.c.h.b16 %v46
  %v139 = vunpack.c.l.b16 %v47
  %v140 = vunpack.c.l.b16 %v48
  %v141 = vunpack.c.h.b16 %v48
  %v142 = vunpack.c.l.b16 %v49
  %v143 = vunpack.c.l.b16 %v50
  %v144 = vunpack.c.h.b16 %v50
  %v145 = vunpack.c.l.b16 %v51
  %v146 = vpack.c.b16 %v101, %v98
  %v147 = vpack.c.b16 %v102, %v99
  %v148 = vpack.c.b16 %v103, %v100
  %v149 = vpack.c.b16 %v107, %v104
  %v150 = vpack.c.b16 %v108, %v105
  %v151 = vpack.c.b16 %v109, %v106
  %v152 = vpack.c.b16 %v113, %v110
  %v153 = vpack.c.b16 %v114, %v111
  %v154 = vpack.c.b16 %v115, %v112
  %v155 = vpack.c.b16 %v119, %v116
  %v156 = vpack.c.b16 %v120, %v117
  %v157 = vpack.c.b16 %v121, %v118
  %v158 = vpack.c.b16 %v125, %v122
  %v159 = vpack.c.b16 %v126, %v123
  %v160 = vpack.c.b16 %v127, %v124
  %v161 = vpack.c.b16 %v131, %v128
  %v162 = vpack.c.b16 %v132, %v129
  %v163 = vpack.c.b16 %v133, %v130
  %v164 = vpack.c.b16 %v137, %v134
  %v165 = vpack.c.b16 %v138, %v135
  %v166 = vpack.c.b16 %v139, %v136
  %v167 = vpack.c.b16 %v143, %v140
  %v168 = vpack.c.b16 %v144, %v141
  %v169 = vpack.c.b16 %v145, %v142
  %194 = vmatpush.bf16.msra.mxu0 %v167
  %195 = vmatpush.bf16.msra.mxu0 %v164
  %196 = vmatpush.bf16.msra.mxu0 %v161
  %197 = vmatpush.bf16.msra.mxu0 %v158
  %198 = vmatpush.bf16.msra.mxu0 %v155
  %199 = vmatpush.bf16.msra.mxu0 %v152
  %200 = vmatpush.bf16.msra.mxu0 %v149
  %201 = vmatpush.bf16.msra.mxu0 %v146
  %202 = vmatmul.bf16.gmra.mxu0 %v65
  %v203 = vpop.f32.mrf.mxu0
  %v204 = vadd.f32 0.0, %v203
  %v205 = vpop.f32.mrf.mxu0
  %v206 = vadd.f32 0.0, %v205
  %207 = vdwg.mxu0
  %208 = vmatpush.bf16.msra.mxu0 %v168
  %209 = vmatpush.bf16.msra.mxu0 %v165
  %210 = vmatpush.bf16.msra.mxu0 %v162
  %211 = vmatpush.bf16.msra.mxu0 %v159
  %212 = vmatpush.bf16.msra.mxu0 %v156
  %213 = vmatpush.bf16.msra.mxu0 %v153
  %214 = vmatpush.bf16.msra.mxu0 %v150
  %215 = vmatpush.bf16.msra.mxu0 %v147
  %216 = vmatmul.bf16.gmra.mxu0 %v65
  %v217 = vpop.f32.mrf.mxu0
  %v218 = vadd.f32 0.0, %v217
  %v219 = vpop.f32.mrf.mxu0
  %v220 = vadd.f32 0.0, %v219
  %221 = vdwg.mxu0
  %222 = vmatpush.bf16.msra.mxu0 %v169
  %223 = vmatpush.bf16.msra.mxu0 %v166
  %224 = vmatpush.bf16.msra.mxu0 %v163
  %225 = vmatpush.bf16.msra.mxu0 %v160
  %226 = vmatpush.bf16.msra.mxu0 %v157
  %227 = vmatpush.bf16.msra.mxu0 %v154
  %228 = vmatpush.bf16.msra.mxu0 %v151
  %229 = vmatpush.bf16.msra.mxu0 %v148
  %230 = vmatmul.bf16.gmra.mxu0 %v65
  %v231 = vpop.f32.mrf.mxu0
  %v232 = vadd.f32 0.0, %v231
  %v233 = vpop.f32.mrf.mxu0
  %v234 = vadd.f32 0.0, %v233
  %235 = vdwg.mxu0
  %v236 = vadd.f32 %v59, %v204
  %v237 = vadd.f32 %v62, %v206
  %v238 = vxor.u32 %v236, 2147483648
  %v239 = vxor.u32 %v237, 2147483648
  %v240 = vmul.f32 %v238, 1.442695
  %v241 = vpow.pop %v240
  %v242 = vmul.f32 %v239, 1.442695
  %v243 = vpow.pop %v242
  %v244 = vadd.f32 %v241, 1.0
  %v245 = vadd.f32 %v243, 1.0
  %v246 = vrcp.pop %v244
  %v247 = vmul.f32 %v244, %v246
  %v248 = vsub.f32 1.0, %v247
  %v249 = vmul.f32 %v246, %v248
  %v250 = vadd.f32 %v246, %v249
  %vm251 = vweird.f32 %v244
  %vm252 = vweird.f32 %v246
  %vm253 = vmor %vm251, %vm252
  %v254 = vsel %vm253, %v246, %v250
  %v255 = vand.u32 2147483647, %v244
  %vm256 = vcmp.eq.f32.partialorder %v255, 8.507059e+37
  %v257 = vand.u32 %v244, 2147483648
  %v258 = vor.u32 1.1754944e-38, %v257
  %v259 = vsel %vm256, %v258, %v254
  %v260 = vmul.f32 1.0, %v259
  %v261 = vrcp.pop %v245
  %v262 = vmul.f32 %v245, %v261
  %v263 = vsub.f32 1.0, %v262
  %v264 = vmul.f32 %v261, %v263
  %v265 = vadd.f32 %v261, %v264
  %vm266 = vweird.f32 %v245
  %vm267 = vweird.f32 %v261
  %vm268 = vmor %vm266, %vm267
  %v269 = vsel %vm268, %v261, %v265
  %v270 = vand.u32 2147483647, %v245
  %vm271 = vcmp.eq.f32.partialorder %v270, 8.507059e+37
  %v272 = vand.u32 %v245, 2147483648
  %v273 = vor.u32 1.1754944e-38, %v272
  %v274 = vsel %vm271, %v273, %v269
  %v275 = vmul.f32 1.0, %v274
  %v276 = vadd.f32 %v60, %v218
  %v277 = vadd.f32 %v63, %v220
  %v278 = vxor.u32 %v276, 2147483648
  %v279 = vxor.u32 %v277, 2147483648
  %v280 = vmul.f32 %v278, 1.442695
  %v281 = vpow.pop %v280
  %v282 = vmul.f32 %v279, 1.442695
  %v283 = vpow.pop %v282
  %v284 = vadd.f32 %v281, 1.0
  %v285 = vadd.f32 %v283, 1.0
  %v286 = vrcp.pop %v284
  %v287 = vmul.f32 %v284, %v286
  %v288 = vsub.f32 1.0, %v287
  %v289 = vmul.f32 %v286, %v288
  %v290 = vadd.f32 %v286, %v289
  %vm291 = vweird.f32 %v284
  %vm292 = vweird.f32 %v286
  %vm293 = vmor %vm291, %vm292
  %v294 = vsel %vm293, %v286, %v290
  %v295 = vand.u32 2147483647, %v284
  %vm296 = vcmp.eq.f32.partialorder %v295, 8.507059e+37
  %v297 = vand.u32 %v284, 2147483648
  %v298 = vor.u32 1.1754944e-38, %v297
  %v299 = vsel %vm296, %v298, %v294
  %v300 = vmul.f32 1.0, %v299
  %v301 = vrcp.pop %v285
  %v302 = vmul.f32 %v285, %v301
  %v303 = vsub.f32 1.0, %v302
  %v304 = vmul.f32 %v301, %v303
  %v305 = vadd.f32 %v301, %v304
  %vm306 = vweird.f32 %v285
  %vm307 = vweird.f32 %v301
  %vm308 = vmor %vm306, %vm307
  %v309 = vsel %vm308, %v301, %v305
  %v310 = vand.u32 2147483647, %v285
  %vm311 = vcmp.eq.f32.partialorder %v310, 8.507059e+37
  %v312 = vand.u32 %v285, 2147483648
  %v313 = vor.u32 1.1754944e-38, %v312
  %v314 = vsel %vm311, %v313, %v309
  %v315 = vmul.f32 1.0, %v314
  %v317 = vperm.slane %v52, 0
  %v319 = vadd.f32 %v232, %v317
  %v320 = vadd.f32 %v234, %v317
  %v321 = vmul.f32 %v260, %v319
  %v322 = vmul.f32 %v275, %v320
  %v323 = vadd.f32 %v61, %v321
  %v324 = vadd.f32 %v64, %v322
  %v325 = vtanh.pop %v323
  %v326 = vtanh.pop %v324
  %v327 = vsub.f32 1.0, %v300
  %v328 = vsub.f32 1.0, %v315
  %v329 = vmul.f32 %v327, %v325
  %v330 = vmul.f32 %v328, %v326
  %v331 = vmul.f32 %v300, %v53
  %v332 = vmul.f32 %v315, %v54
  %v333 = vadd.f32 %v329, %v331
  %v334 = vadd.f32 %v330, %v332
  %v335 = vpack.c.bf16 %v333, %v333
  %v336 = vpack.c.bf16 %v334, %v334
  %337 = vst [vmem:[%s3] sm:$0xf] %v335
  %338 = vst [vmem:[%s3 + $0x4] sm:$0xf] %v336
  %s339 = scalar_lea.vmem %s0, 24
  %v340 = vld [vmem:[%s339] sm:$0xff]
  %v341 = vld [vmem:[%s339 + $0x8] sm:$0xf]
  %v342 = vld [vmem:[%s339 + $0xc] sm:$0xff]
  %v343 = vld [vmem:[%s339 + $0x14] sm:$0xf]
  %v344 = vunpack.c.l.bf16 %v340
  %v345 = vunpack.c.h.bf16 %v340
  %v346 = vunpack.c.l.bf16 %v341
  %v347 = vunpack.c.l.bf16 %v342
  %v348 = vunpack.c.h.bf16 %v342
  %v349 = vunpack.c.l.bf16 %v343
  %v352 = vunpack.c.l.b16 %v335
  %v353 = vunpack.c.l.b16 %v336
  %v354 = vpack.c.b16 %v353, %v352
  %356 = vmatpush.bf16.msra.mxu0 %v167
  %357 = vmatpush.bf16.msra.mxu0 %v164
  %358 = vmatpush.bf16.msra.mxu0 %v161
  %359 = vmatpush.bf16.msra.mxu0 %v158
  %360 = vmatpush.bf16.msra.mxu0 %v155
  %361 = vmatpush.bf16.msra.mxu0 %v152
  %362 = vmatpush.bf16.msra.mxu0 %v149
  %363 = vmatpush.bf16.msra.mxu0 %v146
  %364 = vmatmul.bf16.gmra.mxu0 %v354
  %v365 = vpop.f32.mrf.mxu0
  %v366 = vadd.f32 0.0, %v365
  %v367 = vpop.f32.mrf.mxu0
  %v368 = vadd.f32 0.0, %v367
  %369 = vdwg.mxu0
  %370 = vmatpush.bf16.msra.mxu0 %v168
  %371 = vmatpush.bf16.msra.mxu0 %v165
  %372 = vmatpush.bf16.msra.mxu0 %v162
  %373 = vmatpush.bf16.msra.mxu0 %v159
  %374 = vmatpush.bf16.msra.mxu0 %v156
  %375 = vmatpush.bf16.msra.mxu0 %v153
  %376 = vmatpush.bf16.msra.mxu0 %v150
  %377 = vmatpush.bf16.msra.mxu0 %v147
  %378 = vmatmul.bf16.gmra.mxu0 %v354
  %v379 = vpop.f32.mrf.mxu0
  %v380 = vadd.f32 0.0, %v379
  %v381 = vpop.f32.mrf.mxu0
  %v382 = vadd.f32 0.0, %v381
  %383 = vdwg.mxu0
  %384 = vmatpush.bf16.msra.mxu0 %v169
  %385 = vmatpush.bf16.msra.mxu0 %v166
  %386 = vmatpush.bf16.msra.mxu0 %v163
  %387 = vmatpush.bf16.msra.mxu0 %v160
  %388 = vmatpush.bf16.msra.mxu0 %v157
  %389 = vmatpush.bf16.msra.mxu0 %v154
  %390 = vmatpush.bf16.msra.mxu0 %v151
  %391 = vmatpush.bf16.msra.mxu0 %v148
  %392 = vmatmul.bf16.gmra.mxu0 %v354
  %v393 = vpop.f32.mrf.mxu0
  %v394 = vadd.f32 0.0, %v393
  %v395 = vpop.f32.mrf.mxu0
  %v396 = vadd.f32 0.0, %v395
  %397 = vdwg.mxu0
  %v398 = vadd.f32 %v344, %v366
  %v399 = vadd.f32 %v347, %v368
  %v400 = vxor.u32 %v398, 2147483648
  %v401 = vxor.u32 %v399, 2147483648
  %v402 = vmul.f32 %v400, 1.442695
  %v403 = vpow.pop %v402
  %v404 = vmul.f32 %v401, 1.442695
  %v405 = vpow.pop %v404
  %v406 = vadd.f32 %v403, 1.0
  %v407 = vadd.f32 %v405, 1.0
  %v408 = vrcp.pop %v406
  %v409 = vmul.f32 %v406, %v408
  %v410 = vsub.f32 1.0, %v409
  %v411 = vmul.f32 %v408, %v410
  %v412 = vadd.f32 %v408, %v411
  %vm413 = vweird.f32 %v406
  %vm414 = vweird.f32 %v408
  %vm415 = vmor %vm413, %vm414
  %v416 = vsel %vm415, %v408, %v412
  %v417 = vand.u32 2147483647, %v406
  %vm418 = vcmp.eq.f32.partialorder %v417, 8.507059e+37
  %v419 = vand.u32 %v406, 2147483648
  %v420 = vor.u32 1.1754944e-38, %v419
  %v421 = vsel %vm418, %v420, %v416
  %v422 = vmul.f32 1.0, %v421
  %v423 = vrcp.pop %v407
  %v424 = vmul.f32 %v407, %v423
  %v425 = vsub.f32 1.0, %v424
  %v426 = vmul.f32 %v423, %v425
  %v427 = vadd.f32 %v423, %v426
  %vm428 = vweird.f32 %v407
  %vm429 = vweird.f32 %v423
  %vm430 = vmor %vm428, %vm429
  %v431 = vsel %vm430, %v423, %v427
  %v432 = vand.u32 2147483647, %v407
  %vm433 = vcmp.eq.f32.partialorder %v432, 8.507059e+37
  %v434 = vand.u32 %v407, 2147483648
  %v435 = vor.u32 1.1754944e-38, %v434
  %v436 = vsel %vm433, %v435, %v431
  %v437 = vmul.f32 1.0, %v436
  %v438 = vadd.f32 %v345, %v380
  %v439 = vadd.f32 %v348, %v382
  %v440 = vxor.u32 %v438, 2147483648
  %v441 = vxor.u32 %v439, 2147483648
  %v442 = vmul.f32 %v440, 1.442695
  %v443 = vpow.pop %v442
  %v444 = vmul.f32 %v441, 1.442695
  %v445 = vpow.pop %v444
  %v446 = vadd.f32 %v443, 1.0
  %v447 = vadd.f32 %v445, 1.0
  %v448 = vrcp.pop %v446
  %v449 = vmul.f32 %v446, %v448
  %v450 = vsub.f32 1.0, %v449
  %v451 = vmul.f32 %v448, %v450
  %v452 = vadd.f32 %v448, %v451
  %vm453 = vweird.f32 %v446
  %vm454 = vweird.f32 %v448
  %vm455 = vmor %vm453, %vm454
  %v456 = vsel %vm455, %v448, %v452
  %v457 = vand.u32 2147483647, %v446
  %vm458 = vcmp.eq.f32.partialorder %v457, 8.507059e+37
  %v459 = vand.u32 %v446, 2147483648
  %v460 = vor.u32 1.1754944e-38, %v459
  %v461 = vsel %vm458, %v460, %v456
  %v462 = vmul.f32 1.0, %v461
  %v463 = vrcp.pop %v447
  %v464 = vmul.f32 %v447, %v463
  %v465 = vsub.f32 1.0, %v464
  %v466 = vmul.f32 %v463, %v465
  %v467 = vadd.f32 %v463, %v466
  %vm468 = vweird.f32 %v447
  %vm469 = vweird.f32 %v463
  %vm470 = vmor %vm468, %vm469
  %v471 = vsel %vm470, %v463, %v467
  %v472 = vand.u32 2147483647, %v447
  %vm473 = vcmp.eq.f32.partialorder %v472, 8.507059e+37
  %v474 = vand.u32 %v447, 2147483648
  %v475 = vor.u32 1.1754944e-38, %v474
  %v476 = vsel %vm473, %v475, %v471
  %v477 = vmul.f32 1.0, %v476
  %v478 = vadd.f32 %v394, %v317
  %v479 = vadd.f32 %v396, %v317
  %v480 = vmul.f32 %v422, %v478
  %v481 = vmul.f32 %v437, %v479
  %v482 = vadd.f32 %v346, %v480
  %v483 = vadd.f32 %v349, %v481
  %v484 = vtanh.pop %v482
  %v485 = vtanh.pop %v483
  %v486 = vsub.f32 1.0, %v462
  %v487 = vsub.f32 1.0, %v477
  %v488 = vmul.f32 %v486, %v484
  %v489 = vmul.f32 %v487, %v485
  %v490 = vmul.f32 %v462, %v333
  %v491 = vmul.f32 %v477, %v334
  %v492 = vadd.f32 %v488, %v490
  %v493 = vadd.f32 %v489, %v491
  %v494 = vpack.c.bf16 %v492, %v492
  %v495 = vpack.c.bf16 %v493, %v493
  %s496 = scalar_lea.vmem %s3, 8
  %497 = vst [vmem:[%s496] sm:$0xf] %v494
  %498 = vst [vmem:[%s496 + $0x4] sm:$0xf] %v495
  %s499 = scalar_lea.vmem %s0, 48
  %v500 = vld [vmem:[%s499] sm:$0xff]
  %v501 = vld [vmem:[%s499 + $0x8] sm:$0xf]
  %v502 = vld [vmem:[%s499 + $0xc] sm:$0xff]
  %v503 = vld [vmem:[%s499 + $0x14] sm:$0xf]
  %v504 = vunpack.c.l.bf16 %v500
  %v505 = vunpack.c.h.bf16 %v500
  %v506 = vunpack.c.l.bf16 %v501
  %v507 = vunpack.c.l.bf16 %v502
  %v508 = vunpack.c.h.bf16 %v502
  %v509 = vunpack.c.l.bf16 %v503
  %v512 = vunpack.c.l.b16 %v494
  %v513 = vunpack.c.l.b16 %v495
  %v514 = vpack.c.b16 %v513, %v512
  %516 = vmatpush.bf16.msra.mxu0 %v167
  %517 = vmatpush.bf16.msra.mxu0 %v164
  %518 = vmatpush.bf16.msra.mxu0 %v161
  %519 = vmatpush.bf16.msra.mxu0 %v158
  %520 = vmatpush.bf16.msra.mxu0 %v155
  %521 = vmatpush.bf16.msra.mxu0 %v152
  %522 = vmatpush.bf16.msra.mxu0 %v149
  %523 = vmatpush.bf16.msra.mxu0 %v146
  %524 = vmatmul.bf16.gmra.mxu0 %v514
  %v525 = vpop.f32.mrf.mxu0
  %v526 = vadd.f32 0.0, %v525
  %v527 = vpop.f32.mrf.mxu0
  %v528 = vadd.f32 0.0, %v527
  %529 = vdwg.mxu0
  %530 = vmatpush.bf16.msra.mxu0 %v168
  %531 = vmatpush.bf16.msra.mxu0 %v165
  %532 = vmatpush.bf16.msra.mxu0 %v162
  %533 = vmatpush.bf16.msra.mxu0 %v159
  %534 = vmatpush.bf16.msra.mxu0 %v156
  %535 = vmatpush.bf16.msra.mxu0 %v153
  %536 = vmatpush.bf16.msra.mxu0 %v150
  %537 = vmatpush.bf16.msra.mxu0 %v147
  %538 = vmatmul.bf16.gmra.mxu0 %v514
  %v539 = vpop.f32.mrf.mxu0
  %v540 = vadd.f32 0.0, %v539
  %v541 = vpop.f32.mrf.mxu0
  %v542 = vadd.f32 0.0, %v541
  %543 = vdwg.mxu0
  %544 = vmatpush.bf16.msra.mxu0 %v169
  %545 = vmatpush.bf16.msra.mxu0 %v166
  %546 = vmatpush.bf16.msra.mxu0 %v163
  %547 = vmatpush.bf16.msra.mxu0 %v160
  %548 = vmatpush.bf16.msra.mxu0 %v157
  %549 = vmatpush.bf16.msra.mxu0 %v154
  %550 = vmatpush.bf16.msra.mxu0 %v151
  %551 = vmatpush.bf16.msra.mxu0 %v148
  %552 = vmatmul.bf16.gmra.mxu0 %v514
  %v553 = vpop.f32.mrf.mxu0
  %v554 = vadd.f32 0.0, %v553
  %v555 = vpop.f32.mrf.mxu0
  %v556 = vadd.f32 0.0, %v555
  %557 = vdwg.mxu0
  %v558 = vadd.f32 %v504, %v526
  %v559 = vadd.f32 %v507, %v528
  %v560 = vxor.u32 %v558, 2147483648
  %v561 = vxor.u32 %v559, 2147483648
  %v562 = vmul.f32 %v560, 1.442695
  %v563 = vpow.pop %v562
  %v564 = vmul.f32 %v561, 1.442695
  %v565 = vpow.pop %v564
  %v566 = vadd.f32 %v563, 1.0
  %v567 = vadd.f32 %v565, 1.0
  %v568 = vrcp.pop %v566
  %v569 = vmul.f32 %v566, %v568
  %v570 = vsub.f32 1.0, %v569
  %v571 = vmul.f32 %v568, %v570
  %v572 = vadd.f32 %v568, %v571
  %vm573 = vweird.f32 %v566
  %vm574 = vweird.f32 %v568
  %vm575 = vmor %vm573, %vm574
  %v576 = vsel %vm575, %v568, %v572
  %v577 = vand.u32 2147483647, %v566
  %vm578 = vcmp.eq.f32.partialorder %v577, 8.507059e+37
  %v579 = vand.u32 %v566, 2147483648
  %v580 = vor.u32 1.1754944e-38, %v579
  %v581 = vsel %vm578, %v580, %v576
  %v582 = vmul.f32 1.0, %v581
  %v583 = vrcp.pop %v567
  %v584 = vmul.f32 %v567, %v583
  %v585 = vsub.f32 1.0, %v584
  %v586 = vmul.f32 %v583, %v585
  %v587 = vadd.f32 %v583, %v586
  %vm588 = vweird.f32 %v567
  %vm589 = vweird.f32 %v583
  %vm590 = vmor %vm588, %vm589
  %v591 = vsel %vm590, %v583, %v587
  %v592 = vand.u32 2147483647, %v567
  %vm593 = vcmp.eq.f32.partialorder %v592, 8.507059e+37
  %v594 = vand.u32 %v567, 2147483648
  %v595 = vor.u32 1.1754944e-38, %v594
  %v596 = vsel %vm593, %v595, %v591
  %v597 = vmul.f32 1.0, %v596
  %v598 = vadd.f32 %v505, %v540
  %v599 = vadd.f32 %v508, %v542
  %v600 = vxor.u32 %v598, 2147483648
  %v601 = vxor.u32 %v599, 2147483648
  %v602 = vmul.f32 %v600, 1.442695
  %v603 = vpow.pop %v602
  %v604 = vmul.f32 %v601, 1.442695
  %v605 = vpow.pop %v604
  %v606 = vadd.f32 %v603, 1.0
  %v607 = vadd.f32 %v605, 1.0
  %v608 = vrcp.pop %v606
  %v609 = vmul.f32 %v606, %v608
  %v610 = vsub.f32 1.0, %v609
  %v611 = vmul.f32 %v608, %v610
  %v612 = vadd.f32 %v608, %v611
  %vm613 = vweird.f32 %v606
  %vm614 = vweird.f32 %v608
  %vm615 = vmor %vm613, %vm614
  %v616 = vsel %vm615, %v608, %v612
  %v617 = vand.u32 2147483647, %v606
  %vm618 = vcmp.eq.f32.partialorder %v617, 8.507059e+37
  %v619 = vand.u32 %v606, 2147483648
  %v620 = vor.u32 1.1754944e-38, %v619
  %v621 = vsel %vm618, %v620, %v616
  %v622 = vmul.f32 1.0, %v621
  %v623 = vrcp.pop %v607
  %v624 = vmul.f32 %v607, %v623
  %v625 = vsub.f32 1.0, %v624
  %v626 = vmul.f32 %v623, %v625
  %v627 = vadd.f32 %v623, %v626
  %vm628 = vweird.f32 %v607
  %vm629 = vweird.f32 %v623
  %vm630 = vmor %vm628, %vm629
  %v631 = vsel %vm630, %v623, %v627
  %v632 = vand.u32 2147483647, %v607
  %vm633 = vcmp.eq.f32.partialorder %v632, 8.507059e+37
  %v634 = vand.u32 %v607, 2147483648
  %v635 = vor.u32 1.1754944e-38, %v634
  %v636 = vsel %vm633, %v635, %v631
  %v637 = vmul.f32 1.0, %v636
  %v638 = vadd.f32 %v554, %v317
  %v639 = vadd.f32 %v556, %v317
  %v640 = vmul.f32 %v582, %v638
  %v641 = vmul.f32 %v597, %v639
  %v642 = vadd.f32 %v506, %v640
  %v643 = vadd.f32 %v509, %v641
  %v644 = vtanh.pop %v642
  %v645 = vtanh.pop %v643
  %v646 = vsub.f32 1.0, %v622
  %v647 = vsub.f32 1.0, %v637
  %v648 = vmul.f32 %v646, %v644
  %v649 = vmul.f32 %v647, %v645
  %v650 = vmul.f32 %v622, %v492
  %v651 = vmul.f32 %v637, %v493
  %v652 = vadd.f32 %v648, %v650
  %v653 = vadd.f32 %v649, %v651
  %v654 = vpack.c.bf16 %v652, %v652
  %v655 = vpack.c.bf16 %v653, %v653
  %s656 = scalar_lea.vmem %s3, 16
  %657 = vst [vmem:[%s656] sm:$0xf] %v654
  %658 = vst [vmem:[%s656 + $0x4] sm:$0xf] %v655
  %s659 = scalar_lea.vmem %s0, 72
  %v660 = vld [vmem:[%s659] sm:$0xff]
  %v661 = vld [vmem:[%s659 + $0x8] sm:$0xf]
  %v662 = vld [vmem:[%s659 + $0xc] sm:$0xff]
  %v663 = vld [vmem:[%s659 + $0x14] sm:$0xf]
  %v664 = vunpack.c.l.bf16 %v660
  %v665 = vunpack.c.h.bf16 %v660
  %v666 = vunpack.c.l.bf16 %v661
  %v667 = vunpack.c.l.bf16 %v662
  %v668 = vunpack.c.h.bf16 %v662
  %v669 = vunpack.c.l.bf16 %v663
  %v672 = vunpack.c.l.b16 %v654
  %v673 = vunpack.c.l.b16 %v655
  %v674 = vpack.c.b16 %v673, %v672
  %676 = vmatpush.bf16.msra.mxu0 %v167
  %677 = vmatpush.bf16.msra.mxu0 %v164
  %678 = vmatpush.bf16.msra.mxu0 %v161
  %679 = vmatpush.bf16.msra.mxu0 %v158
  %680 = vmatpush.bf16.msra.mxu0 %v155
  %681 = vmatpush.bf16.msra.mxu0 %v152
  %682 = vmatpush.bf16.msra.mxu0 %v149
  %683 = vmatpush.bf16.msra.mxu0 %v146
  %684 = vmatmul.bf16.gmra.mxu0 %v674
  %v685 = vpop.f32.mrf.mxu0
  %v686 = vadd.f32 0.0, %v685
  %v687 = vpop.f32.mrf.mxu0
  %v688 = vadd.f32 0.0, %v687
  %689 = vdwg.mxu0
  %690 = vmatpush.bf16.msra.mxu0 %v168
  %691 = vmatpush.bf16.msra.mxu0 %v165
  %692 = vmatpush.bf16.msra.mxu0 %v162
  %693 = vmatpush.bf16.msra.mxu0 %v159
  %694 = vmatpush.bf16.msra.mxu0 %v156
  %695 = vmatpush.bf16.msra.mxu0 %v153
  %696 = vmatpush.bf16.msra.mxu0 %v150
  %697 = vmatpush.bf16.msra.mxu0 %v147
  %698 = vmatmul.bf16.gmra.mxu0 %v674
  %v699 = vpop.f32.mrf.mxu0
  %v700 = vadd.f32 0.0, %v699
  %v701 = vpop.f32.mrf.mxu0
  %v702 = vadd.f32 0.0, %v701
  %703 = vdwg.mxu0
  %704 = vmatpush.bf16.msra.mxu0 %v169
  %705 = vmatpush.bf16.msra.mxu0 %v166
  %706 = vmatpush.bf16.msra.mxu0 %v163
  %707 = vmatpush.bf16.msra.mxu0 %v160
  %708 = vmatpush.bf16.msra.mxu0 %v157
  %709 = vmatpush.bf16.msra.mxu0 %v154
  %710 = vmatpush.bf16.msra.mxu0 %v151
  %711 = vmatpush.bf16.msra.mxu0 %v148
  %712 = vmatmul.bf16.gmra.mxu0 %v674
  %v713 = vpop.f32.mrf.mxu0
  %v714 = vadd.f32 0.0, %v713
  %v715 = vpop.f32.mrf.mxu0
  %v716 = vadd.f32 0.0, %v715
  %717 = vdwg.mxu0
  %v718 = vadd.f32 %v664, %v686
  %v719 = vadd.f32 %v667, %v688
  %v720 = vxor.u32 %v718, 2147483648
  %v721 = vxor.u32 %v719, 2147483648
  %v722 = vmul.f32 %v720, 1.442695
  %v723 = vpow.pop %v722
  %v724 = vmul.f32 %v721, 1.442695
  %v725 = vpow.pop %v724
  %v726 = vadd.f32 %v723, 1.0
  %v727 = vadd.f32 %v725, 1.0
  %v728 = vrcp.pop %v726
  %v729 = vmul.f32 %v726, %v728
  %v730 = vsub.f32 1.0, %v729
  %v731 = vmul.f32 %v728, %v730
  %v732 = vadd.f32 %v728, %v731
  %vm733 = vweird.f32 %v726
  %vm734 = vweird.f32 %v728
  %vm735 = vmor %vm733, %vm734
  %v736 = vsel %vm735, %v728, %v732
  %v737 = vand.u32 2147483647, %v726
  %vm738 = vcmp.eq.f32.partialorder %v737, 8.507059e+37
  %v739 = vand.u32 %v726, 2147483648
  %v740 = vor.u32 1.1754944e-38, %v739
  %v741 = vsel %vm738, %v740, %v736
  %v742 = vmul.f32 1.0, %v741
  %v743 = vrcp.pop %v727
  %v744 = vmul.f32 %v727, %v743
  %v745 = vsub.f32 1.0, %v744
  %v746 = vmul.f32 %v743, %v745
  %v747 = vadd.f32 %v743, %v746
  %vm748 = vweird.f32 %v727
  %vm749 = vweird.f32 %v743
  %vm750 = vmor %vm748, %vm749
  %v751 = vsel %vm750, %v743, %v747
  %v752 = vand.u32 2147483647, %v727
  %vm753 = vcmp.eq.f32.partialorder %v752, 8.507059e+37
  %v754 = vand.u32 %v727, 2147483648
  %v755 = vor.u32 1.1754944e-38, %v754
  %v756 = vsel %vm753, %v755, %v751
  %v757 = vmul.f32 1.0, %v756
  %v758 = vadd.f32 %v665, %v700
  %v759 = vadd.f32 %v668, %v702
  %v760 = vxor.u32 %v758, 2147483648
  %v761 = vxor.u32 %v759, 2147483648
  %v762 = vmul.f32 %v760, 1.442695
  %v763 = vpow.pop %v762
  %v764 = vmul.f32 %v761, 1.442695
  %v765 = vpow.pop %v764
  %v766 = vadd.f32 %v763, 1.0
  %v767 = vadd.f32 %v765, 1.0
  %v768 = vrcp.pop %v766
  %v769 = vmul.f32 %v766, %v768
  %v770 = vsub.f32 1.0, %v769
  %v771 = vmul.f32 %v768, %v770
  %v772 = vadd.f32 %v768, %v771
  %vm773 = vweird.f32 %v766
  %vm774 = vweird.f32 %v768
  %vm775 = vmor %vm773, %vm774
  %v776 = vsel %vm775, %v768, %v772
  %v777 = vand.u32 2147483647, %v766
  %vm778 = vcmp.eq.f32.partialorder %v777, 8.507059e+37
  %v779 = vand.u32 %v766, 2147483648
  %v780 = vor.u32 1.1754944e-38, %v779
  %v781 = vsel %vm778, %v780, %v776
  %v782 = vmul.f32 1.0, %v781
  %v783 = vrcp.pop %v767
  %v784 = vmul.f32 %v767, %v783
  %v785 = vsub.f32 1.0, %v784
  %v786 = vmul.f32 %v783, %v785
  %v787 = vadd.f32 %v783, %v786
  %vm788 = vweird.f32 %v767
  %vm789 = vweird.f32 %v783
  %vm790 = vmor %vm788, %vm789
  %v791 = vsel %vm790, %v783, %v787
  %v792 = vand.u32 2147483647, %v767
  %vm793 = vcmp.eq.f32.partialorder %v792, 8.507059e+37
  %v794 = vand.u32 %v767, 2147483648
  %v795 = vor.u32 1.1754944e-38, %v794
  %v796 = vsel %vm793, %v795, %v791
  %v797 = vmul.f32 1.0, %v796
  %v798 = vadd.f32 %v714, %v317
  %v799 = vadd.f32 %v716, %v317
  %v800 = vmul.f32 %v742, %v798
  %v801 = vmul.f32 %v757, %v799
  %v802 = vadd.f32 %v666, %v800
  %v803 = vadd.f32 %v669, %v801
  %v804 = vtanh.pop %v802
  %v805 = vtanh.pop %v803
  %v806 = vsub.f32 1.0, %v782
  %v807 = vsub.f32 1.0, %v797
  %v808 = vmul.f32 %v806, %v804
  %v809 = vmul.f32 %v807, %v805
  %v810 = vmul.f32 %v782, %v652
  %v811 = vmul.f32 %v797, %v653
  %v812 = vadd.f32 %v808, %v810
  %v813 = vadd.f32 %v809, %v811
  %v814 = vpack.c.bf16 %v812, %v812
  %v815 = vpack.c.bf16 %v813, %v813
  %s816 = scalar_lea.vmem %s3, 24
  %817 = vst [vmem:[%s816] sm:$0xf] %v814
  %818 = vst [vmem:[%s816 + $0x4] sm:$0xf] %v815
  %s819 = scalar_lea.vmem %s0, 96
  %v820 = vld [vmem:[%s819] sm:$0xff]
  %v821 = vld [vmem:[%s819 + $0x8] sm:$0xf]
  %v822 = vld [vmem:[%s819 + $0xc] sm:$0xff]
  %v823 = vld [vmem:[%s819 + $0x14] sm:$0xf]
  %v824 = vunpack.c.l.bf16 %v820
  %v825 = vunpack.c.h.bf16 %v820
  %v826 = vunpack.c.l.bf16 %v821
  %v827 = vunpack.c.l.bf16 %v822
  %v828 = vunpack.c.h.bf16 %v822
  %v829 = vunpack.c.l.bf16 %v823
  %v832 = vunpack.c.l.b16 %v814
  %v833 = vunpack.c.l.b16 %v815
  %v834 = vpack.c.b16 %v833, %v832
  %836 = vmatpush.bf16.msra.mxu0 %v167
  %837 = vmatpush.bf16.msra.mxu0 %v164
  %838 = vmatpush.bf16.msra.mxu0 %v161
  %839 = vmatpush.bf16.msra.mxu0 %v158
  %840 = vmatpush.bf16.msra.mxu0 %v155
  %841 = vmatpush.bf16.msra.mxu0 %v152
  %842 = vmatpush.bf16.msra.mxu0 %v149
  %843 = vmatpush.bf16.msra.mxu0 %v146
  %844 = vmatmul.bf16.gmra.mxu0 %v834
  %v845 = vpop.f32.mrf.mxu0
  %v846 = vadd.f32 0.0, %v845
  %v847 = vpop.f32.mrf.mxu0
  %v848 = vadd.f32 0.0, %v847
  %849 = vdwg.mxu0
  %850 = vmatpush.bf16.msra.mxu0 %v168
  %851 = vmatpush.bf16.msra.mxu0 %v165
  %852 = vmatpush.bf16.msra.mxu0 %v162
  %853 = vmatpush.bf16.msra.mxu0 %v159
  %854 = vmatpush.bf16.msra.mxu0 %v156
  %855 = vmatpush.bf16.msra.mxu0 %v153
  %856 = vmatpush.bf16.msra.mxu0 %v150
  %857 = vmatpush.bf16.msra.mxu0 %v147
  %858 = vmatmul.bf16.gmra.mxu0 %v834
  %v859 = vpop.f32.mrf.mxu0
  %v860 = vadd.f32 0.0, %v859
  %v861 = vpop.f32.mrf.mxu0
  %v862 = vadd.f32 0.0, %v861
  %863 = vdwg.mxu0
  %864 = vmatpush.bf16.msra.mxu0 %v169
  %865 = vmatpush.bf16.msra.mxu0 %v166
  %866 = vmatpush.bf16.msra.mxu0 %v163
  %867 = vmatpush.bf16.msra.mxu0 %v160
  %868 = vmatpush.bf16.msra.mxu0 %v157
  %869 = vmatpush.bf16.msra.mxu0 %v154
  %870 = vmatpush.bf16.msra.mxu0 %v151
  %871 = vmatpush.bf16.msra.mxu0 %v148
  %872 = vmatmul.bf16.gmra.mxu0 %v834
  %v873 = vpop.f32.mrf.mxu0
  %v874 = vadd.f32 0.0, %v873
  %v875 = vpop.f32.mrf.mxu0
  %v876 = vadd.f32 0.0, %v875
  %877 = vdwg.mxu0
  %v878 = vadd.f32 %v824, %v846
  %v879 = vadd.f32 %v827, %v848
  %v880 = vxor.u32 %v878, 2147483648
  %v881 = vxor.u32 %v879, 2147483648
  %v882 = vmul.f32 %v880, 1.442695
  %v883 = vpow.pop %v882
  %v884 = vmul.f32 %v881, 1.442695
  %v885 = vpow.pop %v884
  %v886 = vadd.f32 %v883, 1.0
  %v887 = vadd.f32 %v885, 1.0
  %v888 = vrcp.pop %v886
  %v889 = vmul.f32 %v886, %v888
  %v890 = vsub.f32 1.0, %v889
  %v891 = vmul.f32 %v888, %v890
  %v892 = vadd.f32 %v888, %v891
  %vm893 = vweird.f32 %v886
  %vm894 = vweird.f32 %v888
  %vm895 = vmor %vm893, %vm894
  %v896 = vsel %vm895, %v888, %v892
  %v897 = vand.u32 2147483647, %v886
  %vm898 = vcmp.eq.f32.partialorder %v897, 8.507059e+37
  %v899 = vand.u32 %v886, 2147483648
  %v900 = vor.u32 1.1754944e-38, %v899
  %v901 = vsel %vm898, %v900, %v896
  %v902 = vmul.f32 1.0, %v901
  %v903 = vrcp.pop %v887
  %v904 = vmul.f32 %v887, %v903
  %v905 = vsub.f32 1.0, %v904
  %v906 = vmul.f32 %v903, %v905
  %v907 = vadd.f32 %v903, %v906
  %vm908 = vweird.f32 %v887
  %vm909 = vweird.f32 %v903
  %vm910 = vmor %vm908, %vm909
  %v911 = vsel %vm910, %v903, %v907
  %v912 = vand.u32 2147483647, %v887
  %vm913 = vcmp.eq.f32.partialorder %v912, 8.507059e+37
  %v914 = vand.u32 %v887, 2147483648
  %v915 = vor.u32 1.1754944e-38, %v914
  %v916 = vsel %vm913, %v915, %v911
  %v917 = vmul.f32 1.0, %v916
  %v918 = vadd.f32 %v825, %v860
  %v919 = vadd.f32 %v828, %v862
  %v920 = vxor.u32 %v918, 2147483648
  %v921 = vxor.u32 %v919, 2147483648
  %v922 = vmul.f32 %v920, 1.442695
  %v923 = vpow.pop %v922
  %v924 = vmul.f32 %v921, 1.442695
  %v925 = vpow.pop %v924
  %v926 = vadd.f32 %v923, 1.0
  %v927 = vadd.f32 %v925, 1.0
  %v928 = vrcp.pop %v926
  %v929 = vmul.f32 %v926, %v928
  %v930 = vsub.f32 1.0, %v929
  %v931 = vmul.f32 %v928, %v930
  %v932 = vadd.f32 %v928, %v931
  %vm933 = vweird.f32 %v926
  %vm934 = vweird.f32 %v928
  %vm935 = vmor %vm933, %vm934
  %v936 = vsel %vm935, %v928, %v932
  %v937 = vand.u32 2147483647, %v926
  %vm938 = vcmp.eq.f32.partialorder %v937, 8.507059e+37
  %v939 = vand.u32 %v926, 2147483648
  %v940 = vor.u32 1.1754944e-38, %v939
  %v941 = vsel %vm938, %v940, %v936
  %v942 = vmul.f32 1.0, %v941
  %v943 = vrcp.pop %v927
  %v944 = vmul.f32 %v927, %v943
  %v945 = vsub.f32 1.0, %v944
  %v946 = vmul.f32 %v943, %v945
  %v947 = vadd.f32 %v943, %v946
  %vm948 = vweird.f32 %v927
  %vm949 = vweird.f32 %v943
  %vm950 = vmor %vm948, %vm949
  %v951 = vsel %vm950, %v943, %v947
  %v952 = vand.u32 2147483647, %v927
  %vm953 = vcmp.eq.f32.partialorder %v952, 8.507059e+37
  %v954 = vand.u32 %v927, 2147483648
  %v955 = vor.u32 1.1754944e-38, %v954
  %v956 = vsel %vm953, %v955, %v951
  %v957 = vmul.f32 1.0, %v956
  %v958 = vadd.f32 %v874, %v317
  %v959 = vadd.f32 %v876, %v317
  %v960 = vmul.f32 %v902, %v958
  %v961 = vmul.f32 %v917, %v959
  %v962 = vadd.f32 %v826, %v960
  %v963 = vadd.f32 %v829, %v961
  %v964 = vtanh.pop %v962
  %v965 = vtanh.pop %v963
  %v966 = vsub.f32 1.0, %v942
  %v967 = vsub.f32 1.0, %v957
  %v968 = vmul.f32 %v966, %v964
  %v969 = vmul.f32 %v967, %v965
  %v970 = vmul.f32 %v942, %v812
  %v971 = vmul.f32 %v957, %v813
  %v972 = vadd.f32 %v968, %v970
  %v973 = vadd.f32 %v969, %v971
  %v974 = vpack.c.bf16 %v972, %v972
  %v975 = vpack.c.bf16 %v973, %v973
  %s976 = scalar_lea.vmem %s3, 32
  %977 = vst [vmem:[%s976] sm:$0xf] %v974
  %978 = vst [vmem:[%s976 + $0x4] sm:$0xf] %v975
  %s979 = scalar_lea.vmem %s0, 120
  %v980 = vld [vmem:[%s979] sm:$0xff]
  %v981 = vld [vmem:[%s979 + $0x8] sm:$0xf]
  %v982 = vld [vmem:[%s979 + $0xc] sm:$0xff]
  %v983 = vld [vmem:[%s979 + $0x14] sm:$0xf]
  %v984 = vunpack.c.l.bf16 %v980
  %v985 = vunpack.c.h.bf16 %v980
  %v986 = vunpack.c.l.bf16 %v981
  %v987 = vunpack.c.l.bf16 %v982
  %v988 = vunpack.c.h.bf16 %v982
  %v989 = vunpack.c.l.bf16 %v983
  %v992 = vunpack.c.l.b16 %v974
  %v993 = vunpack.c.l.b16 %v975
  %v994 = vpack.c.b16 %v993, %v992
  %996 = vmatpush.bf16.msra.mxu0 %v167
  %997 = vmatpush.bf16.msra.mxu0 %v164
  %998 = vmatpush.bf16.msra.mxu0 %v161
  %999 = vmatpush.bf16.msra.mxu0 %v158
  %1000 = vmatpush.bf16.msra.mxu0 %v155
  %1001 = vmatpush.bf16.msra.mxu0 %v152
  %1002 = vmatpush.bf16.msra.mxu0 %v149
  %1003 = vmatpush.bf16.msra.mxu0 %v146
  %1004 = vmatmul.bf16.gmra.mxu0 %v994
  %v1005 = vpop.f32.mrf.mxu0
  %v1006 = vadd.f32 0.0, %v1005
  %v1007 = vpop.f32.mrf.mxu0
  %v1008 = vadd.f32 0.0, %v1007
  %1009 = vdwg.mxu0
  %1010 = vmatpush.bf16.msra.mxu0 %v168
  %1011 = vmatpush.bf16.msra.mxu0 %v165
  %1012 = vmatpush.bf16.msra.mxu0 %v162
  %1013 = vmatpush.bf16.msra.mxu0 %v159
  %1014 = vmatpush.bf16.msra.mxu0 %v156
  %1015 = vmatpush.bf16.msra.mxu0 %v153
  %1016 = vmatpush.bf16.msra.mxu0 %v150
  %1017 = vmatpush.bf16.msra.mxu0 %v147
  %1018 = vmatmul.bf16.gmra.mxu0 %v994
  %v1019 = vpop.f32.mrf.mxu0
  %v1020 = vadd.f32 0.0, %v1019
  %v1021 = vpop.f32.mrf.mxu0
  %v1022 = vadd.f32 0.0, %v1021
  %1023 = vdwg.mxu0
  %1024 = vmatpush.bf16.msra.mxu0 %v169
  %1025 = vmatpush.bf16.msra.mxu0 %v166
  %1026 = vmatpush.bf16.msra.mxu0 %v163
  %1027 = vmatpush.bf16.msra.mxu0 %v160
  %1028 = vmatpush.bf16.msra.mxu0 %v157
  %1029 = vmatpush.bf16.msra.mxu0 %v154
  %1030 = vmatpush.bf16.msra.mxu0 %v151
  %1031 = vmatpush.bf16.msra.mxu0 %v148
  %1032 = vmatmul.bf16.gmra.mxu0 %v994
  %v1033 = vpop.f32.mrf.mxu0
  %v1034 = vadd.f32 0.0, %v1033
  %v1035 = vpop.f32.mrf.mxu0
  %v1036 = vadd.f32 0.0, %v1035
  %1037 = vdwg.mxu0
  %v1038 = vadd.f32 %v984, %v1006
  %v1039 = vadd.f32 %v987, %v1008
  %v1040 = vxor.u32 %v1038, 2147483648
  %v1041 = vxor.u32 %v1039, 2147483648
  %v1042 = vmul.f32 %v1040, 1.442695
  %v1043 = vpow.pop %v1042
  %v1044 = vmul.f32 %v1041, 1.442695
  %v1045 = vpow.pop %v1044
  %v1046 = vadd.f32 %v1043, 1.0
  %v1047 = vadd.f32 %v1045, 1.0
  %v1048 = vrcp.pop %v1046
  %v1049 = vmul.f32 %v1046, %v1048
  %v1050 = vsub.f32 1.0, %v1049
  %v1051 = vmul.f32 %v1048, %v1050
  %v1052 = vadd.f32 %v1048, %v1051
  %vm1053 = vweird.f32 %v1046
  %vm1054 = vweird.f32 %v1048
  %vm1055 = vmor %vm1053, %vm1054
  %v1056 = vsel %vm1055, %v1048, %v1052
  %v1057 = vand.u32 2147483647, %v1046
  %vm1058 = vcmp.eq.f32.partialorder %v1057, 8.507059e+37
  %v1059 = vand.u32 %v1046, 2147483648
  %v1060 = vor.u32 1.1754944e-38, %v1059
  %v1061 = vsel %vm1058, %v1060, %v1056
  %v1062 = vmul.f32 1.0, %v1061
  %v1063 = vrcp.pop %v1047
  %v1064 = vmul.f32 %v1047, %v1063
  %v1065 = vsub.f32 1.0, %v1064
  %v1066 = vmul.f32 %v1063, %v1065
  %v1067 = vadd.f32 %v1063, %v1066
  %vm1068 = vweird.f32 %v1047
  %vm1069 = vweird.f32 %v1063
  %vm1070 = vmor %vm1068, %vm1069
  %v1071 = vsel %vm1070, %v1063, %v1067
  %v1072 = vand.u32 2147483647, %v1047
  %vm1073 = vcmp.eq.f32.partialorder %v1072, 8.507059e+37
  %v1074 = vand.u32 %v1047, 2147483648
  %v1075 = vor.u32 1.1754944e-38, %v1074
  %v1076 = vsel %vm1073, %v1075, %v1071
  %v1077 = vmul.f32 1.0, %v1076
  %v1078 = vadd.f32 %v985, %v1020
  %v1079 = vadd.f32 %v988, %v1022
  %v1080 = vxor.u32 %v1078, 2147483648
  %v1081 = vxor.u32 %v1079, 2147483648
  %v1082 = vmul.f32 %v1080, 1.442695
  %v1083 = vpow.pop %v1082
  %v1084 = vmul.f32 %v1081, 1.442695
  %v1085 = vpow.pop %v1084
  %v1086 = vadd.f32 %v1083, 1.0
  %v1087 = vadd.f32 %v1085, 1.0
  %v1088 = vrcp.pop %v1086
  %v1089 = vmul.f32 %v1086, %v1088
  %v1090 = vsub.f32 1.0, %v1089
  %v1091 = vmul.f32 %v1088, %v1090
  %v1092 = vadd.f32 %v1088, %v1091
  %vm1093 = vweird.f32 %v1086
  %vm1094 = vweird.f32 %v1088
  %vm1095 = vmor %vm1093, %vm1094
  %v1096 = vsel %vm1095, %v1088, %v1092
  %v1097 = vand.u32 2147483647, %v1086
  %vm1098 = vcmp.eq.f32.partialorder %v1097, 8.507059e+37
  %v1099 = vand.u32 %v1086, 2147483648
  %v1100 = vor.u32 1.1754944e-38, %v1099
  %v1101 = vsel %vm1098, %v1100, %v1096
  %v1102 = vmul.f32 1.0, %v1101
  %v1103 = vrcp.pop %v1087
  %v1104 = vmul.f32 %v1087, %v1103
  %v1105 = vsub.f32 1.0, %v1104
  %v1106 = vmul.f32 %v1103, %v1105
  %v1107 = vadd.f32 %v1103, %v1106
  %vm1108 = vweird.f32 %v1087
  %vm1109 = vweird.f32 %v1103
  %vm1110 = vmor %vm1108, %vm1109
  %v1111 = vsel %vm1110, %v1103, %v1107
  %v1112 = vand.u32 2147483647, %v1087
  %vm1113 = vcmp.eq.f32.partialorder %v1112, 8.507059e+37
  %v1114 = vand.u32 %v1087, 2147483648
  %v1115 = vor.u32 1.1754944e-38, %v1114
  %v1116 = vsel %vm1113, %v1115, %v1111
  %v1117 = vmul.f32 1.0, %v1116
  %v1118 = vadd.f32 %v1034, %v317
  %v1119 = vadd.f32 %v1036, %v317
  %v1120 = vmul.f32 %v1062, %v1118
  %v1121 = vmul.f32 %v1077, %v1119
  %v1122 = vadd.f32 %v986, %v1120
  %v1123 = vadd.f32 %v989, %v1121
  %v1124 = vtanh.pop %v1122
  %v1125 = vtanh.pop %v1123
  %v1126 = vsub.f32 1.0, %v1102
  %v1127 = vsub.f32 1.0, %v1117
  %v1128 = vmul.f32 %v1126, %v1124
  %v1129 = vmul.f32 %v1127, %v1125
  %v1130 = vmul.f32 %v1102, %v972
  %v1131 = vmul.f32 %v1117, %v973
  %v1132 = vadd.f32 %v1128, %v1130
  %v1133 = vadd.f32 %v1129, %v1131
  %v1134 = vpack.c.bf16 %v1132, %v1132
  %v1135 = vpack.c.bf16 %v1133, %v1133
  %s1136 = scalar_lea.vmem %s3, 40
  %1137 = vst [vmem:[%s1136] sm:$0xf] %v1134
  %1138 = vst [vmem:[%s1136 + $0x4] sm:$0xf] %v1135
  %s1139 = scalar_lea.vmem %s0, 144
  %v1140 = vld [vmem:[%s1139] sm:$0xff]
  %v1141 = vld [vmem:[%s1139 + $0x8] sm:$0xf]
  %v1142 = vld [vmem:[%s1139 + $0xc] sm:$0xff]
  %v1143 = vld [vmem:[%s1139 + $0x14] sm:$0xf]
  %v1144 = vunpack.c.l.bf16 %v1140
  %v1145 = vunpack.c.h.bf16 %v1140
  %v1146 = vunpack.c.l.bf16 %v1141
  %v1147 = vunpack.c.l.bf16 %v1142
  %v1148 = vunpack.c.h.bf16 %v1142
  %v1149 = vunpack.c.l.bf16 %v1143
  %v1152 = vunpack.c.l.b16 %v1134
  %v1153 = vunpack.c.l.b16 %v1135
  %v1154 = vpack.c.b16 %v1153, %v1152
  %1156 = vmatpush.bf16.msra.mxu0 %v167
  %1157 = vmatpush.bf16.msra.mxu0 %v164
  %1158 = vmatpush.bf16.msra.mxu0 %v161
  %1159 = vmatpush.bf16.msra.mxu0 %v158
  %1160 = vmatpush.bf16.msra.mxu0 %v155
  %1161 = vmatpush.bf16.msra.mxu0 %v152
  %1162 = vmatpush.bf16.msra.mxu0 %v149
  %1163 = vmatpush.bf16.msra.mxu0 %v146
  %1164 = vmatmul.bf16.gmra.mxu0 %v1154
  %v1165 = vpop.f32.mrf.mxu0
  %v1166 = vadd.f32 0.0, %v1165
  %v1167 = vpop.f32.mrf.mxu0
  %v1168 = vadd.f32 0.0, %v1167
  %1169 = vdwg.mxu0
  %1170 = vmatpush.bf16.msra.mxu0 %v168
  %1171 = vmatpush.bf16.msra.mxu0 %v165
  %1172 = vmatpush.bf16.msra.mxu0 %v162
  %1173 = vmatpush.bf16.msra.mxu0 %v159
  %1174 = vmatpush.bf16.msra.mxu0 %v156
  %1175 = vmatpush.bf16.msra.mxu0 %v153
  %1176 = vmatpush.bf16.msra.mxu0 %v150
  %1177 = vmatpush.bf16.msra.mxu0 %v147
  %1178 = vmatmul.bf16.gmra.mxu0 %v1154
  %v1179 = vpop.f32.mrf.mxu0
  %v1180 = vadd.f32 0.0, %v1179
  %v1181 = vpop.f32.mrf.mxu0
  %v1182 = vadd.f32 0.0, %v1181
  %1183 = vdwg.mxu0
  %1184 = vmatpush.bf16.msra.mxu0 %v169
  %1185 = vmatpush.bf16.msra.mxu0 %v166
  %1186 = vmatpush.bf16.msra.mxu0 %v163
  %1187 = vmatpush.bf16.msra.mxu0 %v160
  %1188 = vmatpush.bf16.msra.mxu0 %v157
  %1189 = vmatpush.bf16.msra.mxu0 %v154
  %1190 = vmatpush.bf16.msra.mxu0 %v151
  %1191 = vmatpush.bf16.msra.mxu0 %v148
  %1192 = vmatmul.bf16.gmra.mxu0 %v1154
  %v1193 = vpop.f32.mrf.mxu0
  %v1194 = vadd.f32 0.0, %v1193
  %v1195 = vpop.f32.mrf.mxu0
  %v1196 = vadd.f32 0.0, %v1195
  %1197 = vdwg.mxu0
  %v1198 = vadd.f32 %v1144, %v1166
  %v1199 = vadd.f32 %v1147, %v1168
  %v1200 = vxor.u32 %v1198, 2147483648
  %v1201 = vxor.u32 %v1199, 2147483648
  %v1202 = vmul.f32 %v1200, 1.442695
  %v1203 = vpow.pop %v1202
  %v1204 = vmul.f32 %v1201, 1.442695
  %v1205 = vpow.pop %v1204
  %v1206 = vadd.f32 %v1203, 1.0
  %v1207 = vadd.f32 %v1205, 1.0
  %v1208 = vrcp.pop %v1206
  %v1209 = vmul.f32 %v1206, %v1208
  %v1210 = vsub.f32 1.0, %v1209
  %v1211 = vmul.f32 %v1208, %v1210
  %v1212 = vadd.f32 %v1208, %v1211
  %vm1213 = vweird.f32 %v1206
  %vm1214 = vweird.f32 %v1208
  %vm1215 = vmor %vm1213, %vm1214
  %v1216 = vsel %vm1215, %v1208, %v1212
  %v1217 = vand.u32 2147483647, %v1206
  %vm1218 = vcmp.eq.f32.partialorder %v1217, 8.507059e+37
  %v1219 = vand.u32 %v1206, 2147483648
  %v1220 = vor.u32 1.1754944e-38, %v1219
  %v1221 = vsel %vm1218, %v1220, %v1216
  %v1222 = vmul.f32 1.0, %v1221
  %v1223 = vrcp.pop %v1207
  %v1224 = vmul.f32 %v1207, %v1223
  %v1225 = vsub.f32 1.0, %v1224
  %v1226 = vmul.f32 %v1223, %v1225
  %v1227 = vadd.f32 %v1223, %v1226
  %vm1228 = vweird.f32 %v1207
  %vm1229 = vweird.f32 %v1223
  %vm1230 = vmor %vm1228, %vm1229
  %v1231 = vsel %vm1230, %v1223, %v1227
  %v1232 = vand.u32 2147483647, %v1207
  %vm1233 = vcmp.eq.f32.partialorder %v1232, 8.507059e+37
  %v1234 = vand.u32 %v1207, 2147483648
  %v1235 = vor.u32 1.1754944e-38, %v1234
  %v1236 = vsel %vm1233, %v1235, %v1231
  %v1237 = vmul.f32 1.0, %v1236
  %v1238 = vadd.f32 %v1145, %v1180
  %v1239 = vadd.f32 %v1148, %v1182
  %v1240 = vxor.u32 %v1238, 2147483648
  %v1241 = vxor.u32 %v1239, 2147483648
  %v1242 = vmul.f32 %v1240, 1.442695
  %v1243 = vpow.pop %v1242
  %v1244 = vmul.f32 %v1241, 1.442695
  %v1245 = vpow.pop %v1244
  %v1246 = vadd.f32 %v1243, 1.0
  %v1247 = vadd.f32 %v1245, 1.0
  %v1248 = vrcp.pop %v1246
  %v1249 = vmul.f32 %v1246, %v1248
  %v1250 = vsub.f32 1.0, %v1249
  %v1251 = vmul.f32 %v1248, %v1250
  %v1252 = vadd.f32 %v1248, %v1251
  %vm1253 = vweird.f32 %v1246
  %vm1254 = vweird.f32 %v1248
  %vm1255 = vmor %vm1253, %vm1254
  %v1256 = vsel %vm1255, %v1248, %v1252
  %v1257 = vand.u32 2147483647, %v1246
  %vm1258 = vcmp.eq.f32.partialorder %v1257, 8.507059e+37
  %v1259 = vand.u32 %v1246, 2147483648
  %v1260 = vor.u32 1.1754944e-38, %v1259
  %v1261 = vsel %vm1258, %v1260, %v1256
  %v1262 = vmul.f32 1.0, %v1261
  %v1263 = vrcp.pop %v1247
  %v1264 = vmul.f32 %v1247, %v1263
  %v1265 = vsub.f32 1.0, %v1264
  %v1266 = vmul.f32 %v1263, %v1265
  %v1267 = vadd.f32 %v1263, %v1266
  %vm1268 = vweird.f32 %v1247
  %vm1269 = vweird.f32 %v1263
  %vm1270 = vmor %vm1268, %vm1269
  %v1271 = vsel %vm1270, %v1263, %v1267
  %v1272 = vand.u32 2147483647, %v1247
  %vm1273 = vcmp.eq.f32.partialorder %v1272, 8.507059e+37
  %v1274 = vand.u32 %v1247, 2147483648
  %v1275 = vor.u32 1.1754944e-38, %v1274
  %v1276 = vsel %vm1273, %v1275, %v1271
  %v1277 = vmul.f32 1.0, %v1276
  %v1278 = vadd.f32 %v1194, %v317
  %v1279 = vadd.f32 %v1196, %v317
  %v1280 = vmul.f32 %v1222, %v1278
  %v1281 = vmul.f32 %v1237, %v1279
  %v1282 = vadd.f32 %v1146, %v1280
  %v1283 = vadd.f32 %v1149, %v1281
  %v1284 = vtanh.pop %v1282
  %v1285 = vtanh.pop %v1283
  %v1286 = vsub.f32 1.0, %v1262
  %v1287 = vsub.f32 1.0, %v1277
  %v1288 = vmul.f32 %v1286, %v1284
  %v1289 = vmul.f32 %v1287, %v1285
  %v1290 = vmul.f32 %v1262, %v1132
  %v1291 = vmul.f32 %v1277, %v1133
  %v1292 = vadd.f32 %v1288, %v1290
  %v1293 = vadd.f32 %v1289, %v1291
  %v1294 = vpack.c.bf16 %v1292, %v1292
  %v1295 = vpack.c.bf16 %v1293, %v1293
  %s1296 = scalar_lea.vmem %s3, 48
  %1297 = vst [vmem:[%s1296] sm:$0xf] %v1294
  %1298 = vst [vmem:[%s1296 + $0x4] sm:$0xf] %v1295
  %s1299 = scalar_lea.vmem %s0, 168
  %v1300 = vld [vmem:[%s1299] sm:$0xff]
  %v1301 = vld [vmem:[%s1299 + $0x8] sm:$0xf]
  %v1302 = vld [vmem:[%s1299 + $0xc] sm:$0xff]
  %v1303 = vld [vmem:[%s1299 + $0x14] sm:$0xf]
  %v1304 = vunpack.c.l.bf16 %v1300
  %v1305 = vunpack.c.h.bf16 %v1300
  %v1306 = vunpack.c.l.bf16 %v1301
  %v1307 = vunpack.c.l.bf16 %v1302
  %v1308 = vunpack.c.h.bf16 %v1302
  %v1309 = vunpack.c.l.bf16 %v1303
  %v1312 = vunpack.c.l.b16 %v1294
  %v1313 = vunpack.c.l.b16 %v1295
  %v1314 = vpack.c.b16 %v1313, %v1312
  %1316 = vmatpush.bf16.msra.mxu0 %v167
  %1317 = vmatpush.bf16.msra.mxu0 %v164
  %1318 = vmatpush.bf16.msra.mxu0 %v161
  %1319 = vmatpush.bf16.msra.mxu0 %v158
  %1320 = vmatpush.bf16.msra.mxu0 %v155
  %1321 = vmatpush.bf16.msra.mxu0 %v152
  %1322 = vmatpush.bf16.msra.mxu0 %v149
  %1323 = vmatpush.bf16.msra.mxu0 %v146
  %1324 = vmatmul.bf16.gmra.mxu0 %v1314
  %v1325 = vpop.f32.mrf.mxu0
  %v1326 = vadd.f32 0.0, %v1325
  %v1327 = vpop.f32.mrf.mxu0
  %v1328 = vadd.f32 0.0, %v1327
  %1329 = vdwg.mxu0
  %1330 = vmatpush.bf16.msra.mxu0 %v168
  %1331 = vmatpush.bf16.msra.mxu0 %v165
  %1332 = vmatpush.bf16.msra.mxu0 %v162
  %1333 = vmatpush.bf16.msra.mxu0 %v159
  %1334 = vmatpush.bf16.msra.mxu0 %v156
  %1335 = vmatpush.bf16.msra.mxu0 %v153
  %1336 = vmatpush.bf16.msra.mxu0 %v150
  %1337 = vmatpush.bf16.msra.mxu0 %v147
  %1338 = vmatmul.bf16.gmra.mxu0 %v1314
  %v1339 = vpop.f32.mrf.mxu0
  %v1340 = vadd.f32 0.0, %v1339
  %v1341 = vpop.f32.mrf.mxu0
  %v1342 = vadd.f32 0.0, %v1341
  %1343 = vdwg.mxu0
  %1344 = vmatpush.bf16.msra.mxu0 %v169
  %1345 = vmatpush.bf16.msra.mxu0 %v166
  %1346 = vmatpush.bf16.msra.mxu0 %v163
  %1347 = vmatpush.bf16.msra.mxu0 %v160
  %1348 = vmatpush.bf16.msra.mxu0 %v157
  %1349 = vmatpush.bf16.msra.mxu0 %v154
  %1350 = vmatpush.bf16.msra.mxu0 %v151
  %1351 = vmatpush.bf16.msra.mxu0 %v148
  %1352 = vmatmul.bf16.gmra.mxu0 %v1314
  %v1353 = vpop.f32.mrf.mxu0
  %v1354 = vadd.f32 0.0, %v1353
  %v1355 = vpop.f32.mrf.mxu0
  %v1356 = vadd.f32 0.0, %v1355
  %1357 = vdwg.mxu0
  %v1358 = vadd.f32 %v1304, %v1326
  %v1359 = vadd.f32 %v1307, %v1328
  %v1360 = vxor.u32 %v1358, 2147483648
  %v1361 = vxor.u32 %v1359, 2147483648
  %v1362 = vmul.f32 %v1360, 1.442695
  %v1363 = vpow.pop %v1362
  %v1364 = vmul.f32 %v1361, 1.442695
  %v1365 = vpow.pop %v1364
  %v1366 = vadd.f32 %v1363, 1.0
  %v1367 = vadd.f32 %v1365, 1.0
  %v1368 = vrcp.pop %v1366
  %v1369 = vmul.f32 %v1366, %v1368
  %v1370 = vsub.f32 1.0, %v1369
  %v1371 = vmul.f32 %v1368, %v1370
  %v1372 = vadd.f32 %v1368, %v1371
  %vm1373 = vweird.f32 %v1366
  %vm1374 = vweird.f32 %v1368
  %vm1375 = vmor %vm1373, %vm1374
  %v1376 = vsel %vm1375, %v1368, %v1372
  %v1377 = vand.u32 2147483647, %v1366
  %vm1378 = vcmp.eq.f32.partialorder %v1377, 8.507059e+37
  %v1379 = vand.u32 %v1366, 2147483648
  %v1380 = vor.u32 1.1754944e-38, %v1379
  %v1381 = vsel %vm1378, %v1380, %v1376
  %v1382 = vmul.f32 1.0, %v1381
  %v1383 = vrcp.pop %v1367
  %v1384 = vmul.f32 %v1367, %v1383
  %v1385 = vsub.f32 1.0, %v1384
  %v1386 = vmul.f32 %v1383, %v1385
  %v1387 = vadd.f32 %v1383, %v1386
  %vm1388 = vweird.f32 %v1367
  %vm1389 = vweird.f32 %v1383
  %vm1390 = vmor %vm1388, %vm1389
  %v1391 = vsel %vm1390, %v1383, %v1387
  %v1392 = vand.u32 2147483647, %v1367
  %vm1393 = vcmp.eq.f32.partialorder %v1392, 8.507059e+37
  %v1394 = vand.u32 %v1367, 2147483648
  %v1395 = vor.u32 1.1754944e-38, %v1394
  %v1396 = vsel %vm1393, %v1395, %v1391
  %v1397 = vmul.f32 1.0, %v1396
  %v1398 = vadd.f32 %v1305, %v1340
  %v1399 = vadd.f32 %v1308, %v1342
  %v1400 = vxor.u32 %v1398, 2147483648
  %v1401 = vxor.u32 %v1399, 2147483648
  %v1402 = vmul.f32 %v1400, 1.442695
  %v1403 = vpow.pop %v1402
  %v1404 = vmul.f32 %v1401, 1.442695
  %v1405 = vpow.pop %v1404
  %v1406 = vadd.f32 %v1403, 1.0
  %v1407 = vadd.f32 %v1405, 1.0
  %v1408 = vrcp.pop %v1406
  %v1409 = vmul.f32 %v1406, %v1408
  %v1410 = vsub.f32 1.0, %v1409
  %v1411 = vmul.f32 %v1408, %v1410
  %v1412 = vadd.f32 %v1408, %v1411
  %vm1413 = vweird.f32 %v1406
  %vm1414 = vweird.f32 %v1408
  %vm1415 = vmor %vm1413, %vm1414
  %v1416 = vsel %vm1415, %v1408, %v1412
  %v1417 = vand.u32 2147483647, %v1406
  %vm1418 = vcmp.eq.f32.partialorder %v1417, 8.507059e+37
  %v1419 = vand.u32 %v1406, 2147483648
  %v1420 = vor.u32 1.1754944e-38, %v1419
  %v1421 = vsel %vm1418, %v1420, %v1416
  %v1422 = vmul.f32 1.0, %v1421
  %v1423 = vrcp.pop %v1407
  %v1424 = vmul.f32 %v1407, %v1423
  %v1425 = vsub.f32 1.0, %v1424
  %v1426 = vmul.f32 %v1423, %v1425
  %v1427 = vadd.f32 %v1423, %v1426
  %vm1428 = vweird.f32 %v1407
  %vm1429 = vweird.f32 %v1423
  %vm1430 = vmor %vm1428, %vm1429
  %v1431 = vsel %vm1430, %v1423, %v1427
  %v1432 = vand.u32 2147483647, %v1407
  %vm1433 = vcmp.eq.f32.partialorder %v1432, 8.507059e+37
  %v1434 = vand.u32 %v1407, 2147483648
  %v1435 = vor.u32 1.1754944e-38, %v1434
  %v1436 = vsel %vm1433, %v1435, %v1431
  %v1437 = vmul.f32 1.0, %v1436
  %v1438 = vadd.f32 %v1354, %v317
  %v1439 = vadd.f32 %v1356, %v317
  %v1440 = vmul.f32 %v1382, %v1438
  %v1441 = vmul.f32 %v1397, %v1439
  %v1442 = vadd.f32 %v1306, %v1440
  %v1443 = vadd.f32 %v1309, %v1441
  %v1444 = vtanh.pop %v1442
  %v1445 = vtanh.pop %v1443
  %v1446 = vsub.f32 1.0, %v1422
  %v1447 = vsub.f32 1.0, %v1437
  %v1448 = vmul.f32 %v1446, %v1444
  %v1449 = vmul.f32 %v1447, %v1445
  %v1450 = vmul.f32 %v1422, %v1292
  %v1451 = vmul.f32 %v1437, %v1293
  %v1452 = vadd.f32 %v1448, %v1450
  %v1453 = vadd.f32 %v1449, %v1451
  %v1454 = vpack.c.bf16 %v1452, %v1452
  %v1455 = vpack.c.bf16 %v1453, %v1453
  %s1456 = scalar_lea.vmem %s3, 56
  %1457 = vst [vmem:[%s1456] sm:$0xf] %v1454
  %1458 = vst [vmem:[%s1456 + $0x4] sm:$0xf] %v1455
  %1459 = vst [vmem:[#allocation2] sm:$0xff] %v1452
  %1460 = vst [vmem:[#allocation2 + $0x8] sm:$0xff] %v1453
  // Predicated region
  $region18: #{rnn_forward.5} parent=0 // pred_check
    _
  $region19: #{rnn_forward.5} parent=0 // pred_check_branch
    %1462 = sbr.rel (0) target = $region21
  $region20: #{rnn_forward.5} parent=0 // pred_region
    _
  $region21: #{rnn_forward.5} parent=0 // pred_fallthru
    _
  // Predicated region
  $region22: #{rnn_forward.5} parent=0 // pred_check
    _
  $region23: #{rnn_forward.5} parent=0 // pred_check_branch
    %1464 = sbr.rel (0) target = $region25
  $region24: #{rnn_forward.5} parent=0 // pred_region
    _
  $region25: #{rnn_forward.5} parent=0 // pred_fallthru
    _

// kernel: rnn_forward.7
$region0: #{rnn_forward.7}
  #allocation0 [shape = 'u32[]', space=smem, size = 0x4, offset = 0x4, fixed_abs, tag = 'smem constant byte address 0x4 - core index']
  #allocation1 [shape = 'u32[72,128]{1,0:T(1,128)}', space=vmem, size = 0x9000, scoped, tag = 'internal scratch']
  #allocation2 [shape = 'f32[16,128]{1,0:T(8,128)}', space=vmem, size = 0x2000, scoped, tag = 'scratch operand']
  %s0 = inlined_call_operand.vmem [shape: bf16[8,16,384], index: 0, kind: input, shape index: {}]
  %s1 = inlined_call_operand.vmem [shape: bf16[128,384], index: 1, kind: input, shape index: {}]
  %s2 = inlined_call_operand.vmem [shape: f32[1,128], index: 2, kind: input, shape index: {}]
  %s3 = inlined_call_operand.vmem [shape: bf16[128,128], index: 3, kind: input, shape index: {}]
  %s4 = inlined_call_operand.vmem [shape: f32[1,128], index: 4, kind: input, shape index: {}]
  %s5 = inlined_call_operand.vmem [shape: f32[16,128], index: 5, kind: output, shape index: {}]
  %s6 = sld [smem:[#allocation0]]
  $region38: #{rnn_forward.7} parent=0
    _
  %s8 = ssub.s32 1, %s6
  %s9 = scalar_select 0, %s8, %s6
  // Predicated region
  $region2: #{rnn_forward.7} parent=0 // pred_check
    _
  $region3: #{rnn_forward.7} parent=0 // pred_check_branch
    %11 = sbr.rel (0) target = $region5
  $region4: #{rnn_forward.7} parent=0 // pred_region
    _
  $region5: #{rnn_forward.7} parent=0 // pred_fallthru
    _
  // Predicated region
  $region6: #{rnn_forward.7} parent=0 // pred_check
    _
  $region7: #{rnn_forward.7} parent=0 // pred_check_branch
    %13 = sbr.rel (0) target = $region9
  $region8: #{rnn_forward.7} parent=0 // pred_region
    _
  $region9: #{rnn_forward.7} parent=0 // pred_fallthru
    _
  // Predicated region
  $region10: #{rnn_forward.7} parent=0 // pred_check
    _
  $region11: #{rnn_forward.7} parent=0 // pred_check_branch
    %15 = sbr.rel (0) target = $region13
  $region12: #{rnn_forward.7} parent=0 // pred_region
    _
  $region13: #{rnn_forward.7} parent=0 // pred_fallthru
    _
  // Predicated region
  $region14: #{rnn_forward.7} parent=0 // pred_check
    _
  $region15: #{rnn_forward.7} parent=0 // pred_check_branch
    %17 = sbr.rel (0) target = $region17
  $region16: #{rnn_forward.7} parent=0 // pred_region
    _
  $region17: #{rnn_forward.7} parent=0 // pred_fallthru
    _
  // Predicated region
  $region18: #{rnn_forward.7} parent=0 // pred_check
    _
  $region19: #{rnn_forward.7} parent=0 // pred_check_branch
    %19 = sbr.rel (0) target = $region21
  $region20: #{rnn_forward.7} parent=0 // pred_region
    _
  $region21: #{rnn_forward.7} parent=0 // pred_fallthru
    _
  %p20 = scmp.eq.s32.totalorder 0, 0
  // Predicated region
  $region22: #{rnn_forward.7} parent=0 // pred_check
    %p21 = pneg %p20
  $region23: #{rnn_forward.7} parent=0 // pred_check_branch
    %23 = sbr.rel (%p21) target = $region25
  $region24: #{rnn_forward.7} parent=0 // pred_region
    %24 = vst [vmem:[#allocation2] sm:$0xff] 0.0
    %25 = vst [vmem:[#allocation2 + $0x8] sm:$0xff] 0.0
  $region25: #{rnn_forward.7} parent=0 // pred_fallthru
    _
  %v26 = vld [vmem:[%s1] sm:$0xff]
  %v27 = vld [vmem:[%s1 + $0x8] sm:$0xf]
  %v28 = vld [vmem:[%s1 + $0xc] sm:$0xff]
  %v29 = vld [vmem:[%s1 + $0x14] sm:$0xf]
  %v30 = vld [vmem:[%s1 + $0x18] sm:$0xff]
  %v31 = vld [vmem:[%s1 + $0x20] sm:$0xf]
  %v32 = vld [vmem:[%s1 + $0x24] sm:$0xff]
  %v33 = vld [vmem:[%s1 + $0x2c] sm:$0xf]
  %v34 = vld [vmem:[%s1 + $0x30] sm:$0xff]
  %v35 = vld [vmem:[%s1 + $0x38] sm:$0xf]
  %v36 = vld [vmem:[%s1 + $0x3c] sm:$0xff]
  %v37 = vld [vmem:[%s1 + $0x44] sm:$0xf]
  %v38 = vld [vmem:[%s1 + $0x48] sm:$0xff]
  %v39 = vld [vmem:[%s1 + $0x50] sm:$0xf]
  %v40 = vld [vmem:[%s1 + $0x54] sm:$0xff]
  %v41 = vld [vmem:[%s1 + $0x5c] sm:$0xf]
  %v42 = vld [vmem:[%s1 + $0x60] sm:$0xff]
  %v43 = vld [vmem:[%s1 + $0x68] sm:$0xf]
  %v44 = vld [vmem:[%s1 + $0x6c] sm:$0xff]
  %v45 = vld [vmem:[%s1 + $0x74] sm:$0xf]
  %v46 = vld [vmem:[%s1 + $0x78] sm:$0xff]
  %v47 = vld [vmem:[%s1 + $0x80] sm:$0xf]
  %v48 = vld [vmem:[%s1 + $0x84] sm:$0xff]
  %v49 = vld [vmem:[%s1 + $0x8c] sm:$0xf]
  %v50 = vld [vmem:[%s1 + $0x90] sm:$0xff]
  %v51 = vld [vmem:[%s1 + $0x98] sm:$0xf]
  %v52 = vld [vmem:[%s1 + $0x9c] sm:$0xff]
  %v53 = vld [vmem:[%s1 + $0xa4] sm:$0xf]
  %v54 = vld [vmem:[%s1 + $0xa8] sm:$0xff]
  %v55 = vld [vmem:[%s1 + $0xb0] sm:$0xf]
  %v56 = vld [vmem:[%s1 + $0xb4] sm:$0xff]
  %v57 = vld [vmem:[%s1 + $0xbc] sm:$0xf]
  %v58 = vld [vmem:[%s2] sm:$0x1]
  %v59 = vld [vmem:[#allocation2] sm:$0xff]
  %v60 = vld [vmem:[#allocation2 + $0x8] sm:$0xff]
  %v61 = vld [vmem:[%s0] sm:$0xff]
  %v62 = vld [vmem:[%s0 + $0x8] sm:$0xf]
  %v63 = vld [vmem:[%s0 + $0xc] sm:$0xff]
  %v64 = vld [vmem:[%s0 + $0x14] sm:$0xf]
  %v65 = vunpack.c.l.bf16 %v61
  %v66 = vunpack.c.h.bf16 %v61
  %v67 = vunpack.c.l.bf16 %v62
  %v68 = vunpack.c.l.bf16 %v63
  %v69 = vunpack.c.h.bf16 %v63
  %v70 = vunpack.c.l.bf16 %v64
  %v71 = vpack.c.bf16 %v60, %v59
  %v104 = vunpack.c.l.b16 %v26
  %v105 = vunpack.c.h.b16 %v26
  %v106 = vunpack.c.l.b16 %v27
  %v107 = vunpack.c.l.b16 %v28
  %v108 = vunpack.c.h.b16 %v28
  %v109 = vunpack.c.l.b16 %v29
  %v110 = vunpack.c.l.b16 %v30
  %v111 = vunpack.c.h.b16 %v30
  %v112 = vunpack.c.l.b16 %v31
  %v113 = vunpack.c.l.b16 %v32
  %v114 = vunpack.c.h.b16 %v32
  %v115 = vunpack.c.l.b16 %v33
  %v116 = vunpack.c.l.b16 %v34
  %v117 = vunpack.c.h.b16 %v34
  %v118 = vunpack.c.l.b16 %v35
  %v119 = vunpack.c.l.b16 %v36
  %v120 = vunpack.c.h.b16 %v36
  %v121 = vunpack.c.l.b16 %v37
  %v122 = vunpack.c.l.b16 %v38
  %v123 = vunpack.c.h.b16 %v38
  %v124 = vunpack.c.l.b16 %v39
  %v125 = vunpack.c.l.b16 %v40
  %v126 = vunpack.c.h.b16 %v40
  %v127 = vunpack.c.l.b16 %v41
  %v128 = vunpack.c.l.b16 %v42
  %v129 = vunpack.c.h.b16 %v42
  %v130 = vunpack.c.l.b16 %v43
  %v131 = vunpack.c.l.b16 %v44
  %v132 = vunpack.c.h.b16 %v44
  %v133 = vunpack.c.l.b16 %v45
  %v134 = vunpack.c.l.b16 %v46
  %v135 = vunpack.c.h.b16 %v46
  %v136 = vunpack.c.l.b16 %v47
  %v137 = vunpack.c.l.b16 %v48
  %v138 = vunpack.c.h.b16 %v48
  %v139 = vunpack.c.l.b16 %v49
  %v140 = vunpack.c.l.b16 %v50
  %v141 = vunpack.c.h.b16 %v50
  %v142 = vunpack.c.l.b16 %v51
  %v143 = vunpack.c.l.b16 %v52
  %v144 = vunpack.c.h.b16 %v52
  %v145 = vunpack.c.l.b16 %v53
  %v146 = vunpack.c.l.b16 %v54
  %v147 = vunpack.c.h.b16 %v54
  %v148 = vunpack.c.l.b16 %v55
  %v149 = vunpack.c.l.b16 %v56
  %v150 = vunpack.c.h.b16 %v56
  %v151 = vunpack.c.l.b16 %v57
  %v152 = vpack.c.b16 %v107, %v104
  %v153 = vpack.c.b16 %v108, %v105
  %v154 = vpack.c.b16 %v109, %v106
  %v155 = vpack.c.b16 %v113, %v110
  %v156 = vpack.c.b16 %v114, %v111
  %v157 = vpack.c.b16 %v115, %v112
  %v158 = vpack.c.b16 %v119, %v116
  %v159 = vpack.c.b16 %v120, %v117
  %v160 = vpack.c.b16 %v121, %v118
  %v161 = vpack.c.b16 %v125, %v122
  %v162 = vpack.c.b16 %v126, %v123
  %v163 = vpack.c.b16 %v127, %v124
  %v164 = vpack.c.b16 %v131, %v128
  %v165 = vpack.c.b16 %v132, %v129
  %v166 = vpack.c.b16 %v133, %v130
  %v167 = vpack.c.b16 %v137, %v134
  %v168 = vpack.c.b16 %v138, %v135
  %v169 = vpack.c.b16 %v139, %v136
  %v170 = vpack.c.b16 %v143, %v140
  %v171 = vpack.c.b16 %v144, %v141
  %v172 = vpack.c.b16 %v145, %v142
  %v173 = vpack.c.b16 %v149, %v146
  %v174 = vpack.c.b16 %v150, %v147
  %v175 = vpack.c.b16 %v151, %v148
  %200 = vmatpush.bf16.msra.mxu0 %v173
  %201 = vmatpush.bf16.msra.mxu0 %v170
  %202 = vmatpush.bf16.msra.mxu0 %v167
  %203 = vmatpush.bf16.msra.mxu0 %v164
  %204 = vmatpush.bf16.msra.mxu0 %v161
  %205 = vmatpush.bf16.msra.mxu0 %v158
  %206 = vmatpush.bf16.msra.mxu0 %v155
  %207 = vmatpush.bf16.msra.mxu0 %v152
  %208 = vmatmul.bf16.gmra.mxu0 %v71
  %v209 = vpop.f32.mrf.mxu0
  %v210 = vadd.f32 0.0, %v209
  %v211 = vpop.f32.mrf.mxu0
  %v212 = vadd.f32 0.0, %v211
  %213 = vdwg.mxu0
  %214 = vmatpush.bf16.msra.mxu0 %v174
  %215 = vmatpush.bf16.msra.mxu0 %v171
  %216 = vmatpush.bf16.msra.mxu0 %v168
  %217 = vmatpush.bf16.msra.mxu0 %v165
  %218 = vmatpush.bf16.msra.mxu0 %v162
  %219 = vmatpush.bf16.msra.mxu0 %v159
  %220 = vmatpush.bf16.msra.mxu0 %v156
  %221 = vmatpush.bf16.msra.mxu0 %v153
  %222 = vmatmul.bf16.gmra.mxu0 %v71
  %v223 = vpop.f32.mrf.mxu0
  %v224 = vadd.f32 0.0, %v223
  %v225 = vpop.f32.mrf.mxu0
  %v226 = vadd.f32 0.0, %v225
  %227 = vdwg.mxu0
  %228 = vmatpush.bf16.msra.mxu0 %v175
  %229 = vmatpush.bf16.msra.mxu0 %v172
  %230 = vmatpush.bf16.msra.mxu0 %v169
  %231 = vmatpush.bf16.msra.mxu0 %v166
  %232 = vmatpush.bf16.msra.mxu0 %v163
  %233 = vmatpush.bf16.msra.mxu0 %v160
  %234 = vmatpush.bf16.msra.mxu0 %v157
  %235 = vmatpush.bf16.msra.mxu0 %v154
  %236 = vmatmul.bf16.gmra.mxu0 %v71
  %v237 = vpop.f32.mrf.mxu0
  %v238 = vadd.f32 0.0, %v237
  %v239 = vpop.f32.mrf.mxu0
  %v240 = vadd.f32 0.0, %v239
  %241 = vdwg.mxu0
  %v242 = vadd.f32 %v65, %v210
  %v243 = vadd.f32 %v68, %v212
  %v244 = vxor.u32 %v242, 2147483648
  %v245 = vxor.u32 %v243, 2147483648
  %v246 = vmul.f32 %v244, 1.442695
  %v247 = vpow.pop %v246
  %v248 = vmul.f32 %v245, 1.442695
  %v249 = vpow.pop %v248
  %v250 = vadd.f32 %v247, 1.0
  %v251 = vadd.f32 %v249, 1.0
  %v252 = vrcp.pop %v250
  %v253 = vmul.f32 %v250, %v252
  %v254 = vsub.f32 1.0, %v253
  %v255 = vmul.f32 %v252, %v254
  %v256 = vadd.f32 %v252, %v255
  %vm257 = vweird.f32 %v250
  %vm258 = vweird.f32 %v252
  %vm259 = vmor %vm257, %vm258
  %v260 = vsel %vm259, %v252, %v256
  %v261 = vand.u32 2147483647, %v250
  %vm262 = vcmp.eq.f32.partialorder %v261, 8.507059e+37
  %v263 = vand.u32 %v250, 2147483648
  %v264 = vor.u32 1.1754944e-38, %v263
  %v265 = vsel %vm262, %v264, %v260
  %v266 = vmul.f32 1.0, %v265
  %v267 = vrcp.pop %v251
  %v268 = vmul.f32 %v251, %v267
  %v269 = vsub.f32 1.0, %v268
  %v270 = vmul.f32 %v267, %v269
  %v271 = vadd.f32 %v267, %v270
  %vm272 = vweird.f32 %v251
  %vm273 = vweird.f32 %v267
  %vm274 = vmor %vm272, %vm273
  %v275 = vsel %vm274, %v267, %v271
  %v276 = vand.u32 2147483647, %v251
  %vm277 = vcmp.eq.f32.partialorder %v276, 8.507059e+37
  %v278 = vand.u32 %v251, 2147483648
  %v279 = vor.u32 1.1754944e-38, %v278
  %v280 = vsel %vm277, %v279, %v275
  %v281 = vmul.f32 1.0, %v280
  %v282 = vadd.f32 %v66, %v224
  %v283 = vadd.f32 %v69, %v226
  %v284 = vxor.u32 %v282, 2147483648
  %v285 = vxor.u32 %v283, 2147483648
  %v286 = vmul.f32 %v284, 1.442695
  %v287 = vpow.pop %v286
  %v288 = vmul.f32 %v285, 1.442695
  %v289 = vpow.pop %v288
  %v290 = vadd.f32 %v287, 1.0
  %v291 = vadd.f32 %v289, 1.0
  %v292 = vrcp.pop %v290
  %v293 = vmul.f32 %v290, %v292
  %v294 = vsub.f32 1.0, %v293
  %v295 = vmul.f32 %v292, %v294
  %v296 = vadd.f32 %v292, %v295
  %vm297 = vweird.f32 %v290
  %vm298 = vweird.f32 %v292
  %vm299 = vmor %vm297, %vm298
  %v300 = vsel %vm299, %v292, %v296
  %v301 = vand.u32 2147483647, %v290
  %vm302 = vcmp.eq.f32.partialorder %v301, 8.507059e+37
  %v303 = vand.u32 %v290, 2147483648
  %v304 = vor.u32 1.1754944e-38, %v303
  %v305 = vsel %vm302, %v304, %v300
  %v306 = vmul.f32 1.0, %v305
  %v307 = vrcp.pop %v291
  %v308 = vmul.f32 %v291, %v307
  %v309 = vsub.f32 1.0, %v308
  %v310 = vmul.f32 %v307, %v309
  %v311 = vadd.f32 %v307, %v310
  %vm312 = vweird.f32 %v291
  %vm313 = vweird.f32 %v307
  %vm314 = vmor %vm312, %vm313
  %v315 = vsel %vm314, %v307, %v311
  %v316 = vand.u32 2147483647, %v291
  %vm317 = vcmp.eq.f32.partialorder %v316, 8.507059e+37
  %v318 = vand.u32 %v291, 2147483648
  %v319 = vor.u32 1.1754944e-38, %v318
  %v320 = vsel %vm317, %v319, %v315
  %v321 = vmul.f32 1.0, %v320
  %v323 = vperm.slane %v58, 0
  %v325 = vadd.f32 %v238, %v323
  %v326 = vadd.f32 %v240, %v323
  %v327 = vmul.f32 %v266, %v325
  %v328 = vmul.f32 %v281, %v326
  %v329 = vadd.f32 %v67, %v327
  %v330 = vadd.f32 %v70, %v328
  %v331 = vtanh.pop %v329
  %v332 = vtanh.pop %v330
  %v333 = vsub.f32 1.0, %v306
  %v334 = vsub.f32 1.0, %v321
  %v335 = vmul.f32 %v333, %v331
  %v336 = vmul.f32 %v334, %v332
  %v337 = vmul.f32 %v306, %v59
  %v338 = vmul.f32 %v321, %v60
  %v339 = vadd.f32 %v335, %v337
  %v340 = vadd.f32 %v336, %v338
  %s341 = scalar_lea.vmem %s0, 24
  %v342 = vld [vmem:[%s341] sm:$0xff]
  %v343 = vld [vmem:[%s341 + $0x8] sm:$0xf]
  %v344 = vld [vmem:[%s341 + $0xc] sm:$0xff]
  %v345 = vld [vmem:[%s341 + $0x14] sm:$0xf]
  %v346 = vunpack.c.l.bf16 %v342
  %v347 = vunpack.c.h.bf16 %v342
  %v348 = vunpack.c.l.bf16 %v343
  %v349 = vunpack.c.l.bf16 %v344
  %v350 = vunpack.c.h.bf16 %v344
  %v351 = vunpack.c.l.bf16 %v345
  %v352 = vpack.c.bf16 %v340, %v339
  %353 = vmatpush.bf16.msra.mxu0 %v173
  %354 = vmatpush.bf16.msra.mxu0 %v170
  %355 = vmatpush.bf16.msra.mxu0 %v167
  %356 = vmatpush.bf16.msra.mxu0 %v164
  %357 = vmatpush.bf16.msra.mxu0 %v161
  %358 = vmatpush.bf16.msra.mxu0 %v158
  %359 = vmatpush.bf16.msra.mxu0 %v155
  %360 = vmatpush.bf16.msra.mxu0 %v152
  %361 = vmatmul.bf16.gmra.mxu0 %v352
  %v362 = vpop.f32.mrf.mxu0
  %v363 = vadd.f32 0.0, %v362
  %v364 = vpop.f32.mrf.mxu0
  %v365 = vadd.f32 0.0, %v364
  %366 = vdwg.mxu0
  %367 = vmatpush.bf16.msra.mxu0 %v174
  %368 = vmatpush.bf16.msra.mxu0 %v171
  %369 = vmatpush.bf16.msra.mxu0 %v168
  %370 = vmatpush.bf16.msra.mxu0 %v165
  %371 = vmatpush.bf16.msra.mxu0 %v162
  %372 = vmatpush.bf16.msra.mxu0 %v159
  %373 = vmatpush.bf16.msra.mxu0 %v156
  %374 = vmatpush.bf16.msra.mxu0 %v153
  %375 = vmatmul.bf16.gmra.mxu0 %v352
  %v376 = vpop.f32.mrf.mxu0
  %v377 = vadd.f32 0.0, %v376
  %v378 = vpop.f32.mrf.mxu0
  %v379 = vadd.f32 0.0, %v378
  %380 = vdwg.mxu0
  %381 = vmatpush.bf16.msra.mxu0 %v175
  %382 = vmatpush.bf16.msra.mxu0 %v172
  %383 = vmatpush.bf16.msra.mxu0 %v169
  %384 = vmatpush.bf16.msra.mxu0 %v166
  %385 = vmatpush.bf16.msra.mxu0 %v163
  %386 = vmatpush.bf16.msra.mxu0 %v160
  %387 = vmatpush.bf16.msra.mxu0 %v157
  %388 = vmatpush.bf16.msra.mxu0 %v154
  %389 = vmatmul.bf16.gmra.mxu0 %v352
  %v390 = vpop.f32.mrf.mxu0
  %v391 = vadd.f32 0.0, %v390
  %v392 = vpop.f32.mrf.mxu0
  %v393 = vadd.f32 0.0, %v392
  %394 = vdwg.mxu0
  %v395 = vadd.f32 %v346, %v363
  %v396 = vadd.f32 %v349, %v365
  %v397 = vxor.u32 %v395, 2147483648
  %v398 = vxor.u32 %v396, 2147483648
  %v399 = vmul.f32 %v397, 1.442695
  %v400 = vpow.pop %v399
  %v401 = vmul.f32 %v398, 1.442695
  %v402 = vpow.pop %v401
  %v403 = vadd.f32 %v400, 1.0
  %v404 = vadd.f32 %v402, 1.0
  %v405 = vrcp.pop %v403
  %v406 = vmul.f32 %v403, %v405
  %v407 = vsub.f32 1.0, %v406
  %v408 = vmul.f32 %v405, %v407
  %v409 = vadd.f32 %v405, %v408
  %vm410 = vweird.f32 %v403
  %vm411 = vweird.f32 %v405
  %vm412 = vmor %vm410, %vm411
  %v413 = vsel %vm412, %v405, %v409
  %v414 = vand.u32 2147483647, %v403
  %vm415 = vcmp.eq.f32.partialorder %v414, 8.507059e+37
  %v416 = vand.u32 %v403, 2147483648
  %v417 = vor.u32 1.1754944e-38, %v416
  %v418 = vsel %vm415, %v417, %v413
  %v419 = vmul.f32 1.0, %v418
  %v420 = vrcp.pop %v404
  %v421 = vmul.f32 %v404, %v420
  %v422 = vsub.f32 1.0, %v421
  %v423 = vmul.f32 %v420, %v422
  %v424 = vadd.f32 %v420, %v423
  %vm425 = vweird.f32 %v404
  %vm426 = vweird.f32 %v420
  %vm427 = vmor %vm425, %vm426
  %v428 = vsel %vm427, %v420, %v424
  %v429 = vand.u32 2147483647, %v404
  %vm430 = vcmp.eq.f32.partialorder %v429, 8.507059e+37
  %v431 = vand.u32 %v404, 2147483648
  %v432 = vor.u32 1.1754944e-38, %v431
  %v433 = vsel %vm430, %v432, %v428
  %v434 = vmul.f32 1.0, %v433
  %v435 = vadd.f32 %v347, %v377
  %v436 = vadd.f32 %v350, %v379
  %v437 = vxor.u32 %v435, 2147483648
  %v438 = vxor.u32 %v436, 2147483648
  %v439 = vmul.f32 %v437, 1.442695
  %v440 = vpow.pop %v439
  %v441 = vmul.f32 %v438, 1.442695
  %v442 = vpow.pop %v441
  %v443 = vadd.f32 %v440, 1.0
  %v444 = vadd.f32 %v442, 1.0
  %v445 = vrcp.pop %v443
  %v446 = vmul.f32 %v443, %v445
  %v447 = vsub.f32 1.0, %v446
  %v448 = vmul.f32 %v445, %v447
  %v449 = vadd.f32 %v445, %v448
  %vm450 = vweird.f32 %v443
  %vm451 = vweird.f32 %v445
  %vm452 = vmor %vm450, %vm451
  %v453 = vsel %vm452, %v445, %v449
  %v454 = vand.u32 2147483647, %v443
  %vm455 = vcmp.eq.f32.partialorder %v454, 8.507059e+37
  %v456 = vand.u32 %v443, 2147483648
  %v457 = vor.u32 1.1754944e-38, %v456
  %v458 = vsel %vm455, %v457, %v453
  %v459 = vmul.f32 1.0, %v458
  %v460 = vrcp.pop %v444
  %v461 = vmul.f32 %v444, %v460
  %v462 = vsub.f32 1.0, %v461
  %v463 = vmul.f32 %v460, %v462
  %v464 = vadd.f32 %v460, %v463
  %vm465 = vweird.f32 %v444
  %vm466 = vweird.f32 %v460
  %vm467 = vmor %vm465, %vm466
  %v468 = vsel %vm467, %v460, %v464
  %v469 = vand.u32 2147483647, %v444
  %vm470 = vcmp.eq.f32.partialorder %v469, 8.507059e+37
  %v471 = vand.u32 %v444, 2147483648
  %v472 = vor.u32 1.1754944e-38, %v471
  %v473 = vsel %vm470, %v472, %v468
  %v474 = vmul.f32 1.0, %v473
  %v475 = vadd.f32 %v391, %v323
  %v476 = vadd.f32 %v393, %v323
  %v477 = vmul.f32 %v419, %v475
  %v478 = vmul.f32 %v434, %v476
  %v479 = vadd.f32 %v348, %v477
  %v480 = vadd.f32 %v351, %v478
  %v481 = vtanh.pop %v479
  %v482 = vtanh.pop %v480
  %v483 = vsub.f32 1.0, %v459
  %v484 = vsub.f32 1.0, %v474
  %v485 = vmul.f32 %v483, %v481
  %v486 = vmul.f32 %v484, %v482
  %v487 = vmul.f32 %v459, %v339
  %v488 = vmul.f32 %v474, %v340
  %v489 = vadd.f32 %v485, %v487
  %v490 = vadd.f32 %v486, %v488
  %s491 = scalar_lea.vmem %s0, 48
  %v492 = vld [vmem:[%s491] sm:$0xff]
  %v493 = vld [vmem:[%s491 + $0x8] sm:$0xf]
  %v494 = vld [vmem:[%s491 + $0xc] sm:$0xff]
  %v495 = vld [vmem:[%s491 + $0x14] sm:$0xf]
  %v496 = vunpack.c.l.bf16 %v492
  %v497 = vunpack.c.h.bf16 %v492
  %v498 = vunpack.c.l.bf16 %v493
  %v499 = vunpack.c.l.bf16 %v494
  %v500 = vunpack.c.h.bf16 %v494
  %v501 = vunpack.c.l.bf16 %v495
  %v502 = vpack.c.bf16 %v490, %v489
  %503 = vmatpush.bf16.msra.mxu0 %v173
  %504 = vmatpush.bf16.msra.mxu0 %v170
  %505 = vmatpush.bf16.msra.mxu0 %v167
  %506 = vmatpush.bf16.msra.mxu0 %v164
  %507 = vmatpush.bf16.msra.mxu0 %v161
  %508 = vmatpush.bf16.msra.mxu0 %v158
  %509 = vmatpush.bf16.msra.mxu0 %v155
  %510 = vmatpush.bf16.msra.mxu0 %v152
  %511 = vmatmul.bf16.gmra.mxu0 %v502
  %v512 = vpop.f32.mrf.mxu0
  %v513 = vadd.f32 0.0, %v512
  %v514 = vpop.f32.mrf.mxu0
  %v515 = vadd.f32 0.0, %v514
  %516 = vdwg.mxu0
  %517 = vmatpush.bf16.msra.mxu0 %v174
  %518 = vmatpush.bf16.msra.mxu0 %v171
  %519 = vmatpush.bf16.msra.mxu0 %v168
  %520 = vmatpush.bf16.msra.mxu0 %v165
  %521 = vmatpush.bf16.msra.mxu0 %v162
  %522 = vmatpush.bf16.msra.mxu0 %v159
  %523 = vmatpush.bf16.msra.mxu0 %v156
  %524 = vmatpush.bf16.msra.mxu0 %v153
  %525 = vmatmul.bf16.gmra.mxu0 %v502
  %v526 = vpop.f32.mrf.mxu0
  %v527 = vadd.f32 0.0, %v526
  %v528 = vpop.f32.mrf.mxu0
  %v529 = vadd.f32 0.0, %v528
  %530 = vdwg.mxu0
  %531 = vmatpush.bf16.msra.mxu0 %v175
  %532 = vmatpush.bf16.msra.mxu0 %v172
  %533 = vmatpush.bf16.msra.mxu0 %v169
  %534 = vmatpush.bf16.msra.mxu0 %v166
  %535 = vmatpush.bf16.msra.mxu0 %v163
  %536 = vmatpush.bf16.msra.mxu0 %v160
  %537 = vmatpush.bf16.msra.mxu0 %v157
  %538 = vmatpush.bf16.msra.mxu0 %v154
  %539 = vmatmul.bf16.gmra.mxu0 %v502
  %v540 = vpop.f32.mrf.mxu0
  %v541 = vadd.f32 0.0, %v540
  %v542 = vpop.f32.mrf.mxu0
  %v543 = vadd.f32 0.0, %v542
  %544 = vdwg.mxu0
  %v545 = vadd.f32 %v496, %v513
  %v546 = vadd.f32 %v499, %v515
  %v547 = vxor.u32 %v545, 2147483648
  %v548 = vxor.u32 %v546, 2147483648
  %v549 = vmul.f32 %v547, 1.442695
  %v550 = vpow.pop %v549
  %v551 = vmul.f32 %v548, 1.442695
  %v552 = vpow.pop %v551
  %v553 = vadd.f32 %v550, 1.0
  %v554 = vadd.f32 %v552, 1.0
  %v555 = vrcp.pop %v553
  %v556 = vmul.f32 %v553, %v555
  %v557 = vsub.f32 1.0, %v556
  %v558 = vmul.f32 %v555, %v557
  %v559 = vadd.f32 %v555, %v558
  %vm560 = vweird.f32 %v553
  %vm561 = vweird.f32 %v555
  %vm562 = vmor %vm560, %vm561
  %v563 = vsel %vm562, %v555, %v559
  %v564 = vand.u32 2147483647, %v553
  %vm565 = vcmp.eq.f32.partialorder %v564, 8.507059e+37
  %v566 = vand.u32 %v553, 2147483648
  %v567 = vor.u32 1.1754944e-38, %v566
  %v568 = vsel %vm565, %v567, %v563
  %v569 = vmul.f32 1.0, %v568
  %v570 = vrcp.pop %v554
  %v571 = vmul.f32 %v554, %v570
  %v572 = vsub.f32 1.0, %v571
  %v573 = vmul.f32 %v570, %v572
  %v574 = vadd.f32 %v570, %v573
  %vm575 = vweird.f32 %v554
  %vm576 = vweird.f32 %v570
  %vm577 = vmor %vm575, %vm576
  %v578 = vsel %vm577, %v570, %v574
  %v579 = vand.u32 2147483647, %v554
  %vm580 = vcmp.eq.f32.partialorder %v579, 8.507059e+37
  %v581 = vand.u32 %v554, 2147483648
  %v582 = vor.u32 1.1754944e-38, %v581
  %v583 = vsel %vm580, %v582, %v578
  %v584 = vmul.f32 1.0, %v583
  %v585 = vadd.f32 %v497, %v527
  %v586 = vadd.f32 %v500, %v529
  %v587 = vxor.u32 %v585, 2147483648
  %v588 = vxor.u32 %v586, 2147483648
  %v589 = vmul.f32 %v587, 1.442695
  %v590 = vpow.pop %v589
  %v591 = vmul.f32 %v588, 1.442695
  %v592 = vpow.pop %v591
  %v593 = vadd.f32 %v590, 1.0
  %v594 = vadd.f32 %v592, 1.0
  %v595 = vrcp.pop %v593
  %v596 = vmul.f32 %v593, %v595
  %v597 = vsub.f32 1.0, %v596
  %v598 = vmul.f32 %v595, %v597
  %v599 = vadd.f32 %v595, %v598
  %vm600 = vweird.f32 %v593
  %vm601 = vweird.f32 %v595
  %vm602 = vmor %vm600, %vm601
  %v603 = vsel %vm602, %v595, %v599
  %v604 = vand.u32 2147483647, %v593
  %vm605 = vcmp.eq.f32.partialorder %v604, 8.507059e+37
  %v606 = vand.u32 %v593, 2147483648
  %v607 = vor.u32 1.1754944e-38, %v606
  %v608 = vsel %vm605, %v607, %v603
  %v609 = vmul.f32 1.0, %v608
  %v610 = vrcp.pop %v594
  %v611 = vmul.f32 %v594, %v610
  %v612 = vsub.f32 1.0, %v611
  %v613 = vmul.f32 %v610, %v612
  %v614 = vadd.f32 %v610, %v613
  %vm615 = vweird.f32 %v594
  %vm616 = vweird.f32 %v610
  %vm617 = vmor %vm615, %vm616
  %v618 = vsel %vm617, %v610, %v614
  %v619 = vand.u32 2147483647, %v594
  %vm620 = vcmp.eq.f32.partialorder %v619, 8.507059e+37
  %v621 = vand.u32 %v594, 2147483648
  %v622 = vor.u32 1.1754944e-38, %v621
  %v623 = vsel %vm620, %v622, %v618
  %v624 = vmul.f32 1.0, %v623
  %v625 = vadd.f32 %v541, %v323
  %v626 = vadd.f32 %v543, %v323
  %v627 = vmul.f32 %v569, %v625
  %v628 = vmul.f32 %v584, %v626
  %v629 = vadd.f32 %v498, %v627
  %v630 = vadd.f32 %v501, %v628
  %v631 = vtanh.pop %v629
  %v632 = vtanh.pop %v630
  %v633 = vsub.f32 1.0, %v609
  %v634 = vsub.f32 1.0, %v624
  %v635 = vmul.f32 %v633, %v631
  %v636 = vmul.f32 %v634, %v632
  %v637 = vmul.f32 %v609, %v489
  %v638 = vmul.f32 %v624, %v490
  %v639 = vadd.f32 %v635, %v637
  %v640 = vadd.f32 %v636, %v638
  %s641 = scalar_lea.vmem %s0, 72
  %v642 = vld [vmem:[%s641] sm:$0xff]
  %v643 = vld [vmem:[%s641 + $0x8] sm:$0xf]
  %v644 = vld [vmem:[%s641 + $0xc] sm:$0xff]
  %v645 = vld [vmem:[%s641 + $0x14] sm:$0xf]
  %v646 = vunpack.c.l.bf16 %v642
  %v647 = vunpack.c.h.bf16 %v642
  %v648 = vunpack.c.l.bf16 %v643
  %v649 = vunpack.c.l.bf16 %v644
  %v650 = vunpack.c.h.bf16 %v644
  %v651 = vunpack.c.l.bf16 %v645
  %v652 = vpack.c.bf16 %v640, %v639
  %653 = vmatpush.bf16.msra.mxu0 %v173
  %654 = vmatpush.bf16.msra.mxu0 %v170
  %655 = vmatpush.bf16.msra.mxu0 %v167
  %656 = vmatpush.bf16.msra.mxu0 %v164
  %657 = vmatpush.bf16.msra.mxu0 %v161
  %658 = vmatpush.bf16.msra.mxu0 %v158
  %659 = vmatpush.bf16.msra.mxu0 %v155
  %660 = vmatpush.bf16.msra.mxu0 %v152
  %661 = vmatmul.bf16.gmra.mxu0 %v652
  %v662 = vpop.f32.mrf.mxu0
  %v663 = vadd.f32 0.0, %v662
  %v664 = vpop.f32.mrf.mxu0
  %v665 = vadd.f32 0.0, %v664
  %666 = vdwg.mxu0
  %667 = vmatpush.bf16.msra.mxu0 %v174
  %668 = vmatpush.bf16.msra.mxu0 %v171
  %669 = vmatpush.bf16.msra.mxu0 %v168
  %670 = vmatpush.bf16.msra.mxu0 %v165
  %671 = vmatpush.bf16.msra.mxu0 %v162
  %672 = vmatpush.bf16.msra.mxu0 %v159
  %673 = vmatpush.bf16.msra.mxu0 %v156
  %674 = vmatpush.bf16.msra.mxu0 %v153
  %675 = vmatmul.bf16.gmra.mxu0 %v652
  %v676 = vpop.f32.mrf.mxu0
  %v677 = vadd.f32 0.0, %v676
  %v678 = vpop.f32.mrf.mxu0
  %v679 = vadd.f32 0.0, %v678
  %680 = vdwg.mxu0
  %681 = vmatpush.bf16.msra.mxu0 %v175
  %682 = vmatpush.bf16.msra.mxu0 %v172
  %683 = vmatpush.bf16.msra.mxu0 %v169
  %684 = vmatpush.bf16.msra.mxu0 %v166
  %685 = vmatpush.bf16.msra.mxu0 %v163
  %686 = vmatpush.bf16.msra.mxu0 %v160
  %687 = vmatpush.bf16.msra.mxu0 %v157
  %688 = vmatpush.bf16.msra.mxu0 %v154
  %689 = vmatmul.bf16.gmra.mxu0 %v652
  %v690 = vpop.f32.mrf.mxu0
  %v691 = vadd.f32 0.0, %v690
  %v692 = vpop.f32.mrf.mxu0
  %v693 = vadd.f32 0.0, %v692
  %694 = vdwg.mxu0
  %v695 = vadd.f32 %v646, %v663
  %v696 = vadd.f32 %v649, %v665
  %v697 = vxor.u32 %v695, 2147483648
  %v698 = vxor.u32 %v696, 2147483648
  %v699 = vmul.f32 %v697, 1.442695
  %v700 = vpow.pop %v699
  %v701 = vmul.f32 %v698, 1.442695
  %v702 = vpow.pop %v701
  %v703 = vadd.f32 %v700, 1.0
  %v704 = vadd.f32 %v702, 1.0
  %v705 = vrcp.pop %v703
  %v706 = vmul.f32 %v703, %v705
  %v707 = vsub.f32 1.0, %v706
  %v708 = vmul.f32 %v705, %v707
  %v709 = vadd.f32 %v705, %v708
  %vm710 = vweird.f32 %v703
  %vm711 = vweird.f32 %v705
  %vm712 = vmor %vm710, %vm711
  %v713 = vsel %vm712, %v705, %v709
  %v714 = vand.u32 2147483647, %v703
  %vm715 = vcmp.eq.f32.partialorder %v714, 8.507059e+37
  %v716 = vand.u32 %v703, 2147483648
  %v717 = vor.u32 1.1754944e-38, %v716
  %v718 = vsel %vm715, %v717, %v713
  %v719 = vmul.f32 1.0, %v718
  %v720 = vrcp.pop %v704
  %v721 = vmul.f32 %v704, %v720
  %v722 = vsub.f32 1.0, %v721
  %v723 = vmul.f32 %v720, %v722
  %v724 = vadd.f32 %v720, %v723
  %vm725 = vweird.f32 %v704
  %vm726 = vweird.f32 %v720
  %vm727 = vmor %vm725, %vm726
  %v728 = vsel %vm727, %v720, %v724
  %v729 = vand.u32 2147483647, %v704
  %vm730 = vcmp.eq.f32.partialorder %v729, 8.507059e+37
  %v731 = vand.u32 %v704, 2147483648
  %v732 = vor.u32 1.1754944e-38, %v731
  %v733 = vsel %vm730, %v732, %v728
  %v734 = vmul.f32 1.0, %v733
  %v735 = vadd.f32 %v647, %v677
  %v736 = vadd.f32 %v650, %v679
  %v737 = vxor.u32 %v735, 2147483648
  %v738 = vxor.u32 %v736, 2147483648
  %v739 = vmul.f32 %v737, 1.442695
  %v740 = vpow.pop %v739
  %v741 = vmul.f32 %v738, 1.442695
  %v742 = vpow.pop %v741
  %v743 = vadd.f32 %v740, 1.0
  %v744 = vadd.f32 %v742, 1.0
  %v745 = vrcp.pop %v743
  %v746 = vmul.f32 %v743, %v745
  %v747 = vsub.f32 1.0, %v746
  %v748 = vmul.f32 %v745, %v747
  %v749 = vadd.f32 %v745, %v748
  %vm750 = vweird.f32 %v743
  %vm751 = vweird.f32 %v745
  %vm752 = vmor %vm750, %vm751
  %v753 = vsel %vm752, %v745, %v749
  %v754 = vand.u32 2147483647, %v743
  %vm755 = vcmp.eq.f32.partialorder %v754, 8.507059e+37
  %v756 = vand.u32 %v743, 2147483648
  %v757 = vor.u32 1.1754944e-38, %v756
  %v758 = vsel %vm755, %v757, %v753
  %v759 = vmul.f32 1.0, %v758
  %v760 = vrcp.pop %v744
  %v761 = vmul.f32 %v744, %v760
  %v762 = vsub.f32 1.0, %v761
  %v763 = vmul.f32 %v760, %v762
  %v764 = vadd.f32 %v760, %v763
  %vm765 = vweird.f32 %v744
  %vm766 = vweird.f32 %v760
  %vm767 = vmor %vm765, %vm766
  %v768 = vsel %vm767, %v760, %v764
  %v769 = vand.u32 2147483647, %v744
  %vm770 = vcmp.eq.f32.partialorder %v769, 8.507059e+37
  %v771 = vand.u32 %v744, 2147483648
  %v772 = vor.u32 1.1754944e-38, %v771
  %v773 = vsel %vm770, %v772, %v768
  %v774 = vmul.f32 1.0, %v773
  %v775 = vadd.f32 %v691, %v323
  %v776 = vadd.f32 %v693, %v323
  %v777 = vmul.f32 %v719, %v775
  %v778 = vmul.f32 %v734, %v776
  %v779 = vadd.f32 %v648, %v777
  %v780 = vadd.f32 %v651, %v778
  %v781 = vtanh.pop %v779
  %v782 = vtanh.pop %v780
  %v783 = vsub.f32 1.0, %v759
  %v784 = vsub.f32 1.0, %v774
  %v785 = vmul.f32 %v783, %v781
  %v786 = vmul.f32 %v784, %v782
  %v787 = vmul.f32 %v759, %v639
  %v788 = vmul.f32 %v774, %v640
  %v789 = vadd.f32 %v785, %v787
  %v790 = vadd.f32 %v786, %v788
  %s791 = scalar_lea.vmem %s0, 96
  %v792 = vld [vmem:[%s791] sm:$0xff]
  %v793 = vld [vmem:[%s791 + $0x8] sm:$0xf]
  %v794 = vld [vmem:[%s791 + $0xc] sm:$0xff]
  %v795 = vld [vmem:[%s791 + $0x14] sm:$0xf]
  %v796 = vunpack.c.l.bf16 %v792
  %v797 = vunpack.c.h.bf16 %v792
  %v798 = vunpack.c.l.bf16 %v793
  %v799 = vunpack.c.l.bf16 %v794
  %v800 = vunpack.c.h.bf16 %v794
  %v801 = vunpack.c.l.bf16 %v795
  %v802 = vpack.c.bf16 %v790, %v789
  %803 = vmatpush.bf16.msra.mxu0 %v173
  %804 = vmatpush.bf16.msra.mxu0 %v170
  %805 = vmatpush.bf16.msra.mxu0 %v167
  %806 = vmatpush.bf16.msra.mxu0 %v164
  %807 = vmatpush.bf16.msra.mxu0 %v161
  %808 = vmatpush.bf16.msra.mxu0 %v158
  %809 = vmatpush.bf16.msra.mxu0 %v155
  %810 = vmatpush.bf16.msra.mxu0 %v152
  %811 = vmatmul.bf16.gmra.mxu0 %v802
  %v812 = vpop.f32.mrf.mxu0
  %v813 = vadd.f32 0.0, %v812
  %v814 = vpop.f32.mrf.mxu0
  %v815 = vadd.f32 0.0, %v814
  %816 = vdwg.mxu0
  %817 = vmatpush.bf16.msra.mxu0 %v174
  %818 = vmatpush.bf16.msra.mxu0 %v171
  %819 = vmatpush.bf16.msra.mxu0 %v168
  %820 = vmatpush.bf16.msra.mxu0 %v165
  %821 = vmatpush.bf16.msra.mxu0 %v162
  %822 = vmatpush.bf16.msra.mxu0 %v159
  %823 = vmatpush.bf16.msra.mxu0 %v156
  %824 = vmatpush.bf16.msra.mxu0 %v153
  %825 = vmatmul.bf16.gmra.mxu0 %v802
  %v826 = vpop.f32.mrf.mxu0
  %v827 = vadd.f32 0.0, %v826
  %v828 = vpop.f32.mrf.mxu0
  %v829 = vadd.f32 0.0, %v828
  %830 = vdwg.mxu0
  %831 = vmatpush.bf16.msra.mxu0 %v175
  %832 = vmatpush.bf16.msra.mxu0 %v172
  %833 = vmatpush.bf16.msra.mxu0 %v169
  %834 = vmatpush.bf16.msra.mxu0 %v166
  %835 = vmatpush.bf16.msra.mxu0 %v163
  %836 = vmatpush.bf16.msra.mxu0 %v160
  %837 = vmatpush.bf16.msra.mxu0 %v157
  %838 = vmatpush.bf16.msra.mxu0 %v154
  %839 = vmatmul.bf16.gmra.mxu0 %v802
  %v840 = vpop.f32.mrf.mxu0
  %v841 = vadd.f32 0.0, %v840
  %v842 = vpop.f32.mrf.mxu0
  %v843 = vadd.f32 0.0, %v842
  %844 = vdwg.mxu0
  %v845 = vadd.f32 %v796, %v813
  %v846 = vadd.f32 %v799, %v815
  %v847 = vxor.u32 %v845, 2147483648
  %v848 = vxor.u32 %v846, 2147483648
  %v849 = vmul.f32 %v847, 1.442695
  %v850 = vpow.pop %v849
  %v851 = vmul.f32 %v848, 1.442695
  %v852 = vpow.pop %v851
  %v853 = vadd.f32 %v850, 1.0
  %v854 = vadd.f32 %v852, 1.0
  %v855 = vrcp.pop %v853
  %v856 = vmul.f32 %v853, %v855
  %v857 = vsub.f32 1.0, %v856
  %v858 = vmul.f32 %v855, %v857
  %v859 = vadd.f32 %v855, %v858
  %vm860 = vweird.f32 %v853
  %vm861 = vweird.f32 %v855
  %vm862 = vmor %vm860, %vm861
  %v863 = vsel %vm862, %v855, %v859
  %v864 = vand.u32 2147483647, %v853
  %vm865 = vcmp.eq.f32.partialorder %v864, 8.507059e+37
  %v866 = vand.u32 %v853, 2147483648
  %v867 = vor.u32 1.1754944e-38, %v866
  %v868 = vsel %vm865, %v867, %v863
  %v869 = vmul.f32 1.0, %v868
  %v870 = vrcp.pop %v854
  %v871 = vmul.f32 %v854, %v870
  %v872 = vsub.f32 1.0, %v871
  %v873 = vmul.f32 %v870, %v872
  %v874 = vadd.f32 %v870, %v873
  %vm875 = vweird.f32 %v854
  %vm876 = vweird.f32 %v870
  %vm877 = vmor %vm875, %vm876
  %v878 = vsel %vm877, %v870, %v874
  %v879 = vand.u32 2147483647, %v854
  %vm880 = vcmp.eq.f32.partialorder %v879, 8.507059e+37
  %v881 = vand.u32 %v854, 2147483648
  %v882 = vor.u32 1.1754944e-38, %v881
  %v883 = vsel %vm880, %v882, %v878
  %v884 = vmul.f32 1.0, %v883
  %v885 = vadd.f32 %v797, %v827
  %v886 = vadd.f32 %v800, %v829
  %v887 = vxor.u32 %v885, 2147483648
  %v888 = vxor.u32 %v886, 2147483648
  %v889 = vmul.f32 %v887, 1.442695
  %v890 = vpow.pop %v889
  %v891 = vmul.f32 %v888, 1.442695
  %v892 = vpow.pop %v891
  %v893 = vadd.f32 %v890, 1.0
  %v894 = vadd.f32 %v892, 1.0
  %v895 = vrcp.pop %v893
  %v896 = vmul.f32 %v893, %v895
  %v897 = vsub.f32 1.0, %v896
  %v898 = vmul.f32 %v895, %v897
  %v899 = vadd.f32 %v895, %v898
  %vm900 = vweird.f32 %v893
  %vm901 = vweird.f32 %v895
  %vm902 = vmor %vm900, %vm901
  %v903 = vsel %vm902, %v895, %v899
  %v904 = vand.u32 2147483647, %v893
  %vm905 = vcmp.eq.f32.partialorder %v904, 8.507059e+37
  %v906 = vand.u32 %v893, 2147483648
  %v907 = vor.u32 1.1754944e-38, %v906
  %v908 = vsel %vm905, %v907, %v903
  %v909 = vmul.f32 1.0, %v908
  %v910 = vrcp.pop %v894
  %v911 = vmul.f32 %v894, %v910
  %v912 = vsub.f32 1.0, %v911
  %v913 = vmul.f32 %v910, %v912
  %v914 = vadd.f32 %v910, %v913
  %vm915 = vweird.f32 %v894
  %vm916 = vweird.f32 %v910
  %vm917 = vmor %vm915, %vm916
  %v918 = vsel %vm917, %v910, %v914
  %v919 = vand.u32 2147483647, %v894
  %vm920 = vcmp.eq.f32.partialorder %v919, 8.507059e+37
  %v921 = vand.u32 %v894, 2147483648
  %v922 = vor.u32 1.1754944e-38, %v921
  %v923 = vsel %vm920, %v922, %v918
  %v924 = vmul.f32 1.0, %v923
  %v925 = vadd.f32 %v841, %v323
  %v926 = vadd.f32 %v843, %v323
  %v927 = vmul.f32 %v869, %v925
  %v928 = vmul.f32 %v884, %v926
  %v929 = vadd.f32 %v798, %v927
  %v930 = vadd.f32 %v801, %v928
  %v931 = vtanh.pop %v929
  %v932 = vtanh.pop %v930
  %v933 = vsub.f32 1.0, %v909
  %v934 = vsub.f32 1.0, %v924
  %v935 = vmul.f32 %v933, %v931
  %v936 = vmul.f32 %v934, %v932
  %v937 = vmul.f32 %v909, %v789
  %v938 = vmul.f32 %v924, %v790
  %v939 = vadd.f32 %v935, %v937
  %v940 = vadd.f32 %v936, %v938
  %s941 = scalar_lea.vmem %s0, 120
  %v942 = vld [vmem:[%s941] sm:$0xff]
  %v943 = vld [vmem:[%s941 + $0x8] sm:$0xf]
  %v944 = vld [vmem:[%s941 + $0xc] sm:$0xff]
  %v945 = vld [vmem:[%s941 + $0x14] sm:$0xf]
  %v946 = vunpack.c.l.bf16 %v942
  %v947 = vunpack.c.h.bf16 %v942
  %v948 = vunpack.c.l.bf16 %v943
  %v949 = vunpack.c.l.bf16 %v944
  %v950 = vunpack.c.h.bf16 %v944
  %v951 = vunpack.c.l.bf16 %v945
  %v952 = vpack.c.bf16 %v940, %v939
  %953 = vmatpush.bf16.msra.mxu0 %v173
  %954 = vmatpush.bf16.msra.mxu0 %v170
  %955 = vmatpush.bf16.msra.mxu0 %v167
  %956 = vmatpush.bf16.msra.mxu0 %v164
  %957 = vmatpush.bf16.msra.mxu0 %v161
  %958 = vmatpush.bf16.msra.mxu0 %v158
  %959 = vmatpush.bf16.msra.mxu0 %v155
  %960 = vmatpush.bf16.msra.mxu0 %v152
  %961 = vmatmul.bf16.gmra.mxu0 %v952
  %v962 = vpop.f32.mrf.mxu0
  %v963 = vadd.f32 0.0, %v962
  %v964 = vpop.f32.mrf.mxu0
  %v965 = vadd.f32 0.0, %v964
  %966 = vdwg.mxu0
  %967 = vmatpush.bf16.msra.mxu0 %v174
  %968 = vmatpush.bf16.msra.mxu0 %v171
  %969 = vmatpush.bf16.msra.mxu0 %v168
  %970 = vmatpush.bf16.msra.mxu0 %v165
  %971 = vmatpush.bf16.msra.mxu0 %v162
  %972 = vmatpush.bf16.msra.mxu0 %v159
  %973 = vmatpush.bf16.msra.mxu0 %v156
  %974 = vmatpush.bf16.msra.mxu0 %v153
  %975 = vmatmul.bf16.gmra.mxu0 %v952
  %v976 = vpop.f32.mrf.mxu0
  %v977 = vadd.f32 0.0, %v976
  %v978 = vpop.f32.mrf.mxu0
  %v979 = vadd.f32 0.0, %v978
  %980 = vdwg.mxu0
  %981 = vmatpush.bf16.msra.mxu0 %v175
  %982 = vmatpush.bf16.msra.mxu0 %v172
  %983 = vmatpush.bf16.msra.mxu0 %v169
  %984 = vmatpush.bf16.msra.mxu0 %v166
  %985 = vmatpush.bf16.msra.mxu0 %v163
  %986 = vmatpush.bf16.msra.mxu0 %v160
  %987 = vmatpush.bf16.msra.mxu0 %v157
  %988 = vmatpush.bf16.msra.mxu0 %v154
  %989 = vmatmul.bf16.gmra.mxu0 %v952
  %v990 = vpop.f32.mrf.mxu0
  %v991 = vadd.f32 0.0, %v990
  %v992 = vpop.f32.mrf.mxu0
  %v993 = vadd.f32 0.0, %v992
  %994 = vdwg.mxu0
  %v995 = vadd.f32 %v946, %v963
  %v996 = vadd.f32 %v949, %v965
  %v997 = vxor.u32 %v995, 2147483648
  %v998 = vxor.u32 %v996, 2147483648
  %v999 = vmul.f32 %v997, 1.442695
  %v1000 = vpow.pop %v999
  %v1001 = vmul.f32 %v998, 1.442695
  %v1002 = vpow.pop %v1001
  %v1003 = vadd.f32 %v1000, 1.0
  %v1004 = vadd.f32 %v1002, 1.0
  %v1005 = vrcp.pop %v1003
  %v1006 = vmul.f32 %v1003, %v1005
  %v1007 = vsub.f32 1.0, %v1006
  %v1008 = vmul.f32 %v1005, %v1007
  %v1009 = vadd.f32 %v1005, %v1008
  %vm1010 = vweird.f32 %v1003
  %vm1011 = vweird.f32 %v1005
  %vm1012 = vmor %vm1010, %vm1011
  %v1013 = vsel %vm1012, %v1005, %v1009
  %v1014 = vand.u32 2147483647, %v1003
  %vm1015 = vcmp.eq.f32.partialorder %v1014, 8.507059e+37
  %v1016 = vand.u32 %v1003, 2147483648
  %v1017 = vor.u32 1.1754944e-38, %v1016
  %v1018 = vsel %vm1015, %v1017, %v1013
  %v1019 = vmul.f32 1.0, %v1018
  %v1020 = vrcp.pop %v1004
  %v1021 = vmul.f32 %v1004, %v1020
  %v1022 = vsub.f32 1.0, %v1021
  %v1023 = vmul.f32 %v1020, %v1022
  %v1024 = vadd.f32 %v1020, %v1023
  %vm1025 = vweird.f32 %v1004
  %vm1026 = vweird.f32 %v1020
  %vm1027 = vmor %vm1025, %vm1026
  %v1028 = vsel %vm1027, %v1020, %v1024
  %v1029 = vand.u32 2147483647, %v1004
  %vm1030 = vcmp.eq.f32.partialorder %v1029, 8.507059e+37
  %v1031 = vand.u32 %v1004, 2147483648
  %v1032 = vor.u32 1.1754944e-38, %v1031
  %v1033 = vsel %vm1030, %v1032, %v1028
  %v1034 = vmul.f32 1.0, %v1033
  %v1035 = vadd.f32 %v947, %v977
  %v1036 = vadd.f32 %v950, %v979
  %v1037 = vxor.u32 %v1035, 2147483648
  %v1038 = vxor.u32 %v1036, 2147483648
  %v1039 = vmul.f32 %v1037, 1.442695
  %v1040 = vpow.pop %v1039
  %v1041 = vmul.f32 %v1038, 1.442695
  %v1042 = vpow.pop %v1041
  %v1043 = vadd.f32 %v1040, 1.0
  %v1044 = vadd.f32 %v1042, 1.0
  %v1045 = vrcp.pop %v1043
  %v1046 = vmul.f32 %v1043, %v1045
  %v1047 = vsub.f32 1.0, %v1046
  %v1048 = vmul.f32 %v1045, %v1047
  %v1049 = vadd.f32 %v1045, %v1048
  %vm1050 = vweird.f32 %v1043
  %vm1051 = vweird.f32 %v1045
  %vm1052 = vmor %vm1050, %vm1051
  %v1053 = vsel %vm1052, %v1045, %v1049
  %v1054 = vand.u32 2147483647, %v1043
  %vm1055 = vcmp.eq.f32.partialorder %v1054, 8.507059e+37
  %v1056 = vand.u32 %v1043, 2147483648
  %v1057 = vor.u32 1.1754944e-38, %v1056
  %v1058 = vsel %vm1055, %v1057, %v1053
  %v1059 = vmul.f32 1.0, %v1058
  %v1060 = vrcp.pop %v1044
  %v1061 = vmul.f32 %v1044, %v1060
  %v1062 = vsub.f32 1.0, %v1061
  %v1063 = vmul.f32 %v1060, %v1062
  %v1064 = vadd.f32 %v1060, %v1063
  %vm1065 = vweird.f32 %v1044
  %vm1066 = vweird.f32 %v1060
  %vm1067 = vmor %vm1065, %vm1066
  %v1068 = vsel %vm1067, %v1060, %v1064
  %v1069 = vand.u32 2147483647, %v1044
  %vm1070 = vcmp.eq.f32.partialorder %v1069, 8.507059e+37
  %v1071 = vand.u32 %v1044, 2147483648
  %v1072 = vor.u32 1.1754944e-38, %v1071
  %v1073 = vsel %vm1070, %v1072, %v1068
  %v1074 = vmul.f32 1.0, %v1073
  %v1075 = vadd.f32 %v991, %v323
  %v1076 = vadd.f32 %v993, %v323
  %v1077 = vmul.f32 %v1019, %v1075
  %v1078 = vmul.f32 %v1034, %v1076
  %v1079 = vadd.f32 %v948, %v1077
  %v1080 = vadd.f32 %v951, %v1078
  %v1081 = vtanh.pop %v1079
  %v1082 = vtanh.pop %v1080
  %v1083 = vsub.f32 1.0, %v1059
  %v1084 = vsub.f32 1.0, %v1074
  %v1085 = vmul.f32 %v1083, %v1081
  %v1086 = vmul.f32 %v1084, %v1082
  %v1087 = vmul.f32 %v1059, %v939
  %v1088 = vmul.f32 %v1074, %v940
  %v1089 = vadd.f32 %v1085, %v1087
  %v1090 = vadd.f32 %v1086, %v1088
  %s1091 = scalar_lea.vmem %s0, 144
  %v1092 = vld [vmem:[%s1091] sm:$0xff]
  %v1093 = vld [vmem:[%s1091 + $0x8] sm:$0xf]
  %v1094 = vld [vmem:[%s1091 + $0xc] sm:$0xff]
  %v1095 = vld [vmem:[%s1091 + $0x14] sm:$0xf]
  %v1096 = vunpack.c.l.bf16 %v1092
  %v1097 = vunpack.c.h.bf16 %v1092
  %v1098 = vunpack.c.l.bf16 %v1093
  %v1099 = vunpack.c.l.bf16 %v1094
  %v1100 = vunpack.c.h.bf16 %v1094
  %v1101 = vunpack.c.l.bf16 %v1095
  %v1102 = vpack.c.bf16 %v1090, %v1089
  %1103 = vmatpush.bf16.msra.mxu0 %v173
  %1104 = vmatpush.bf16.msra.mxu0 %v170
  %1105 = vmatpush.bf16.msra.mxu0 %v167
  %1106 = vmatpush.bf16.msra.mxu0 %v164
  %1107 = vmatpush.bf16.msra.mxu0 %v161
  %1108 = vmatpush.bf16.msra.mxu0 %v158
  %1109 = vmatpush.bf16.msra.mxu0 %v155
  %1110 = vmatpush.bf16.msra.mxu0 %v152
  %1111 = vmatmul.bf16.gmra.mxu0 %v1102
  %v1112 = vpop.f32.mrf.mxu0
  %v1113 = vadd.f32 0.0, %v1112
  %v1114 = vpop.f32.mrf.mxu0
  %v1115 = vadd.f32 0.0, %v1114
  %1116 = vdwg.mxu0
  %1117 = vmatpush.bf16.msra.mxu0 %v174
  %1118 = vmatpush.bf16.msra.mxu0 %v171
  %1119 = vmatpush.bf16.msra.mxu0 %v168
  %1120 = vmatpush.bf16.msra.mxu0 %v165
  %1121 = vmatpush.bf16.msra.mxu0 %v162
  %1122 = vmatpush.bf16.msra.mxu0 %v159
  %1123 = vmatpush.bf16.msra.mxu0 %v156
  %1124 = vmatpush.bf16.msra.mxu0 %v153
  %1125 = vmatmul.bf16.gmra.mxu0 %v1102
  %v1126 = vpop.f32.mrf.mxu0
  %v1127 = vadd.f32 0.0, %v1126
  %v1128 = vpop.f32.mrf.mxu0
  %v1129 = vadd.f32 0.0, %v1128
  %1130 = vdwg.mxu0
  %1131 = vmatpush.bf16.msra.mxu0 %v175
  %1132 = vmatpush.bf16.msra.mxu0 %v172
  %1133 = vmatpush.bf16.msra.mxu0 %v169
  %1134 = vmatpush.bf16.msra.mxu0 %v166
  %1135 = vmatpush.bf16.msra.mxu0 %v163
  %1136 = vmatpush.bf16.msra.mxu0 %v160
  %1137 = vmatpush.bf16.msra.mxu0 %v157
  %1138 = vmatpush.bf16.msra.mxu0 %v154
  %1139 = vmatmul.bf16.gmra.mxu0 %v1102
  %v1140 = vpop.f32.mrf.mxu0
  %v1141 = vadd.f32 0.0, %v1140
  %v1142 = vpop.f32.mrf.mxu0
  %v1143 = vadd.f32 0.0, %v1142
  %1144 = vdwg.mxu0
  %v1145 = vadd.f32 %v1096, %v1113
  %v1146 = vadd.f32 %v1099, %v1115
  %v1147 = vxor.u32 %v1145, 2147483648
  %v1148 = vxor.u32 %v1146, 2147483648
  %v1149 = vmul.f32 %v1147, 1.442695
  %v1150 = vpow.pop %v1149
  %v1151 = vmul.f32 %v1148, 1.442695
  %v1152 = vpow.pop %v1151
  %v1153 = vadd.f32 %v1150, 1.0
  %v1154 = vadd.f32 %v1152, 1.0
  %v1155 = vrcp.pop %v1153
  %v1156 = vmul.f32 %v1153, %v1155
  %v1157 = vsub.f32 1.0, %v1156
  %v1158 = vmul.f32 %v1155, %v1157
  %v1159 = vadd.f32 %v1155, %v1158
  %vm1160 = vweird.f32 %v1153
  %vm1161 = vweird.f32 %v1155
  %vm1162 = vmor %vm1160, %vm1161
  %v1163 = vsel %vm1162, %v1155, %v1159
  %v1164 = vand.u32 2147483647, %v1153
  %vm1165 = vcmp.eq.f32.partialorder %v1164, 8.507059e+37
  %v1166 = vand.u32 %v1153, 2147483648
  %v1167 = vor.u32 1.1754944e-38, %v1166
  %v1168 = vsel %vm1165, %v1167, %v1163
  %v1169 = vmul.f32 1.0, %v1168
  %v1170 = vrcp.pop %v1154
  %v1171 = vmul.f32 %v1154, %v1170
  %v1172 = vsub.f32 1.0, %v1171
  %v1173 = vmul.f32 %v1170, %v1172
  %v1174 = vadd.f32 %v1170, %v1173
  %vm1175 = vweird.f32 %v1154
  %vm1176 = vweird.f32 %v1170
  %vm1177 = vmor %vm1175, %vm1176
  %v1178 = vsel %vm1177, %v1170, %v1174
  %v1179 = vand.u32 2147483647, %v1154
  %vm1180 = vcmp.eq.f32.partialorder %v1179, 8.507059e+37
  %v1181 = vand.u32 %v1154, 2147483648
  %v1182 = vor.u32 1.1754944e-38, %v1181
  %v1183 = vsel %vm1180, %v1182, %v1178
  %v1184 = vmul.f32 1.0, %v1183
  %v1185 = vadd.f32 %v1097, %v1127
  %v1186 = vadd.f32 %v1100, %v1129
  %v1187 = vxor.u32 %v1185, 2147483648
  %v1188 = vxor.u32 %v1186, 2147483648
  %v1189 = vmul.f32 %v1187, 1.442695
  %v1190 = vpow.pop %v1189
  %v1191 = vmul.f32 %v1188, 1.442695
  %v1192 = vpow.pop %v1191
  %v1193 = vadd.f32 %v1190, 1.0
  %v1194 = vadd.f32 %v1192, 1.0
  %v1195 = vrcp.pop %v1193
  %v1196 = vmul.f32 %v1193, %v1195
  %v1197 = vsub.f32 1.0, %v1196
  %v1198 = vmul.f32 %v1195, %v1197
  %v1199 = vadd.f32 %v1195, %v1198
  %vm1200 = vweird.f32 %v1193
  %vm1201 = vweird.f32 %v1195
  %vm1202 = vmor %vm1200, %vm1201
  %v1203 = vsel %vm1202, %v1195, %v1199
  %v1204 = vand.u32 2147483647, %v1193
  %vm1205 = vcmp.eq.f32.partialorder %v1204, 8.507059e+37
  %v1206 = vand.u32 %v1193, 2147483648
  %v1207 = vor.u32 1.1754944e-38, %v1206
  %v1208 = vsel %vm1205, %v1207, %v1203
  %v1209 = vmul.f32 1.0, %v1208
  %v1210 = vrcp.pop %v1194
  %v1211 = vmul.f32 %v1194, %v1210
  %v1212 = vsub.f32 1.0, %v1211
  %v1213 = vmul.f32 %v1210, %v1212
  %v1214 = vadd.f32 %v1210, %v1213
  %vm1215 = vweird.f32 %v1194
  %vm1216 = vweird.f32 %v1210
  %vm1217 = vmor %vm1215, %vm1216
  %v1218 = vsel %vm1217, %v1210, %v1214
  %v1219 = vand.u32 2147483647, %v1194
  %vm1220 = vcmp.eq.f32.partialorder %v1219, 8.507059e+37
  %v1221 = vand.u32 %v1194, 2147483648
  %v1222 = vor.u32 1.1754944e-38, %v1221
  %v1223 = vsel %vm1220, %v1222, %v1218
  %v1224 = vmul.f32 1.0, %v1223
  %v1225 = vadd.f32 %v1141, %v323
  %v1226 = vadd.f32 %v1143, %v323
  %v1227 = vmul.f32 %v1169, %v1225
  %v1228 = vmul.f32 %v1184, %v1226
  %v1229 = vadd.f32 %v1098, %v1227
  %v1230 = vadd.f32 %v1101, %v1228
  %v1231 = vtanh.pop %v1229
  %v1232 = vtanh.pop %v1230
  %v1233 = vsub.f32 1.0, %v1209
  %v1234 = vsub.f32 1.0, %v1224
  %v1235 = vmul.f32 %v1233, %v1231
  %v1236 = vmul.f32 %v1234, %v1232
  %v1237 = vmul.f32 %v1209, %v1089
  %v1238 = vmul.f32 %v1224, %v1090
  %v1239 = vadd.f32 %v1235, %v1237
  %v1240 = vadd.f32 %v1236, %v1238
  %s1241 = scalar_lea.vmem %s0, 168
  %v1242 = vld [vmem:[%s1241] sm:$0xff]
  %v1243 = vld [vmem:[%s1241 + $0x8] sm:$0xf]
  %v1244 = vld [vmem:[%s1241 + $0xc] sm:$0xff]
  %v1245 = vld [vmem:[%s1241 + $0x14] sm:$0xf]
  %v1246 = vunpack.c.l.bf16 %v1242
  %v1247 = vunpack.c.h.bf16 %v1242
  %v1248 = vunpack.c.l.bf16 %v1243
  %v1249 = vunpack.c.l.bf16 %v1244
  %v1250 = vunpack.c.h.bf16 %v1244
  %v1251 = vunpack.c.l.bf16 %v1245
  %v1252 = vpack.c.bf16 %v1240, %v1239
  %1253 = vmatpush.bf16.msra.mxu0 %v173
  %1254 = vmatpush.bf16.msra.mxu0 %v170
  %1255 = vmatpush.bf16.msra.mxu0 %v167
  %1256 = vmatpush.bf16.msra.mxu0 %v164
  %1257 = vmatpush.bf16.msra.mxu0 %v161
  %1258 = vmatpush.bf16.msra.mxu0 %v158
  %1259 = vmatpush.bf16.msra.mxu0 %v155
  %1260 = vmatpush.bf16.msra.mxu0 %v152
  %1261 = vmatmul.bf16.gmra.mxu0 %v1252
  %v1262 = vpop.f32.mrf.mxu0
  %v1263 = vadd.f32 0.0, %v1262
  %v1264 = vpop.f32.mrf.mxu0
  %v1265 = vadd.f32 0.0, %v1264
  %1266 = vdwg.mxu0
  %1267 = vmatpush.bf16.msra.mxu0 %v174
  %1268 = vmatpush.bf16.msra.mxu0 %v171
  %1269 = vmatpush.bf16.msra.mxu0 %v168
  %1270 = vmatpush.bf16.msra.mxu0 %v165
  %1271 = vmatpush.bf16.msra.mxu0 %v162
  %1272 = vmatpush.bf16.msra.mxu0 %v159
  %1273 = vmatpush.bf16.msra.mxu0 %v156
  %1274 = vmatpush.bf16.msra.mxu0 %v153
  %1275 = vmatmul.bf16.gmra.mxu0 %v1252
  %v1276 = vpop.f32.mrf.mxu0
  %v1277 = vadd.f32 0.0, %v1276
  %v1278 = vpop.f32.mrf.mxu0
  %v1279 = vadd.f32 0.0, %v1278
  %1280 = vdwg.mxu0
  %1281 = vmatpush.bf16.msra.mxu0 %v175
  %1282 = vmatpush.bf16.msra.mxu0 %v172
  %1283 = vmatpush.bf16.msra.mxu0 %v169
  %1284 = vmatpush.bf16.msra.mxu0 %v166
  %1285 = vmatpush.bf16.msra.mxu0 %v163
  %1286 = vmatpush.bf16.msra.mxu0 %v160
  %1287 = vmatpush.bf16.msra.mxu0 %v157
  %1288 = vmatpush.bf16.msra.mxu0 %v154
  %1289 = vmatmul.bf16.gmra.mxu0 %v1252
  %v1290 = vpop.f32.mrf.mxu0
  %v1291 = vadd.f32 0.0, %v1290
  %v1292 = vpop.f32.mrf.mxu0
  %v1293 = vadd.f32 0.0, %v1292
  %1294 = vdwg.mxu0
  %v1295 = vadd.f32 %v1246, %v1263
  %v1296 = vadd.f32 %v1249, %v1265
  %v1297 = vxor.u32 %v1295, 2147483648
  %v1298 = vxor.u32 %v1296, 2147483648
  %v1299 = vmul.f32 %v1297, 1.442695
  %v1300 = vpow.pop %v1299
  %v1301 = vmul.f32 %v1298, 1.442695
  %v1302 = vpow.pop %v1301
  %v1303 = vadd.f32 %v1300, 1.0
  %v1304 = vadd.f32 %v1302, 1.0
  %v1305 = vrcp.pop %v1303
  %v1306 = vmul.f32 %v1303, %v1305
  %v1307 = vsub.f32 1.0, %v1306
  %v1308 = vmul.f32 %v1305, %v1307
  %v1309 = vadd.f32 %v1305, %v1308
  %vm1310 = vweird.f32 %v1303
  %vm1311 = vweird.f32 %v1305
  %vm1312 = vmor %vm1310, %vm1311
  %v1313 = vsel %vm1312, %v1305, %v1309
  %v1314 = vand.u32 2147483647, %v1303
  %vm1315 = vcmp.eq.f32.partialorder %v1314, 8.507059e+37
  %v1316 = vand.u32 %v1303, 2147483648
  %v1317 = vor.u32 1.1754944e-38, %v1316
  %v1318 = vsel %vm1315, %v1317, %v1313
  %v1319 = vmul.f32 1.0, %v1318
  %v1320 = vrcp.pop %v1304
  %v1321 = vmul.f32 %v1304, %v1320
  %v1322 = vsub.f32 1.0, %v1321
  %v1323 = vmul.f32 %v1320, %v1322
  %v1324 = vadd.f32 %v1320, %v1323
  %vm1325 = vweird.f32 %v1304
  %vm1326 = vweird.f32 %v1320
  %vm1327 = vmor %vm1325, %vm1326
  %v1328 = vsel %vm1327, %v1320, %v1324
  %v1329 = vand.u32 2147483647, %v1304
  %vm1330 = vcmp.eq.f32.partialorder %v1329, 8.507059e+37
  %v1331 = vand.u32 %v1304, 2147483648
  %v1332 = vor.u32 1.1754944e-38, %v1331
  %v1333 = vsel %vm1330, %v1332, %v1328
  %v1334 = vmul.f32 1.0, %v1333
  %v1335 = vadd.f32 %v1247, %v1277
  %v1336 = vadd.f32 %v1250, %v1279
  %v1337 = vxor.u32 %v1335, 2147483648
  %v1338 = vxor.u32 %v1336, 2147483648
  %v1339 = vmul.f32 %v1337, 1.442695
  %v1340 = vpow.pop %v1339
  %v1341 = vmul.f32 %v1338, 1.442695
  %v1342 = vpow.pop %v1341
  %v1343 = vadd.f32 %v1340, 1.0
  %v1344 = vadd.f32 %v1342, 1.0
  %v1345 = vrcp.pop %v1343
  %v1346 = vmul.f32 %v1343, %v1345
  %v1347 = vsub.f32 1.0, %v1346
  %v1348 = vmul.f32 %v1345, %v1347
  %v1349 = vadd.f32 %v1345, %v1348
  %vm1350 = vweird.f32 %v1343
  %vm1351 = vweird.f32 %v1345
  %vm1352 = vmor %vm1350, %vm1351
  %v1353 = vsel %vm1352, %v1345, %v1349
  %v1354 = vand.u32 2147483647, %v1343
  %vm1355 = vcmp.eq.f32.partialorder %v1354, 8.507059e+37
  %v1356 = vand.u32 %v1343, 2147483648
  %v1357 = vor.u32 1.1754944e-38, %v1356
  %v1358 = vsel %vm1355, %v1357, %v1353
  %v1359 = vmul.f32 1.0, %v1358
  %v1360 = vrcp.pop %v1344
  %v1361 = vmul.f32 %v1344, %v1360
  %v1362 = vsub.f32 1.0, %v1361
  %v1363 = vmul.f32 %v1360, %v1362
  %v1364 = vadd.f32 %v1360, %v1363
  %vm1365 = vweird.f32 %v1344
  %vm1366 = vweird.f32 %v1360
  %vm1367 = vmor %vm1365, %vm1366
  %v1368 = vsel %vm1367, %v1360, %v1364
  %v1369 = vand.u32 2147483647, %v1344
  %vm1370 = vcmp.eq.f32.partialorder %v1369, 8.507059e+37
  %v1371 = vand.u32 %v1344, 2147483648
  %v1372 = vor.u32 1.1754944e-38, %v1371
  %v1373 = vsel %vm1370, %v1372, %v1368
  %v1374 = vmul.f32 1.0, %v1373
  %v1375 = vadd.f32 %v1291, %v323
  %v1376 = vadd.f32 %v1293, %v323
  %v1377 = vmul.f32 %v1319, %v1375
  %v1378 = vmul.f32 %v1334, %v1376
  %v1379 = vadd.f32 %v1248, %v1377
  %v1380 = vadd.f32 %v1251, %v1378
  %v1381 = vtanh.pop %v1379
  %v1382 = vtanh.pop %v1380
  %v1383 = vsub.f32 1.0, %v1359
  %v1384 = vsub.f32 1.0, %v1374
  %v1385 = vmul.f32 %v1383, %v1381
  %v1386 = vmul.f32 %v1384, %v1382
  %v1387 = vmul.f32 %v1359, %v1239
  %v1388 = vmul.f32 %v1374, %v1240
  %v1389 = vadd.f32 %v1385, %v1387
  %v1390 = vadd.f32 %v1386, %v1388
  %1391 = vst [vmem:[#allocation2] sm:$0xff] %v1389
  %1392 = vst [vmem:[#allocation2 + $0x8] sm:$0xff] %v1390
  // Predicated region
  $region26: #{rnn_forward.7} parent=0 // pred_check
    %p1393 = pneg %p20
  $region27: #{rnn_forward.7} parent=0 // pred_check_branch
    %1395 = sbr.rel (%p1393) target = $region29
  $region28: #{rnn_forward.7} parent=0 // pred_region
    %v1396 = vpack.c.bf16 %v1390, %v1389
    %v1397 = vld [vmem:[%s3] sm:$0xf]
    %v1398 = vld [vmem:[%s3 + $0x4] sm:$0xf]
    %v1399 = vld [vmem:[%s3 + $0x8] sm:$0xf]
    %v1400 = vld [vmem:[%s3 + $0xc] sm:$0xf]
    %v1401 = vld [vmem:[%s3 + $0x10] sm:$0xf]
    %v1402 = vld [vmem:[%s3 + $0x14] sm:$0xf]
    %v1403 = vld [vmem:[%s3 + $0x18] sm:$0xf]
    %v1404 = vld [vmem:[%s3 + $0x1c] sm:$0xf]
    %v1405 = vld [vmem:[%s3 + $0x20] sm:$0xf]
    %v1406 = vld [vmem:[%s3 + $0x24] sm:$0xf]
    %v1407 = vld [vmem:[%s3 + $0x28] sm:$0xf]
    %v1408 = vld [vmem:[%s3 + $0x2c] sm:$0xf]
    %v1409 = vld [vmem:[%s3 + $0x30] sm:$0xf]
    %v1410 = vld [vmem:[%s3 + $0x34] sm:$0xf]
    %v1411 = vld [vmem:[%s3 + $0x38] sm:$0xf]
    %v1412 = vld [vmem:[%s3 + $0x3c] sm:$0xf]
    %v1413 = vld [vmem:[%s4] sm:$0x1]
    %v1415 = vperm.slane %v1413, 0
    %v1433 = vunpack.c.l.b16 %v1397
    %v1434 = vunpack.c.l.b16 %v1398
    %v1435 = vunpack.c.l.b16 %v1399
    %v1436 = vunpack.c.l.b16 %v1400
    %v1437 = vunpack.c.l.b16 %v1401
    %v1438 = vunpack.c.l.b16 %v1402
    %v1439 = vunpack.c.l.b16 %v1403
    %v1440 = vunpack.c.l.b16 %v1404
    %v1441 = vunpack.c.l.b16 %v1405
    %v1442 = vunpack.c.l.b16 %v1406
    %v1443 = vunpack.c.l.b16 %v1407
    %v1444 = vunpack.c.l.b16 %v1408
    %v1445 = vunpack.c.l.b16 %v1409
    %v1446 = vunpack.c.l.b16 %v1410
    %v1447 = vunpack.c.l.b16 %v1411
    %v1448 = vunpack.c.l.b16 %v1412
    %v1449 = vpack.c.b16 %v1434, %v1433
    %v1450 = vpack.c.b16 %v1436, %v1435
    %v1451 = vpack.c.b16 %v1438, %v1437
    %v1452 = vpack.c.b16 %v1440, %v1439
    %v1453 = vpack.c.b16 %v1442, %v1441
    %v1454 = vpack.c.b16 %v1444, %v1443
    %v1455 = vpack.c.b16 %v1446, %v1445
    %v1456 = vpack.c.b16 %v1448, %v1447
    %1465 = vmatpush.bf16.msra.mxu0 %v1456
    %1466 = vmatpush.bf16.msra.mxu0 %v1455
    %1467 = vmatpush.bf16.msra.mxu0 %v1454
    %1468 = vmatpush.bf16.msra.mxu0 %v1453
    %1469 = vmatpush.bf16.msra.mxu0 %v1452
    %1470 = vmatpush.bf16.msra.mxu0 %v1451
    %1471 = vmatpush.bf16.msra.mxu0 %v1450
    %1472 = vmatpush.bf16.msra.mxu0 %v1449
    %1473 = vmatmul.bf16.gmra.mxu0 %v1396
    %v1474 = vpop.f32.mrf.mxu0
    %v1475 = vadd.f32 %v1415, %v1474
    %v1476 = vpop.f32.mrf.mxu0
    %v1477 = vadd.f32 %v1415, %v1476
    %1478 = vdwg.mxu0
    %1479 = vst [vmem:[%s5] sm:$0xff] %v1475
    %1480 = vst [vmem:[%s5 + $0x8] sm:$0xff] %v1477
  $region29: #{rnn_forward.7} parent=0 // pred_fallthru
    _
  // Predicated region
  $region30: #{rnn_forward.7} parent=0 // pred_check
    _
  $region31: #{rnn_forward.7} parent=0 // pred_check_branch
    %1482 = sbr.rel (0) target = $region33
  $region32: #{rnn_forward.7} parent=0 // pred_region
    _
  $region33: #{rnn_forward.7} parent=0 // pred_fallthru
    _
  // Predicated region
  $region34: #{rnn_forward.7} parent=0 // pred_check
    _
  $region35: #{rnn_forward.7} parent=0 // pred_check_branch
    %1484 = sbr.rel (0) target = $region37
  $region36: #{rnn_forward.7} parent=0 // pred_region
    _
  $region37: #{rnn_forward.7} parent=0 // pred_fallthru
    _

</llo_original>
